<compile_context>
chip_gen: v7x
topology: tpu7x:2x2x1
jax: 0.10.0
libtpu: 0.0.40
codegen_flags: <defaults>
</compile_context>

<pallas_src>
import functools
import math

import jax
import jax.numpy as jnp
from jax.experimental import pallas as pl
from jax.experimental.pallas import tpu as pltpu


F_PAD = 128                 # per-stream packed feature width (1 lane group)
TILE_DST = 512              # aggregation dst-row tile
TILE_SRC = 512              # aggregation src-column (reduction) tile
TILE_ROWS = 1024            # transform node-row tile
N_ALIGN = 1024              # node padding so every tile size divides n_pad
MSGS_RESIDENT_MAX = 20 * 1024 * 1024   # keep msgs VMEM-resident below this


def _round_up(x, m):
    return ((x + m - 1) // m) * m


# ----------------------------------------------------------------------------
# Kernel 1: feature transform + variance attention + source-side message
# ----------------------------------------------------------------------------
def _transform_first_kernel(node_ref, norm1_ref, w_ref, b_ref, msgs_ref,
                            *, gamma, f_pad):
    # First layer: mean_in == var_in, so one fused matmul against the packed
    # [W_mean | W_var] weight produces the (tile, 2*F_PAD) slab directly.
    x = node_ref[...].astype(jnp.bfloat16)
    h = jnp.dot(x, w_ref[...], preferred_element_type=jnp.float32) + b_ref[...]
    h = jnp.maximum(h, 0.0)
    mean = h[:, :f_pad]
    var = h[:, f_pad:]

    att = jnp.exp(-gamma * var)            # EUP; all elementwise math in f32
    norm1 = norm1_ref[...]                 # (tm, 1) = deg^{-1/2}
    norm2 = norm1 * norm1                  # (tm, 1) = deg^{-1}

    msgs_ref[:, :f_pad] = (mean * att * norm1).astype(msgs_ref.dtype)
    msgs_ref[:, f_pad:] = (var * (att * att) * norm2).astype(msgs_ref.dtype)


def _transform_packed_kernel(node_ref, norm1_ref, wm_ref, wv_ref, bm_ref,
                             bv_ref, msgs_ref, *, gamma, f_pad):
    # Later layers: input is the packed [mean | var] f32 slab.
    mean_in = node_ref[:, :f_pad].astype(jnp.bfloat16)
    var_in = node_ref[:, f_pad:].astype(jnp.bfloat16)

    mean = jnp.dot(mean_in, wm_ref[...],
                   preferred_element_type=jnp.float32) + bm_ref[...]
    var = jnp.dot(var_in, wv_ref[...],
                  preferred_element_type=jnp.float32) + bv_ref[...]
    mean = jnp.maximum(mean, 0.0)
    var = jnp.maximum(var, 0.0)

    att = jnp.exp(-gamma * var)
    norm1 = norm1_ref[...]
    norm2 = norm1 * norm1

    msgs_ref[:, :f_pad] = (mean * att * norm1).astype(msgs_ref.dtype)
    msgs_ref[:, f_pad:] = (var * (att * att) * norm2).astype(msgs_ref.dtype)


def rgcn_transform(node_in, norm1, weights, *, gamma, packed_input,
                   tile_rows=TILE_ROWS):
    n_pad, f_in = node_in.shape
    block_bytes = (tile_rows * f_in * 4            # node block (f32)
                   + tile_rows * 2 * F_PAD * 2)    # packed bf16 output block
    vmem_limit = int(min(48 * 1024 * 1024, 2 * block_bytes + 8 * 1024 * 1024))

    if packed_input:
        wm, wv, bm, bv = weights
        kernel = functools.partial(_transform_packed_kernel,
                                   gamma=float(gamma), f_pad=F_PAD)
        in_specs = [
            pl.BlockSpec((tile_rows, f_in), lambda i: (i, 0)),
            pl.BlockSpec((tile_rows, 1), lambda i: (i, 0)),
            pl.BlockSpec(wm.shape, lambda i: (0, 0)),   # weights stay resident
            pl.BlockSpec(wv.shape, lambda i: (0, 0)),
            pl.BlockSpec(bm.shape, lambda i: (0, 0)),
            pl.BlockSpec(bv.shape, lambda i: (0, 0)),
        ]
        args = (node_in, norm1, wm, wv, bm, bv)
    else:
        w_fused, b_fused = weights
        kernel = functools.partial(_transform_first_kernel,
                                   gamma=float(gamma), f_pad=F_PAD)
        in_specs = [
            pl.BlockSpec((tile_rows, f_in), lambda i: (i, 0)),
            pl.BlockSpec((tile_rows, 1), lambda i: (i, 0)),
            pl.BlockSpec(w_fused.shape, lambda i: (0, 0)),
            pl.BlockSpec(b_fused.shape, lambda i: (0, 0)),
        ]
        args = (node_in, norm1, w_fused, b_fused)

    return pl.pallas_call(
        kernel,
        out_shape=jax.ShapeDtypeStruct((n_pad, 2 * F_PAD), jnp.bfloat16),
        grid_spec=pltpu.PrefetchScalarGridSpec(
            num_scalar_prefetch=0,
            grid=(n_pad // tile_rows,),
            in_specs=in_specs,
            out_specs=pl.BlockSpec((tile_rows, 2 * F_PAD), lambda i: (i, 0)),
        ),
        compiler_params=pltpu.CompilerParams(
            dimension_semantics=("parallel",),
            vmem_limit_bytes=vmem_limit),
    )(*args)


# ----------------------------------------------------------------------------
# Kernel 2: fused (mean|var) graph aggregation, tiled over (dst, src)
# ----------------------------------------------------------------------------
def _aggregate_kernel(adj_ref, msgs_ref, norm1_ref, out_ref, *,
                      f_pad, tile_src, msgs_resident, apply_activation):
    k = pl.program_id(1)

    @pl.when(k == 0)
    def _():
        out_ref[...] = jnp.zeros_like(out_ref)     # resident f32 accumulator

    if msgs_resident:
        src0 = pl.multiple_of(k * tile_src, tile_src)
        msgs_tile = msgs_ref[pl.ds(src0, tile_src), :]
    else:
        msgs_tile = msgs_ref[...]

    # One fused MXU matmul over the packed [mean_msg | var_msg] slab
    # (bf16 operands, f32 accumulation directly into the output block).
    out_ref[...] += jnp.dot(adj_ref[...], msgs_tile,
                            preferred_element_type=jnp.float32)

    @pl.when(k == pl.num_programs(1) - 1)
    def _():
        norm1 = norm1_ref[...]                     # (tm, 1), dst side
        norm2 = norm1 * norm1
        mean_agg = out_ref[:, :f_pad] * norm1
        var_agg = out_ref[:, f_pad:] * norm2
        if apply_activation:
            mean_agg = jnp.maximum(mean_agg, 0.0)
            var_agg = jnp.maximum(var_agg, 0.0)
        out_ref[:, :f_pad] = mean_agg
        out_ref[:, f_pad:] = var_agg


def _aggregate_last_kernel(adj_ref, msgs_ref, norm1_ref, eps_ref,
                           out_ref, z_ref, *, f_pad, tile_src, msgs_resident):
    k = pl.program_id(1)

    @pl.when(k == 0)
    def _():
        out_ref[...] = jnp.zeros_like(out_ref)

    if msgs_resident:
        src0 = pl.multiple_of(k * tile_src, tile_src)
        msgs_tile = msgs_ref[pl.ds(src0, tile_src), :]
    else:
        msgs_tile = msgs_ref[...]

    out_ref[...] += jnp.dot(adj_ref[...], msgs_tile,
                            preferred_element_type=jnp.float32)

    @pl.when(k == pl.num_programs(1) - 1)
    def _():
        norm1 = norm1_ref[...]
        norm2 = norm1 * norm1
        mean_agg = out_ref[:, :f_pad] * norm1
        var_agg = out_ref[:, f_pad:] * norm2
        out_ref[:, :f_pad] = mean_agg
        out_ref[:, f_pad:] = var_agg
        # Fused reparameterization: z = eps * sqrt(var + 1e-8) + mean
        std = jnp.sqrt(var_agg + 1e-8)
        z_ref[...] = eps_ref[...] * std + mean_agg


def _agg_msgs_spec(n_pad, tile_src, msgs_resident):
    if msgs_resident:
        # Full-extent block, constant index map -> DMA'd once, stays in VMEM.
        return pl.BlockSpec((n_pad, 2 * F_PAD), lambda i, k: (0, 0))
    return pl.BlockSpec((tile_src, 2 * F_PAD), lambda i, k: (k, 0))


def _agg_vmem_limit(n_pad, msgs_resident):
    if msgs_resident:
        msgs_bytes = n_pad * 2 * F_PAD * 2
        # 2x for possible double-buffering of the resident slab + tile headroom;
        # capped at 48 MiB so it also fits v7x's 64 MiB physical VMEM.
        return int(min(48 * 1024 * 1024, 2 * msgs_bytes + 12 * 1024 * 1024))
    return 48 * 1024 * 1024


def rgcn_aggregate(adj_bf16, msgs, norm1, *, apply_activation,
                   tile_dst=TILE_DST, tile_src=TILE_SRC):
    n_pad = adj_bf16.shape[0]
    msgs_bytes = n_pad * 2 * F_PAD * 2
    msgs_resident = msgs_bytes <= MSGS_RESIDENT_MAX
    kernel = functools.partial(_aggregate_kernel, f_pad=F_PAD,
                               tile_src=tile_src, msgs_resident=msgs_resident,
                               apply_activation=apply_activation)
    return pl.pallas_call(
        kernel,
        out_shape=jax.ShapeDtypeStruct((n_pad, 2 * F_PAD), jnp.float32),
        grid_spec=pltpu.PrefetchScalarGridSpec(
            num_scalar_prefetch=0,
            grid=(n_pad // tile_dst, n_pad // tile_src),
            in_specs=[
                pl.BlockSpec((tile_dst, tile_src), lambda i, k: (i, k)),  # adj
                _agg_msgs_spec(n_pad, tile_src, msgs_resident),           # msgs
                pl.BlockSpec((tile_dst, 1), lambda i, k: (i, 0)),         # norm1
            ],
            out_specs=pl.BlockSpec((tile_dst, 2 * F_PAD), lambda i, k: (i, 0)),
        ),
        compiler_params=pltpu.CompilerParams(
            dimension_semantics=("parallel", "arbitrary"),
            vmem_limit_bytes=_agg_vmem_limit(n_pad, msgs_resident)),
    )(adj_bf16, msgs, norm1)


def rgcn_aggregate_last(adj_bf16, msgs, norm1, eps, *,
                        tile_dst=TILE_DST, tile_src=TILE_SRC):
    n_pad = adj_bf16.shape[0]
    msgs_bytes = n_pad * 2 * F_PAD * 2
    msgs_resident = msgs_bytes <= MSGS_RESIDENT_MAX
    kernel = functools.partial(_aggregate_last_kernel, f_pad=F_PAD,
                               tile_src=tile_src, msgs_resident=msgs_resident)
    return pl.pallas_call(
        kernel,
        out_shape=(jax.ShapeDtypeStruct((n_pad, 2 * F_PAD), jnp.float32),
                   jax.ShapeDtypeStruct((n_pad, F_PAD), jnp.float32)),
        grid_spec=pltpu.PrefetchScalarGridSpec(
            num_scalar_prefetch=0,
            grid=(n_pad // tile_dst, n_pad // tile_src),
            in_specs=[
                pl.BlockSpec((tile_dst, tile_src), lambda i, k: (i, k)),  # adj
                _agg_msgs_spec(n_pad, tile_src, msgs_resident),           # msgs
                pl.BlockSpec((tile_dst, 1), lambda i, k: (i, 0)),         # norm1
                pl.BlockSpec((tile_dst, F_PAD), lambda i, k: (i, 0)),     # eps
            ],
            out_specs=(pl.BlockSpec((tile_dst, 2 * F_PAD), lambda i, k: (i, 0)),
                       pl.BlockSpec((tile_dst, F_PAD), lambda i, k: (i, 0))),
        ),
        compiler_params=pltpu.CompilerParams(
            dimension_semantics=("parallel", "arbitrary"),
            vmem_limit_bytes=_agg_vmem_limit(n_pad, msgs_resident)),
    )(adj_bf16, msgs, norm1, eps)


# ----------------------------------------------------------------------------
# Parameter init (Glorot uniform for weights, zeros for biases) — deterministic
# ----------------------------------------------------------------------------
def xavier_uniform(key, fan_in, fan_out):
    bound = math.sqrt(6.0 / (fan_in + fan_out))
    return jax.random.uniform(key, (fan_in, fan_out), jnp.float32,
                              minval=-bound, maxval=bound)


def init_rgcn_params(key, in_features, n_hids, out_features):
    dims = [in_features] + list(n_hids) + [out_features]
    params = []
    for i in range(len(dims) - 1):
        key, k1, k2 = jax.random.split(key, 3)
        fi, fo = dims[i], dims[i + 1]
        assert fo <= F_PAD, "output width must fit the packed lane slab"
        params.append(dict(
            w_mean=xavier_uniform(k1, fi, fo),
            w_var=xavier_uniform(k2, fi, fo),
            b_mean=jnp.zeros((fo,), jnp.float32),
            b_var=jnp.zeros((fo,), jnp.float32),
        ))
    return params


# ----------------------------------------------------------------------------
# Full RobustGCN forward (dropout = identity / eval mode)
# ----------------------------------------------------------------------------
def robust_gcn_forward(params, adj, x, eps, gamma=1.0):
    n = adj.shape[0]
    out_feats = params[-1]['w_mean'].shape[1]
    n_pad = _round_up(n, N_ALIGN)
    f_in_pad = _round_up(x.shape[1], F_PAD)

    # Padded adjacency built directly in bf16: values are exactly 0/1 so the
    # cast is lossless, and no f32 (n_pad, n_pad) intermediate is materialized.
    # Padded src columns contribute nothing; padded dst rows are sliced off.
    adj_bf16 = jnp.zeros((n_pad, n_pad), jnp.bfloat16).at[:n, :n].set(
        adj.astype(jnp.bfloat16))

    # In-degrees with explicit f32 accumulation (exact for 0/1 bf16 entries).
    degs = jnp.maximum(jnp.sum(adj_bf16, axis=1, dtype=jnp.float32), 1.0)
    norm1 = (degs ** -0.5).astype(jnp.float32).reshape(n_pad, 1)

    # First-layer input padded to a full 128-lane group.
    x_p = jnp.zeros((n_pad, f_in_pad), jnp.float32).at[:n, :x.shape[1]].set(
        x.astype(jnp.float32))
    eps_p = jnp.zeros((n_pad, F_PAD), jnp.float32).at[:n, :out_feats].set(
        eps.astype(jnp.float32))

    n_layers = len(params)
    node_in = x_p
    packed_input = False
    cur_f_in = f_in_pad
    agg = None
    z_pad = None
    for i, p in enumerate(params):
        last = (i == n_layers - 1)
        fi, fo = p['w_mean'].shape
        if not packed_input:
            # Fused first-layer weight: [W_mean | W_var] -> one matmul.
            w_fused = jnp.zeros((cur_f_in, 2 * F_PAD), jnp.float32)
            w_fused = w_fused.at[:fi, :fo].set(p['w_mean'])
            w_fused = w_fused.at[:fi, F_PAD:F_PAD + fo].set(p['w_var'])
            b_fused = jnp.zeros((1, 2 * F_PAD), jnp.float32)
            b_fused = b_fused.at[0, :fo].set(p['b_mean'])
            b_fused = b_fused.at[0, F_PAD:F_PAD + fo].set(p['b_var'])
            weights = (w_fused.astype(jnp.bfloat16), b_fused)
        else:
            wm = jnp.zeros((F_PAD, F_PAD), jnp.float32).at[:fi, :fo].set(
                p['w_mean'])
            wv = jnp.zeros((F_PAD, F_PAD), jnp.float32).at[:fi, :fo].set(
                p['w_var'])
            bm = jnp.zeros((1, F_PAD), jnp.float32).at[0, :fo].set(p['b_mean'])
            bv = jnp.zeros((1, F_PAD), jnp.float32).at[0, :fo].set(p['b_var'])
            weights = (wm.astype(jnp.bfloat16), wv.astype(jnp.bfloat16), bm, bv)

        msgs = rgcn_transform(node_in, norm1, weights, gamma=gamma,
                              packed_input=packed_input)
        if not last:
            agg = rgcn_aggregate(adj_bf16, msgs, norm1, apply_activation=True)
            node_in = agg                 # packed [mean | var] slab, stays f32
            packed_input = True
            cur_f_in = 2 * F_PAD
        else:
            agg, z_pad = rgcn_aggregate_last(adj_bf16, msgs, norm1, eps_p)

    mean = agg[:n, :out_feats]
    var = agg[:n, F_PAD:F_PAD + out_feats]
    z = z_pad[:n, :out_feats]
    return z, mean, var


# ----------------------------------------------------------------------------
# Pure-JAX reference (same math, f32 everywhere) for a sanity check
# ----------------------------------------------------------------------------
def robust_gcn_reference(params, adj, x, eps, gamma=1.0):
    hp = jax.lax.Precision.HIGHEST
    degs = jnp.maximum(jnp.sum(adj, axis=1), 1.0)
    norm1 = (degs ** -0.5).reshape(-1, 1)
    norm2 = norm1 * norm1
    mean, var = x, x
    n_layers = len(params)
    for i, p in enumerate(params):
        last = (i == n_layers - 1)
        mean = jnp.maximum(
            jnp.dot(mean, p['w_mean'], precision=hp) + p['b_mean'][None, :], 0.0)
        var = jnp.maximum(
            jnp.dot(var, p['w_var'], precision=hp) + p['b_var'][None, :], 0.0)
        att = jnp.exp(-gamma * var)
        mean_msg = mean * att * norm1
        var_msg = var * att * att * norm2
        mean = jnp.dot(adj, mean_msg, precision=hp) * norm1
        var = jnp.dot(adj, var_msg, precision=hp) * norm2
        if not last:
            mean = jnp.maximum(mean, 0.0)
            var = jnp.maximum(var, 0.0)
    std = jnp.sqrt(var + 1e-8)
    z = eps * std + mean
    return z, mean, var


# ----------------------------------------------------------------------------
# Main
# ----------------------------------------------------------------------------
if __name__ == "__main__":
    key = jax.random.PRNGKey(0)
    k_graph, k_feat, k_param, k_eps = jax.random.split(key, 4)

    N = 16            # number of graph nodes
    IN_FEATS = 32     # input feature dim
    N_HIDS = [16]     # hidden layer sizes
    OUT_FEATS = 8     # output (class) dim

    # Deterministic random graph: dense adjacency with self-loops.
    adj = (jax.random.uniform(k_graph, (N, N)) < 0.25).astype(jnp.float32)
    adj = jnp.maximum(adj, jnp.eye(N, dtype=jnp.float32))

    x = jax.random.normal(k_feat, (N, IN_FEATS), dtype=jnp.float32)
    params = init_rgcn_params(k_param, IN_FEATS, N_HIDS, OUT_FEATS)
    eps = jax.random.normal(k_eps, (N, OUT_FEATS), dtype=jnp.float32)

    z, mean, var = robust_gcn_forward(params, adj, x, eps, gamma=1.0)
    jax.block_until_ready(z)

    assert z.shape == (N, OUT_FEATS)
    assert mean.shape == (N, OUT_FEATS)
    assert var.shape == (N, OUT_FEATS)

    z_ref, mean_ref, var_ref = robust_gcn_reference(params, adj, x, eps,
                                                    gamma=1.0)
    assert jnp.allclose(mean, mean_ref, atol=3e-2, rtol=5e-2)
    assert jnp.allclose(var, var_ref, atol=3e-2, rtol=5e-2)
    assert jnp.allclose(z, z_ref, atol=3e-2, rtol=5e-2)

    print("KERNEL_OK")
</pallas_src>

<mosaic_0001>
module attributes {stable_mosaic.version = 11 : i64} {
  func.func @_transform_first_kernel(%arg0: i32, %arg1: memref<1024x128xf32, #tpu.memory_space<vmem>>, %arg2: memref<1024x1xf32, #tpu.memory_space<vmem>>, %arg3: memref<128x256xbf16, #tpu.memory_space<vmem>>, %arg4: memref<1x256xf32, #tpu.memory_space<vmem>>, %arg5: memref<1024x256xbf16, #tpu.memory_space<vmem>>) attributes {dimension_semantics = [#tpu.dimension_semantics<parallel>], iteration_bounds = array<i64: 1>, scalar_prefetch = 0 : i64, scratch_operands = 0 : i64, tpu.core_type = #tpu.core_type<tc>, window_params = [{transform_indices = @transform_0, window_bounds = array<i64: 1024, 128>}, {transform_indices = @transform_1, window_bounds = array<i64: 1024, 1>}, {pipeline_mode = #tpu.pipeline_mode<synchronous>, transform_indices = @transform_2, window_bounds = array<i64: 128, 256>}, {pipeline_mode = #tpu.pipeline_mode<synchronous>, transform_indices = @transform_3, window_bounds = array<i64: 1, 256>}, {transform_indices = @transform_4, window_bounds = array<i64: 1024, 256>}]} {
    %c0 = arith.constant 0 : index
    %c0_0 = arith.constant 0 : index
    %0 = vector.load %arg1[%c0, %c0_0] : memref<1024x128xf32, #tpu.memory_space<vmem>>, vector<1024x128xf32>
    %1 = arith.truncf %0 : vector<1024x128xf32> to vector<1024x128xbf16>
    %c0_1 = arith.constant 0 : index
    %c0_2 = arith.constant 0 : index
    %2 = vector.load %arg3[%c0_1, %c0_2] : memref<128x256xbf16, #tpu.memory_space<vmem>>, vector<128x256xbf16>
    %cst = arith.constant dense<0.000000e+00> : vector<1024x256xf32>
    %3 = tpu.matmul %1, %2, %cst {dimension_numbers = #tpu.dot_dimension_numbers<[1], [0], [0], [1], [0, 0, 1, 1], [], []>} : vector<1024x128xbf16>, vector<128x256xbf16>, vector<1024x256xf32> -> vector<1024x256xf32>
    %c0_3 = arith.constant 0 : index
    %c0_4 = arith.constant 0 : index
    %4 = vector.load %arg4[%c0_3, %c0_4] : memref<1x256xf32, #tpu.memory_space<vmem>>, vector<1x256xf32>
    %5 = vector.broadcast %4 : vector<1x256xf32> to vector<1024x256xf32>
    %6 = arith.addf %3, %5 : vector<1024x256xf32>
    %cst_5 = arith.constant 0.000000e+00 : f32
    %7 = vector.broadcast %cst_5 : f32 to vector<1024x256xf32>
    %8 = arith.maximumf %6, %7 : vector<1024x256xf32>
    %9 = vector.extract_strided_slice %8 {offsets = [0, 0], sizes = [1024, 128], strides = [1, 1]} : vector<1024x256xf32> to vector<1024x128xf32>
    %10 = vector.extract_strided_slice %8 {offsets = [0, 128], sizes = [1024, 128], strides = [1, 1]} : vector<1024x256xf32> to vector<1024x128xf32>
    %cst_6 = arith.constant -1.000000e+00 : f32
    %11 = vector.broadcast %cst_6 : f32 to vector<1024x128xf32>
    %12 = arith.mulf %11, %10 : vector<1024x128xf32>
    %13 = math.exp %12 : vector<1024x128xf32>
    %c0_7 = arith.constant 0 : index
    %c0_8 = arith.constant 0 : index
    %14 = vector.load %arg2[%c0_7, %c0_8] : memref<1024x1xf32, #tpu.memory_space<vmem>>, vector<1024x1xf32>
    %15 = arith.mulf %14, %14 : vector<1024x1xf32>
    %16 = arith.mulf %9, %13 : vector<1024x128xf32>
    %17 = vector.broadcast %14 : vector<1024x1xf32> to vector<1024x128xf32>
    %18 = arith.mulf %16, %17 : vector<1024x128xf32>
    %19 = arith.truncf %18 : vector<1024x128xf32> to vector<1024x128xbf16>
    %c0_9 = arith.constant 0 : index
    %c0_10 = arith.constant 0 : index
    %20 = vector.load %arg5[%c0_9, %c0_10] : memref<1024x256xbf16, #tpu.memory_space<vmem>>, vector<1024x128xbf16>
    tpu.vector_store %arg5[%c0_9, %c0_10], %19 {strides = array<i32>} : memref<1024x256xbf16, #tpu.memory_space<vmem>>, vector<1024x128xbf16>,
    %21 = arith.mulf %13, %13 : vector<1024x128xf32>
    %22 = arith.mulf %10, %21 : vector<1024x128xf32>
    %23 = vector.broadcast %15 : vector<1024x1xf32> to vector<1024x128xf32>
    %24 = arith.mulf %22, %23 : vector<1024x128xf32>
    %25 = arith.truncf %24 : vector<1024x128xf32> to vector<1024x128xbf16>
    %c0_11 = arith.constant 0 : index
    %c128 = arith.constant 128 : index
    %26 = vector.load %arg5[%c0_11, %c128] : memref<1024x256xbf16, #tpu.memory_space<vmem>>, vector<1024x128xbf16>
    tpu.vector_store %arg5[%c0_11, %c128], %25 {strides = array<i32>} : memref<1024x256xbf16, #tpu.memory_space<vmem>>, vector<1024x128xbf16>,
    return
  }
  func.func @transform_0(%arg0: i32) -> (i32, i32) {
    %c0_i32 = arith.constant 0 : i32
    %c0_i32_0 = arith.constant 0 : i32
    return %arg0, %c0_i32 : i32, i32
  }
  func.func @transform_1(%arg0: i32) -> (i32, i32) {
    %c0_i32 = arith.constant 0 : i32
    %c0_i32_0 = arith.constant 0 : i32
    return %arg0, %c0_i32 : i32, i32
  }
  func.func @transform_2(%arg0: i32) -> (i32, i32) {
    %c0_i32 = arith.constant 0 : i32
    %c0_i32_0 = arith.constant 0 : i32
    %c0_i32_1 = arith.constant 0 : i32
    return %c0_i32, %c0_i32_0 : i32, i32
  }
  func.func @transform_3(%arg0: i32) -> (i32, i32) {
    %c0_i32 = arith.constant 0 : i32
    %c0_i32_0 = arith.constant 0 : i32
    %c0_i32_1 = arith.constant 0 : i32
    return %c0_i32, %c0_i32_0 : i32, i32
  }
  func.func @transform_4(%arg0: i32) -> (i32, i32) {
    %c0_i32 = arith.constant 0 : i32
    %c0_i32_0 = arith.constant 0 : i32
    return %arg0, %c0_i32 : i32, i32
  }
}

</mosaic_0001>

<llo_original>
// kernel: tpu_custom_call.1
$region0: #{tpu_custom_call.1}
  #allocation0 [shape = 'u32[]', space=smem, size = 0x4, offset = 0x4, fixed_abs, tag = 'smem constant byte address 0x4 - core index']
  #allocation1 [shape = 'u32[144,128]{1,0:T(1,128)}', space=vmem, size = 0x12000, scoped, tag = 'internal scratch']
  %s0 = inlined_call_operand.vmem [shape: f32[1024,128], index: 0, kind: input, shape index: {}]
  %s1 = inlined_call_operand.vmem [shape: f32[1024,1], index: 1, kind: input, shape index: {}]
  %s2 = inlined_call_operand.hbm [shape: bf16[128,256], index: 2, kind: input, shape index: {}]
  %s3 = inlined_call_operand.vmem [shape: f32[1,256], index: 3, kind: input, shape index: {}]
  %s4 = inlined_call_operand.hbm [shape: bf16[1024,256], index: 4, kind: output, shape index: {}]
  %s5 = sld [smem:[#allocation0]]
  $region30: #{tpu_custom_call.1} parent=0
    _
  %s7 = ssub.s32 1, %s5
  %s8 = scalar_select 0, %s7, %s5
  $region1: #{tpu_custom_call.1} parent=0
    #allocation2 [shape = 'u8[65536]{0}', space=vmem, size = 0x10000, scoped, tag = 'input window, operand 2, single buffered']
    #allocation3 [shape = 's32[1]{0}', space=sflag, size = 0x4, scoped, tag = 'scoped memory for tpu_custom_call.1']
    #allocation4 [shape = 's32[1]{0}', space=sflag, size = 0x4, scoped, tag = 'scoped memory for tpu_custom_call.1']
    #allocation5 [shape = 'u8[524288]{0}', space=vmem, size = 0x80000, scoped, tag = 'output window, operand 0, single buffered']
    %9 = vsyncpa [#allocation3], 0
    %10 = vsyncpa [#allocation4], 0
    // Predicated region
    $region2: #{tpu_custom_call.1} parent=1 // pred_check
      _
    $region3: #{tpu_custom_call.1} parent=1 // pred_check_branch
      %12 = sbr.rel (0) target = $region5
    $region4: #{tpu_custom_call.1} parent=1 // pred_region
      _
    $region5: #{tpu_custom_call.1} parent=1 // pred_fallthru
      _
    // Predicated region
    $region6: #{tpu_custom_call.1} parent=1 // pred_check
      _
    $region7: #{tpu_custom_call.1} parent=1 // pred_check_branch
      %14 = sbr.rel (0) target = $region9
    $region8: #{tpu_custom_call.1} parent=1 // pred_region
      _
    $region9: #{tpu_custom_call.1} parent=1 // pred_fallthru
      _
    // Predicated region
    $region10: #{tpu_custom_call.1} parent=1 // pred_check
      _
    $region11: #{tpu_custom_call.1} parent=1 // pred_check_branch
      %16 = sbr.rel (0) target = $region13
    $region12: #{tpu_custom_call.1} parent=1 // pred_region
      %s18 = ssub.s32 2048, 2048
      %19 = vsyncadd [#allocation3], %s18
      %s20 = sshll.u32 [#allocation2], 4
      %s21 = int_to_ptr.vmem [resolvable:$true] %s20
      %26 = dma.hbm_to_vmem [thread:$0]  %s2, 2048, %s21, [#allocation3], 128, 128, 8
    $region13: #{tpu_custom_call.1} parent=1 // pred_fallthru
      _
    // Predicated region
    $region14: #{tpu_custom_call.1} parent=1 // pred_check
      _
    $region15: #{tpu_custom_call.1} parent=1 // pred_check_branch
      %28 = sbr.rel (0) target = $region17
    $region16: #{tpu_custom_call.1} parent=1 // pred_region
      _
    $region17: #{tpu_custom_call.1} parent=1 // pred_fallthru
      _
    // Predicated region
    $region18: #{tpu_custom_call.1} parent=1 // pred_check
      _
    $region19: #{tpu_custom_call.1} parent=1 // pred_check_branch
      %30 = sbr.rel (0) target = $region21
    $region20: #{tpu_custom_call.1} parent=1 // pred_region
      %31 = dma.done [#allocation3], 2048
    $region21: #{tpu_custom_call.1} parent=1 // pred_fallthru
      _
    %v33 = vld [vmem:[%s0] sm:$0xff]
    %v34 = vld [vmem:[%s0 + $0x8] sm:$0xff]
    %v35 = vld [vmem:[%s0 + $0x10] sm:$0xff]
    %v36 = vld [vmem:[%s0 + $0x18] sm:$0xff]
    %v37 = vld [vmem:[%s0 + $0x20] sm:$0xff]
    %v38 = vld [vmem:[%s0 + $0x28] sm:$0xff]
    %v39 = vld [vmem:[%s0 + $0x30] sm:$0xff]
    %v40 = vld [vmem:[%s0 + $0x38] sm:$0xff]
    %v41 = vld [vmem:[%s0 + $0x40] sm:$0xff]
    %v42 = vld [vmem:[%s0 + $0x48] sm:$0xff]
    %v43 = vld [vmem:[%s0 + $0x50] sm:$0xff]
    %v44 = vld [vmem:[%s0 + $0x58] sm:$0xff]
    %v45 = vld [vmem:[%s0 + $0x60] sm:$0xff]
    %v46 = vld [vmem:[%s0 + $0x68] sm:$0xff]
    %v47 = vld [vmem:[%s0 + $0x70] sm:$0xff]
    %v48 = vld [vmem:[%s0 + $0x78] sm:$0xff]
    %v49 = vld [vmem:[%s0 + $0x80] sm:$0xff]
    %v50 = vld [vmem:[%s0 + $0x88] sm:$0xff]
    %v51 = vld [vmem:[%s0 + $0x90] sm:$0xff]
    %v52 = vld [vmem:[%s0 + $0x98] sm:$0xff]
    %v53 = vld [vmem:[%s0 + $0xa0] sm:$0xff]
    %v54 = vld [vmem:[%s0 + $0xa8] sm:$0xff]
    %v55 = vld [vmem:[%s0 + $0xb0] sm:$0xff]
    %v56 = vld [vmem:[%s0 + $0xb8] sm:$0xff]
    %v57 = vld [vmem:[%s0 + $0xc0] sm:$0xff]
    %v58 = vld [vmem:[%s0 + $0xc8] sm:$0xff]
    %v59 = vld [vmem:[%s0 + $0xd0] sm:$0xff]
    %v60 = vld [vmem:[%s0 + $0xd8] sm:$0xff]
    %v61 = vld [vmem:[%s0 + $0xe0] sm:$0xff]
    %v62 = vld [vmem:[%s0 + $0xe8] sm:$0xff]
    %v63 = vld [vmem:[%s0 + $0xf0] sm:$0xff]
    %v64 = vld [vmem:[%s0 + $0xf8] sm:$0xff]
    %v65 = vld [vmem:[%s0 + $0x100] sm:$0xff]
    %v66 = vld [vmem:[%s0 + $0x108] sm:$0xff]
    %v67 = vld [vmem:[%s0 + $0x110] sm:$0xff]
    %v68 = vld [vmem:[%s0 + $0x118] sm:$0xff]
    %v69 = vld [vmem:[%s0 + $0x120] sm:$0xff]
    %v70 = vld [vmem:[%s0 + $0x128] sm:$0xff]
    %v71 = vld [vmem:[%s0 + $0x130] sm:$0xff]
    %v72 = vld [vmem:[%s0 + $0x138] sm:$0xff]
    %v73 = vld [vmem:[%s0 + $0x140] sm:$0xff]
    %v74 = vld [vmem:[%s0 + $0x148] sm:$0xff]
    %v75 = vld [vmem:[%s0 + $0x150] sm:$0xff]
    %v76 = vld [vmem:[%s0 + $0x158] sm:$0xff]
    %v77 = vld [vmem:[%s0 + $0x160] sm:$0xff]
    %v78 = vld [vmem:[%s0 + $0x168] sm:$0xff]
    %v79 = vld [vmem:[%s0 + $0x170] sm:$0xff]
    %v80 = vld [vmem:[%s0 + $0x178] sm:$0xff]
    %v81 = vld [vmem:[%s0 + $0x180] sm:$0xff]
    %v82 = vld [vmem:[%s0 + $0x188] sm:$0xff]
    %v83 = vld [vmem:[%s0 + $0x190] sm:$0xff]
    %v84 = vld [vmem:[%s0 + $0x198] sm:$0xff]
    %v85 = vld [vmem:[%s0 + $0x1a0] sm:$0xff]
    %v86 = vld [vmem:[%s0 + $0x1a8] sm:$0xff]
    %v87 = vld [vmem:[%s0 + $0x1b0] sm:$0xff]
    %v88 = vld [vmem:[%s0 + $0x1b8] sm:$0xff]
    %v89 = vld [vmem:[%s0 + $0x1c0] sm:$0xff]
    %v90 = vld [vmem:[%s0 + $0x1c8] sm:$0xff]
    %v91 = vld [vmem:[%s0 + $0x1d0] sm:$0xff]
    %v92 = vld [vmem:[%s0 + $0x1d8] sm:$0xff]
    %v93 = vld [vmem:[%s0 + $0x1e0] sm:$0xff]
    %v94 = vld [vmem:[%s0 + $0x1e8] sm:$0xff]
    %v95 = vld [vmem:[%s0 + $0x1f0] sm:$0xff]
    %v96 = vld [vmem:[%s0 + $0x1f8] sm:$0xff]
    %v97 = vld [vmem:[%s0 + $0x200] sm:$0xff]
    %v98 = vld [vmem:[%s0 + $0x208] sm:$0xff]
    %v99 = vld [vmem:[%s0 + $0x210] sm:$0xff]
    %v100 = vld [vmem:[%s0 + $0x218] sm:$0xff]
    %v101 = vld [vmem:[%s0 + $0x220] sm:$0xff]
    %v102 = vld [vmem:[%s0 + $0x228] sm:$0xff]
    %v103 = vld [vmem:[%s0 + $0x230] sm:$0xff]
    %v104 = vld [vmem:[%s0 + $0x238] sm:$0xff]
    %v105 = vld [vmem:[%s0 + $0x240] sm:$0xff]
    %v106 = vld [vmem:[%s0 + $0x248] sm:$0xff]
    %v107 = vld [vmem:[%s0 + $0x250] sm:$0xff]
    %v108 = vld [vmem:[%s0 + $0x258] sm:$0xff]
    %v109 = vld [vmem:[%s0 + $0x260] sm:$0xff]
    %v110 = vld [vmem:[%s0 + $0x268] sm:$0xff]
    %v111 = vld [vmem:[%s0 + $0x270] sm:$0xff]
    %v112 = vld [vmem:[%s0 + $0x278] sm:$0xff]
    %v113 = vld [vmem:[%s0 + $0x280] sm:$0xff]
    %v114 = vld [vmem:[%s0 + $0x288] sm:$0xff]
    %v115 = vld [vmem:[%s0 + $0x290] sm:$0xff]
    %v116 = vld [vmem:[%s0 + $0x298] sm:$0xff]
    %v117 = vld [vmem:[%s0 + $0x2a0] sm:$0xff]
    %v118 = vld [vmem:[%s0 + $0x2a8] sm:$0xff]
    %v119 = vld [vmem:[%s0 + $0x2b0] sm:$0xff]
    %v120 = vld [vmem:[%s0 + $0x2b8] sm:$0xff]
    %v121 = vld [vmem:[%s0 + $0x2c0] sm:$0xff]
    %v122 = vld [vmem:[%s0 + $0x2c8] sm:$0xff]
    %v123 = vld [vmem:[%s0 + $0x2d0] sm:$0xff]
    %v124 = vld [vmem:[%s0 + $0x2d8] sm:$0xff]
    %v125 = vld [vmem:[%s0 + $0x2e0] sm:$0xff]
    %v126 = vld [vmem:[%s0 + $0x2e8] sm:$0xff]
    %v127 = vld [vmem:[%s0 + $0x2f0] sm:$0xff]
    %v128 = vld [vmem:[%s0 + $0x2f8] sm:$0xff]
    %v129 = vld [vmem:[%s0 + $0x300] sm:$0xff]
    %v130 = vld [vmem:[%s0 + $0x308] sm:$0xff]
    %v131 = vld [vmem:[%s0 + $0x310] sm:$0xff]
    %v132 = vld [vmem:[%s0 + $0x318] sm:$0xff]
    %v133 = vld [vmem:[%s0 + $0x320] sm:$0xff]
    %v134 = vld [vmem:[%s0 + $0x328] sm:$0xff]
    %v135 = vld [vmem:[%s0 + $0x330] sm:$0xff]
    %v136 = vld [vmem:[%s0 + $0x338] sm:$0xff]
    %v137 = vld [vmem:[%s0 + $0x340] sm:$0xff]
    %v138 = vld [vmem:[%s0 + $0x348] sm:$0xff]
    %v139 = vld [vmem:[%s0 + $0x350] sm:$0xff]
    %v140 = vld [vmem:[%s0 + $0x358] sm:$0xff]
    %v141 = vld [vmem:[%s0 + $0x360] sm:$0xff]
    %v142 = vld [vmem:[%s0 + $0x368] sm:$0xff]
    %v143 = vld [vmem:[%s0 + $0x370] sm:$0xff]
    %v144 = vld [vmem:[%s0 + $0x378] sm:$0xff]
    %v145 = vld [vmem:[%s0 + $0x380] sm:$0xff]
    %v146 = vld [vmem:[%s0 + $0x388] sm:$0xff]
    %v147 = vld [vmem:[%s0 + $0x390] sm:$0xff]
    %v148 = vld [vmem:[%s0 + $0x398] sm:$0xff]
    %v149 = vld [vmem:[%s0 + $0x3a0] sm:$0xff]
    %v150 = vld [vmem:[%s0 + $0x3a8] sm:$0xff]
    %v151 = vld [vmem:[%s0 + $0x3b0] sm:$0xff]
    %v152 = vld [vmem:[%s0 + $0x3b8] sm:$0xff]
    %v153 = vld [vmem:[%s0 + $0x3c0] sm:$0xff]
    %v154 = vld [vmem:[%s0 + $0x3c8] sm:$0xff]
    %v155 = vld [vmem:[%s0 + $0x3d0] sm:$0xff]
    %v156 = vld [vmem:[%s0 + $0x3d8] sm:$0xff]
    %v157 = vld [vmem:[%s0 + $0x3e0] sm:$0xff]
    %v158 = vld [vmem:[%s0 + $0x3e8] sm:$0xff]
    %v159 = vld [vmem:[%s0 + $0x3f0] sm:$0xff]
    %v160 = vld [vmem:[%s0 + $0x3f8] sm:$0xff]
    %v161 = vpack.c.bf16 %v34, %v33
    %v162 = vpack.c.bf16 %v36, %v35
    %v163 = vpack.c.bf16 %v38, %v37
    %v164 = vpack.c.bf16 %v40, %v39
    %v165 = vpack.c.bf16 %v42, %v41
    %v166 = vpack.c.bf16 %v44, %v43
    %v167 = vpack.c.bf16 %v46, %v45
    %v168 = vpack.c.bf16 %v48, %v47
    %v169 = vpack.c.bf16 %v50, %v49
    %v170 = vpack.c.bf16 %v52, %v51
    %v171 = vpack.c.bf16 %v54, %v53
    %v172 = vpack.c.bf16 %v56, %v55
    %v173 = vpack.c.bf16 %v58, %v57
    %v174 = vpack.c.bf16 %v60, %v59
    %v175 = vpack.c.bf16 %v62, %v61
    %v176 = vpack.c.bf16 %v64, %v63
    %v177 = vpack.c.bf16 %v66, %v65
    %v178 = vpack.c.bf16 %v68, %v67
    %v179 = vpack.c.bf16 %v70, %v69
    %v180 = vpack.c.bf16 %v72, %v71
    %v181 = vpack.c.bf16 %v74, %v73
    %v182 = vpack.c.bf16 %v76, %v75
    %v183 = vpack.c.bf16 %v78, %v77
    %v184 = vpack.c.bf16 %v80, %v79
    %v185 = vpack.c.bf16 %v82, %v81
    %v186 = vpack.c.bf16 %v84, %v83
    %v187 = vpack.c.bf16 %v86, %v85
    %v188 = vpack.c.bf16 %v88, %v87
    %v189 = vpack.c.bf16 %v90, %v89
    %v190 = vpack.c.bf16 %v92, %v91
    %v191 = vpack.c.bf16 %v94, %v93
    %v192 = vpack.c.bf16 %v96, %v95
    %v193 = vpack.c.bf16 %v98, %v97
    %v194 = vpack.c.bf16 %v100, %v99
    %v195 = vpack.c.bf16 %v102, %v101
    %v196 = vpack.c.bf16 %v104, %v103
    %v197 = vpack.c.bf16 %v106, %v105
    %v198 = vpack.c.bf16 %v108, %v107
    %v199 = vpack.c.bf16 %v110, %v109
    %v200 = vpack.c.bf16 %v112, %v111
    %v201 = vpack.c.bf16 %v114, %v113
    %v202 = vpack.c.bf16 %v116, %v115
    %v203 = vpack.c.bf16 %v118, %v117
    %v204 = vpack.c.bf16 %v120, %v119
    %v205 = vpack.c.bf16 %v122, %v121
    %v206 = vpack.c.bf16 %v124, %v123
    %v207 = vpack.c.bf16 %v126, %v125
    %v208 = vpack.c.bf16 %v128, %v127
    %v209 = vpack.c.bf16 %v130, %v129
    %v210 = vpack.c.bf16 %v132, %v131
    %v211 = vpack.c.bf16 %v134, %v133
    %v212 = vpack.c.bf16 %v136, %v135
    %v213 = vpack.c.bf16 %v138, %v137
    %v214 = vpack.c.bf16 %v140, %v139
    %v215 = vpack.c.bf16 %v142, %v141
    %v216 = vpack.c.bf16 %v144, %v143
    %v217 = vpack.c.bf16 %v146, %v145
    %v218 = vpack.c.bf16 %v148, %v147
    %v219 = vpack.c.bf16 %v150, %v149
    %v220 = vpack.c.bf16 %v152, %v151
    %v221 = vpack.c.bf16 %v154, %v153
    %v222 = vpack.c.bf16 %v156, %v155
    %v223 = vpack.c.bf16 %v158, %v157
    %v224 = vpack.c.bf16 %v160, %v159
    %v225 = vld [vmem:[#allocation2] sm:$0xff]
    %v226 = vld [vmem:[#allocation2 + $0x8] sm:$0xff]
    %v227 = vld [vmem:[#allocation2 + $0x10] sm:$0xff]
    %v228 = vld [vmem:[#allocation2 + $0x18] sm:$0xff]
    %v229 = vld [vmem:[#allocation2 + $0x20] sm:$0xff]
    %v230 = vld [vmem:[#allocation2 + $0x28] sm:$0xff]
    %v231 = vld [vmem:[#allocation2 + $0x30] sm:$0xff]
    %v232 = vld [vmem:[#allocation2 + $0x38] sm:$0xff]
    %v233 = vld [vmem:[#allocation2 + $0x40] sm:$0xff]
    %v234 = vld [vmem:[#allocation2 + $0x48] sm:$0xff]
    %v235 = vld [vmem:[#allocation2 + $0x50] sm:$0xff]
    %v236 = vld [vmem:[#allocation2 + $0x58] sm:$0xff]
    %v237 = vld [vmem:[#allocation2 + $0x60] sm:$0xff]
    %v238 = vld [vmem:[#allocation2 + $0x68] sm:$0xff]
    %v239 = vld [vmem:[#allocation2 + $0x70] sm:$0xff]
    %v240 = vld [vmem:[#allocation2 + $0x78] sm:$0xff]
    %v241 = vld [vmem:[%s3] sm:$0x3]
    %v243 = vlaneseq
    %v244 = vshrl.u32 %v243, 7
    %v245 = vsub.s32 0, %v244
    %v246 = vrot.slane %v241, %v245
    %v247 = vlaneseq
    %v248 = vshrl.u32 %v247, 7
    %v249 = vsub.s32 1, %v248
    %v250 = vrot.slane %v241, %v249
    %v269 = vunpack.c.l.b16 %v225
    %v270 = vunpack.c.h.b16 %v225
    %v271 = vunpack.c.l.b16 %v226
    %v272 = vunpack.c.h.b16 %v226
    %v273 = vunpack.c.l.b16 %v227
    %v274 = vunpack.c.h.b16 %v227
    %v275 = vunpack.c.l.b16 %v228
    %v276 = vunpack.c.h.b16 %v228
    %v277 = vunpack.c.l.b16 %v229
    %v278 = vunpack.c.h.b16 %v229
    %v279 = vunpack.c.l.b16 %v230
    %v280 = vunpack.c.h.b16 %v230
    %v281 = vunpack.c.l.b16 %v231
    %v282 = vunpack.c.h.b16 %v231
    %v283 = vunpack.c.l.b16 %v232
    %v284 = vunpack.c.h.b16 %v232
    %v285 = vunpack.c.l.b16 %v233
    %v286 = vunpack.c.h.b16 %v233
    %v287 = vunpack.c.l.b16 %v234
    %v288 = vunpack.c.h.b16 %v234
    %v289 = vunpack.c.l.b16 %v235
    %v290 = vunpack.c.h.b16 %v235
    %v291 = vunpack.c.l.b16 %v236
    %v292 = vunpack.c.h.b16 %v236
    %v293 = vunpack.c.l.b16 %v237
    %v294 = vunpack.c.h.b16 %v237
    %v295 = vunpack.c.l.b16 %v238
    %v296 = vunpack.c.h.b16 %v238
    %v297 = vunpack.c.l.b16 %v239
    %v298 = vunpack.c.h.b16 %v239
    %v299 = vunpack.c.l.b16 %v240
    %v300 = vunpack.c.h.b16 %v240
    %v301 = vpack.c.b16 %v271, %v269
    %v302 = vpack.c.b16 %v272, %v270
    %v303 = vpack.c.b16 %v275, %v273
    %v304 = vpack.c.b16 %v276, %v274
    %v305 = vpack.c.b16 %v279, %v277
    %v306 = vpack.c.b16 %v280, %v278
    %v307 = vpack.c.b16 %v283, %v281
    %v308 = vpack.c.b16 %v284, %v282
    %v309 = vpack.c.b16 %v287, %v285
    %v310 = vpack.c.b16 %v288, %v286
    %v311 = vpack.c.b16 %v291, %v289
    %v312 = vpack.c.b16 %v292, %v290
    %v313 = vpack.c.b16 %v295, %v293
    %v314 = vpack.c.b16 %v296, %v294
    %v315 = vpack.c.b16 %v299, %v297
    %v316 = vpack.c.b16 %v300, %v298
    %333 = vmatprep.subr.bf16.mxu0 %v302
    %334 = vmatpush1.bf16.msra.mxu0 %v301
    %335 = vmatprep.subr.bf16.mxu0 %v304
    %336 = vmatpush1.bf16.msra.mxu0 %v303
    %337 = vmatprep.subr.bf16.mxu0 %v306
    %338 = vmatpush1.bf16.msra.mxu0 %v305
    %339 = vmatprep.subr.bf16.mxu0 %v308
    %340 = vmatpush1.bf16.msra.mxu0 %v307
    %341 = vmatprep.subr.bf16.mxu0 %v310
    %342 = vmatpush1.bf16.msra.mxu0 %v309
    %343 = vmatprep.subr.bf16.mxu0 %v312
    %344 = vmatpush1.bf16.msra.mxu0 %v311
    %345 = vmatprep.subr.bf16.mxu0 %v314
    %346 = vmatpush1.bf16.msra.mxu0 %v313
    %347 = vmatprep.subr.bf16.mxu0 %v316
    %348 = vmatpush1.bf16.msra.mxu0 %v315
    %349 = vmatprep.subr.bf16.mxu0 0
    %350 = vmatpush1.bf16.msra.mxu0 0
    %351 = vmatprep.subr.bf16.mxu0 0
    %352 = vmatpush1.bf16.msra.mxu0 0
    %353 = vmatprep.subr.bf16.mxu0 0
    %354 = vmatpush1.bf16.msra.mxu0 0
    %355 = vmatprep.subr.bf16.mxu0 0
    %356 = vmatpush1.bf16.msra.mxu0 0
    %357 = vmatprep.subr.bf16.mxu0 0
    %358 = vmatpush1.bf16.msra.mxu0 0
    %359 = vmatprep.subr.bf16.mxu0 0
    %360 = vmatpush1.bf16.msra.mxu0 0
    %361 = vmatprep.subr.bf16.mxu0 0
    %362 = vmatpush1.bf16.msra.mxu0 0
    %363 = vmatprep.subr.bf16.mxu0 0
    %364 = vmatpush1.bf16.msra.mxu0 0
    %365 = vmatprep.mubr.bf16.mxu0 0
    %366 = vmatmul.mubr.bf16.gmra.mrb[0].mxu0 %v161
    %v367 = vpop.f32.mrb[0].mxu0
    %v368 = vadd.f32 %v246, %v367
    %v369 = vpop.f32.mrb[0].mxu0
    %v370 = vadd.f32 %v250, %v369
    %v371 = vpop.f32.mrb[0].mxu0
    %v372 = vadd.f32 %v246, %v371
    %v373 = vpop.f32.mrb[0].mxu0
    %v374 = vadd.f32 %v250, %v373
    %375 = vmatprep.mubr.bf16.mxu0 0
    %376 = vmatmul.mubr.bf16.gmra.mrb[0].mxu0 %v162
    %v377 = vpop.f32.mrb[0].mxu0
    %v378 = vadd.f32 %v246, %v377
    %v379 = vpop.f32.mrb[0].mxu0
    %v380 = vadd.f32 %v250, %v379
    %v381 = vpop.f32.mrb[0].mxu0
    %v382 = vadd.f32 %v246, %v381
    %v383 = vpop.f32.mrb[0].mxu0
    %v384 = vadd.f32 %v250, %v383
    %385 = vmatprep.mubr.bf16.mxu0 0
    %386 = vmatmul.mubr.bf16.gmra.mrb[0].mxu0 %v163
    %v387 = vpop.f32.mrb[0].mxu0
    %v388 = vadd.f32 %v246, %v387
    %v389 = vpop.f32.mrb[0].mxu0
    %v390 = vadd.f32 %v250, %v389
    %v391 = vpop.f32.mrb[0].mxu0
    %v392 = vadd.f32 %v246, %v391
    %v393 = vpop.f32.mrb[0].mxu0
    %v394 = vadd.f32 %v250, %v393
    %395 = vmatprep.mubr.bf16.mxu0 0
    %396 = vmatmul.mubr.bf16.gmra.mrb[0].mxu0 %v164
    %v397 = vpop.f32.mrb[0].mxu0
    %v398 = vadd.f32 %v246, %v397
    %v399 = vpop.f32.mrb[0].mxu0
    %v400 = vadd.f32 %v250, %v399
    %v401 = vpop.f32.mrb[0].mxu0
    %v402 = vadd.f32 %v246, %v401
    %v403 = vpop.f32.mrb[0].mxu0
    %v404 = vadd.f32 %v250, %v403
    %405 = vmatprep.mubr.bf16.mxu0 0
    %406 = vmatmul.mubr.bf16.gmra.mrb[0].mxu0 %v165
    %v407 = vpop.f32.mrb[0].mxu0
    %v408 = vadd.f32 %v246, %v407
    %v409 = vpop.f32.mrb[0].mxu0
    %v410 = vadd.f32 %v250, %v409
    %v411 = vpop.f32.mrb[0].mxu0
    %v412 = vadd.f32 %v246, %v411
    %v413 = vpop.f32.mrb[0].mxu0
    %v414 = vadd.f32 %v250, %v413
    %415 = vmatprep.mubr.bf16.mxu0 0
    %416 = vmatmul.mubr.bf16.gmra.mrb[0].mxu0 %v166
    %v417 = vpop.f32.mrb[0].mxu0
    %v418 = vadd.f32 %v246, %v417
    %v419 = vpop.f32.mrb[0].mxu0
    %v420 = vadd.f32 %v250, %v419
    %v421 = vpop.f32.mrb[0].mxu0
    %v422 = vadd.f32 %v246, %v421
    %v423 = vpop.f32.mrb[0].mxu0
    %v424 = vadd.f32 %v250, %v423
    %425 = vmatprep.mubr.bf16.mxu0 0
    %426 = vmatmul.mubr.bf16.gmra.mrb[0].mxu0 %v167
    %v427 = vpop.f32.mrb[0].mxu0
    %v428 = vadd.f32 %v246, %v427
    %v429 = vpop.f32.mrb[0].mxu0
    %v430 = vadd.f32 %v250, %v429
    %v431 = vpop.f32.mrb[0].mxu0
    %v432 = vadd.f32 %v246, %v431
    %v433 = vpop.f32.mrb[0].mxu0
    %v434 = vadd.f32 %v250, %v433
    %435 = vmatprep.mubr.bf16.mxu0 0
    %436 = vmatmul.mubr.bf16.gmra.mrb[0].mxu0 %v168
    %v437 = vpop.f32.mrb[0].mxu0
    %v438 = vadd.f32 %v246, %v437
    %v439 = vpop.f32.mrb[0].mxu0
    %v440 = vadd.f32 %v250, %v439
    %v441 = vpop.f32.mrb[0].mxu0
    %v442 = vadd.f32 %v246, %v441
    %v443 = vpop.f32.mrb[0].mxu0
    %v444 = vadd.f32 %v250, %v443
    %445 = vmatprep.mubr.bf16.mxu0 0
    %446 = vmatmul.mubr.bf16.gmra.mrb[0].mxu0 %v169
    %v447 = vpop.f32.mrb[0].mxu0
    %v448 = vadd.f32 %v246, %v447
    %v449 = vpop.f32.mrb[0].mxu0
    %v450 = vadd.f32 %v250, %v449
    %v451 = vpop.f32.mrb[0].mxu0
    %v452 = vadd.f32 %v246, %v451
    %v453 = vpop.f32.mrb[0].mxu0
    %v454 = vadd.f32 %v250, %v453
    %455 = vmatprep.mubr.bf16.mxu0 0
    %456 = vmatmul.mubr.bf16.gmra.mrb[0].mxu0 %v170
    %v457 = vpop.f32.mrb[0].mxu0
    %v458 = vadd.f32 %v246, %v457
    %v459 = vpop.f32.mrb[0].mxu0
    %v460 = vadd.f32 %v250, %v459
    %v461 = vpop.f32.mrb[0].mxu0
    %v462 = vadd.f32 %v246, %v461
    %v463 = vpop.f32.mrb[0].mxu0
    %v464 = vadd.f32 %v250, %v463
    %465 = vmatprep.mubr.bf16.mxu0 0
    %466 = vmatmul.mubr.bf16.gmra.mrb[0].mxu0 %v171
    %v467 = vpop.f32.mrb[0].mxu0
    %v468 = vadd.f32 %v246, %v467
    %v469 = vpop.f32.mrb[0].mxu0
    %v470 = vadd.f32 %v250, %v469
    %v471 = vpop.f32.mrb[0].mxu0
    %v472 = vadd.f32 %v246, %v471
    %v473 = vpop.f32.mrb[0].mxu0
    %v474 = vadd.f32 %v250, %v473
    %475 = vmatprep.mubr.bf16.mxu0 0
    %476 = vmatmul.mubr.bf16.gmra.mrb[0].mxu0 %v172
    %v477 = vpop.f32.mrb[0].mxu0
    %v478 = vadd.f32 %v246, %v477
    %v479 = vpop.f32.mrb[0].mxu0
    %v480 = vadd.f32 %v250, %v479
    %v481 = vpop.f32.mrb[0].mxu0
    %v482 = vadd.f32 %v246, %v481
    %v483 = vpop.f32.mrb[0].mxu0
    %v484 = vadd.f32 %v250, %v483
    %485 = vmatprep.mubr.bf16.mxu0 0
    %486 = vmatmul.mubr.bf16.gmra.mrb[0].mxu0 %v173
    %v487 = vpop.f32.mrb[0].mxu0
    %v488 = vadd.f32 %v246, %v487
    %v489 = vpop.f32.mrb[0].mxu0
    %v490 = vadd.f32 %v250, %v489
    %v491 = vpop.f32.mrb[0].mxu0
    %v492 = vadd.f32 %v246, %v491
    %v493 = vpop.f32.mrb[0].mxu0
    %v494 = vadd.f32 %v250, %v493
    %495 = vmatprep.mubr.bf16.mxu0 0
    %496 = vmatmul.mubr.bf16.gmra.mrb[0].mxu0 %v174
    %v497 = vpop.f32.mrb[0].mxu0
    %v498 = vadd.f32 %v246, %v497
    %v499 = vpop.f32.mrb[0].mxu0
    %v500 = vadd.f32 %v250, %v499
    %v501 = vpop.f32.mrb[0].mxu0
    %v502 = vadd.f32 %v246, %v501
    %v503 = vpop.f32.mrb[0].mxu0
    %v504 = vadd.f32 %v250, %v503
    %505 = vmatprep.mubr.bf16.mxu0 0
    %506 = vmatmul.mubr.bf16.gmra.mrb[0].mxu0 %v175
    %v507 = vpop.f32.mrb[0].mxu0
    %v508 = vadd.f32 %v246, %v507
    %v509 = vpop.f32.mrb[0].mxu0
    %v510 = vadd.f32 %v250, %v509
    %v511 = vpop.f32.mrb[0].mxu0
    %v512 = vadd.f32 %v246, %v511
    %v513 = vpop.f32.mrb[0].mxu0
    %v514 = vadd.f32 %v250, %v513
    %515 = vmatprep.mubr.bf16.mxu0 0
    %516 = vmatmul.mubr.bf16.gmra.mrb[0].mxu0 %v176
    %v517 = vpop.f32.mrb[0].mxu0
    %v518 = vadd.f32 %v246, %v517
    %v519 = vpop.f32.mrb[0].mxu0
    %v520 = vadd.f32 %v250, %v519
    %v521 = vpop.f32.mrb[0].mxu0
    %v522 = vadd.f32 %v246, %v521
    %v523 = vpop.f32.mrb[0].mxu0
    %v524 = vadd.f32 %v250, %v523
    %525 = vmatprep.mubr.bf16.mxu0 0
    %526 = vmatmul.mubr.bf16.gmra.mrb[0].mxu0 %v177
    %v527 = vpop.f32.mrb[0].mxu0
    %v528 = vadd.f32 %v246, %v527
    %v529 = vpop.f32.mrb[0].mxu0
    %v530 = vadd.f32 %v250, %v529
    %v531 = vpop.f32.mrb[0].mxu0
    %v532 = vadd.f32 %v246, %v531
    %v533 = vpop.f32.mrb[0].mxu0
    %v534 = vadd.f32 %v250, %v533
    %535 = vmatprep.mubr.bf16.mxu0 0
    %536 = vmatmul.mubr.bf16.gmra.mrb[0].mxu0 %v178
    %v537 = vpop.f32.mrb[0].mxu0
    %v538 = vadd.f32 %v246, %v537
    %v539 = vpop.f32.mrb[0].mxu0
    %v540 = vadd.f32 %v250, %v539
    %v541 = vpop.f32.mrb[0].mxu0
    %v542 = vadd.f32 %v246, %v541
    %v543 = vpop.f32.mrb[0].mxu0
    %v544 = vadd.f32 %v250, %v543
    %545 = vmatprep.mubr.bf16.mxu0 0
    %546 = vmatmul.mubr.bf16.gmra.mrb[0].mxu0 %v179
    %v547 = vpop.f32.mrb[0].mxu0
    %v548 = vadd.f32 %v246, %v547
    %v549 = vpop.f32.mrb[0].mxu0
    %v550 = vadd.f32 %v250, %v549
    %v551 = vpop.f32.mrb[0].mxu0
    %v552 = vadd.f32 %v246, %v551
    %v553 = vpop.f32.mrb[0].mxu0
    %v554 = vadd.f32 %v250, %v553
    %555 = vmatprep.mubr.bf16.mxu0 0
    %556 = vmatmul.mubr.bf16.gmra.mrb[0].mxu0 %v180
    %v557 = vpop.f32.mrb[0].mxu0
    %v558 = vadd.f32 %v246, %v557
    %v559 = vpop.f32.mrb[0].mxu0
    %v560 = vadd.f32 %v250, %v559
    %v561 = vpop.f32.mrb[0].mxu0
    %v562 = vadd.f32 %v246, %v561
    %v563 = vpop.f32.mrb[0].mxu0
    %v564 = vadd.f32 %v250, %v563
    %565 = vmatprep.mubr.bf16.mxu0 0
    %566 = vmatmul.mubr.bf16.gmra.mrb[0].mxu0 %v181
    %v567 = vpop.f32.mrb[0].mxu0
    %v568 = vadd.f32 %v246, %v567
    %v569 = vpop.f32.mrb[0].mxu0
    %v570 = vadd.f32 %v250, %v569
    %v571 = vpop.f32.mrb[0].mxu0
    %v572 = vadd.f32 %v246, %v571
    %v573 = vpop.f32.mrb[0].mxu0
    %v574 = vadd.f32 %v250, %v573
    %575 = vmatprep.mubr.bf16.mxu0 0
    %576 = vmatmul.mubr.bf16.gmra.mrb[0].mxu0 %v182
    %v577 = vpop.f32.mrb[0].mxu0
    %v578 = vadd.f32 %v246, %v577
    %v579 = vpop.f32.mrb[0].mxu0
    %v580 = vadd.f32 %v250, %v579
    %v581 = vpop.f32.mrb[0].mxu0
    %v582 = vadd.f32 %v246, %v581
    %v583 = vpop.f32.mrb[0].mxu0
    %v584 = vadd.f32 %v250, %v583
    %585 = vmatprep.mubr.bf16.mxu0 0
    %586 = vmatmul.mubr.bf16.gmra.mrb[0].mxu0 %v183
    %v587 = vpop.f32.mrb[0].mxu0
    %v588 = vadd.f32 %v246, %v587
    %v589 = vpop.f32.mrb[0].mxu0
    %v590 = vadd.f32 %v250, %v589
    %v591 = vpop.f32.mrb[0].mxu0
    %v592 = vadd.f32 %v246, %v591
    %v593 = vpop.f32.mrb[0].mxu0
    %v594 = vadd.f32 %v250, %v593
    %595 = vmatprep.mubr.bf16.mxu0 0
    %596 = vmatmul.mubr.bf16.gmra.mrb[0].mxu0 %v184
    %v597 = vpop.f32.mrb[0].mxu0
    %v598 = vadd.f32 %v246, %v597
    %v599 = vpop.f32.mrb[0].mxu0
    %v600 = vadd.f32 %v250, %v599
    %v601 = vpop.f32.mrb[0].mxu0
    %v602 = vadd.f32 %v246, %v601
    %v603 = vpop.f32.mrb[0].mxu0
    %v604 = vadd.f32 %v250, %v603
    %605 = vmatprep.mubr.bf16.mxu0 0
    %606 = vmatmul.mubr.bf16.gmra.mrb[0].mxu0 %v185
    %v607 = vpop.f32.mrb[0].mxu0
    %v608 = vadd.f32 %v246, %v607
    %v609 = vpop.f32.mrb[0].mxu0
    %v610 = vadd.f32 %v250, %v609
    %v611 = vpop.f32.mrb[0].mxu0
    %v612 = vadd.f32 %v246, %v611
    %v613 = vpop.f32.mrb[0].mxu0
    %v614 = vadd.f32 %v250, %v613
    %615 = vmatprep.mubr.bf16.mxu0 0
    %616 = vmatmul.mubr.bf16.gmra.mrb[0].mxu0 %v186
    %v617 = vpop.f32.mrb[0].mxu0
    %v618 = vadd.f32 %v246, %v617
    %v619 = vpop.f32.mrb[0].mxu0
    %v620 = vadd.f32 %v250, %v619
    %v621 = vpop.f32.mrb[0].mxu0
    %v622 = vadd.f32 %v246, %v621
    %v623 = vpop.f32.mrb[0].mxu0
    %v624 = vadd.f32 %v250, %v623
    %625 = vmatprep.mubr.bf16.mxu0 0
    %626 = vmatmul.mubr.bf16.gmra.mrb[0].mxu0 %v187
    %v627 = vpop.f32.mrb[0].mxu0
    %v628 = vadd.f32 %v246, %v627
    %v629 = vpop.f32.mrb[0].mxu0
    %v630 = vadd.f32 %v250, %v629
    %v631 = vpop.f32.mrb[0].mxu0
    %v632 = vadd.f32 %v246, %v631
    %v633 = vpop.f32.mrb[0].mxu0
    %v634 = vadd.f32 %v250, %v633
    %635 = vmatprep.mubr.bf16.mxu0 0
    %636 = vmatmul.mubr.bf16.gmra.mrb[0].mxu0 %v188
    %v637 = vpop.f32.mrb[0].mxu0
    %v638 = vadd.f32 %v246, %v637
    %v639 = vpop.f32.mrb[0].mxu0
    %v640 = vadd.f32 %v250, %v639
    %v641 = vpop.f32.mrb[0].mxu0
    %v642 = vadd.f32 %v246, %v641
    %v643 = vpop.f32.mrb[0].mxu0
    %v644 = vadd.f32 %v250, %v643
    %645 = vmatprep.mubr.bf16.mxu0 0
    %646 = vmatmul.mubr.bf16.gmra.mrb[0].mxu0 %v189
    %v647 = vpop.f32.mrb[0].mxu0
    %v648 = vadd.f32 %v246, %v647
    %v649 = vpop.f32.mrb[0].mxu0
    %v650 = vadd.f32 %v250, %v649
    %v651 = vpop.f32.mrb[0].mxu0
    %v652 = vadd.f32 %v246, %v651
    %v653 = vpop.f32.mrb[0].mxu0
    %v654 = vadd.f32 %v250, %v653
    %655 = vmatprep.mubr.bf16.mxu0 0
    %656 = vmatmul.mubr.bf16.gmra.mrb[0].mxu0 %v190
    %v657 = vpop.f32.mrb[0].mxu0
    %v658 = vadd.f32 %v246, %v657
    %v659 = vpop.f32.mrb[0].mxu0
    %v660 = vadd.f32 %v250, %v659
    %v661 = vpop.f32.mrb[0].mxu0
    %v662 = vadd.f32 %v246, %v661
    %v663 = vpop.f32.mrb[0].mxu0
    %v664 = vadd.f32 %v250, %v663
    %665 = vmatprep.mubr.bf16.mxu0 0
    %666 = vmatmul.mubr.bf16.gmra.mrb[0].mxu0 %v191
    %v667 = vpop.f32.mrb[0].mxu0
    %v668 = vadd.f32 %v246, %v667
    %v669 = vpop.f32.mrb[0].mxu0
    %v670 = vadd.f32 %v250, %v669
    %v671 = vpop.f32.mrb[0].mxu0
    %v672 = vadd.f32 %v246, %v671
    %v673 = vpop.f32.mrb[0].mxu0
    %v674 = vadd.f32 %v250, %v673
    %675 = vmatprep.mubr.bf16.mxu0 0
    %676 = vmatmul.mubr.bf16.gmra.mrb[0].mxu0 %v192
    %v677 = vpop.f32.mrb[0].mxu0
    %v678 = vadd.f32 %v246, %v677
    %v679 = vpop.f32.mrb[0].mxu0
    %v680 = vadd.f32 %v250, %v679
    %v681 = vpop.f32.mrb[0].mxu0
    %v682 = vadd.f32 %v246, %v681
    %v683 = vpop.f32.mrb[0].mxu0
    %v684 = vadd.f32 %v250, %v683
    %685 = vmatprep.mubr.bf16.mxu0 0
    %686 = vmatmul.mubr.bf16.gmra.mrb[0].mxu0 %v193
    %v687 = vpop.f32.mrb[0].mxu0
    %v688 = vadd.f32 %v246, %v687
    %v689 = vpop.f32.mrb[0].mxu0
    %v690 = vadd.f32 %v250, %v689
    %v691 = vpop.f32.mrb[0].mxu0
    %v692 = vadd.f32 %v246, %v691
    %v693 = vpop.f32.mrb[0].mxu0
    %v694 = vadd.f32 %v250, %v693
    %695 = vmatprep.mubr.bf16.mxu0 0
    %696 = vmatmul.mubr.bf16.gmra.mrb[0].mxu0 %v194
    %v697 = vpop.f32.mrb[0].mxu0
    %v698 = vadd.f32 %v246, %v697
    %v699 = vpop.f32.mrb[0].mxu0
    %v700 = vadd.f32 %v250, %v699
    %v701 = vpop.f32.mrb[0].mxu0
    %v702 = vadd.f32 %v246, %v701
    %v703 = vpop.f32.mrb[0].mxu0
    %v704 = vadd.f32 %v250, %v703
    %705 = vmatprep.mubr.bf16.mxu0 0
    %706 = vmatmul.mubr.bf16.gmra.mrb[0].mxu0 %v195
    %v707 = vpop.f32.mrb[0].mxu0
    %v708 = vadd.f32 %v246, %v707
    %v709 = vpop.f32.mrb[0].mxu0
    %v710 = vadd.f32 %v250, %v709
    %v711 = vpop.f32.mrb[0].mxu0
    %v712 = vadd.f32 %v246, %v711
    %v713 = vpop.f32.mrb[0].mxu0
    %v714 = vadd.f32 %v250, %v713
    %715 = vmatprep.mubr.bf16.mxu0 0
    %716 = vmatmul.mubr.bf16.gmra.mrb[0].mxu0 %v196
    %v717 = vpop.f32.mrb[0].mxu0
    %v718 = vadd.f32 %v246, %v717
    %v719 = vpop.f32.mrb[0].mxu0
    %v720 = vadd.f32 %v250, %v719
    %v721 = vpop.f32.mrb[0].mxu0
    %v722 = vadd.f32 %v246, %v721
    %v723 = vpop.f32.mrb[0].mxu0
    %v724 = vadd.f32 %v250, %v723
    %725 = vmatprep.mubr.bf16.mxu0 0
    %726 = vmatmul.mubr.bf16.gmra.mrb[0].mxu0 %v197
    %v727 = vpop.f32.mrb[0].mxu0
    %v728 = vadd.f32 %v246, %v727
    %v729 = vpop.f32.mrb[0].mxu0
    %v730 = vadd.f32 %v250, %v729
    %v731 = vpop.f32.mrb[0].mxu0
    %v732 = vadd.f32 %v246, %v731
    %v733 = vpop.f32.mrb[0].mxu0
    %v734 = vadd.f32 %v250, %v733
    %735 = vmatprep.mubr.bf16.mxu0 0
    %736 = vmatmul.mubr.bf16.gmra.mrb[0].mxu0 %v198
    %v737 = vpop.f32.mrb[0].mxu0
    %v738 = vadd.f32 %v246, %v737
    %v739 = vpop.f32.mrb[0].mxu0
    %v740 = vadd.f32 %v250, %v739
    %v741 = vpop.f32.mrb[0].mxu0
    %v742 = vadd.f32 %v246, %v741
    %v743 = vpop.f32.mrb[0].mxu0
    %v744 = vadd.f32 %v250, %v743
    %745 = vmatprep.mubr.bf16.mxu0 0
    %746 = vmatmul.mubr.bf16.gmra.mrb[0].mxu0 %v199
    %v747 = vpop.f32.mrb[0].mxu0
    %v748 = vadd.f32 %v246, %v747
    %v749 = vpop.f32.mrb[0].mxu0
    %v750 = vadd.f32 %v250, %v749
    %v751 = vpop.f32.mrb[0].mxu0
    %v752 = vadd.f32 %v246, %v751
    %v753 = vpop.f32.mrb[0].mxu0
    %v754 = vadd.f32 %v250, %v753
    %755 = vmatprep.mubr.bf16.mxu0 0
    %756 = vmatmul.mubr.bf16.gmra.mrb[0].mxu0 %v200
    %v757 = vpop.f32.mrb[0].mxu0
    %v758 = vadd.f32 %v246, %v757
    %v759 = vpop.f32.mrb[0].mxu0
    %v760 = vadd.f32 %v250, %v759
    %v761 = vpop.f32.mrb[0].mxu0
    %v762 = vadd.f32 %v246, %v761
    %v763 = vpop.f32.mrb[0].mxu0
    %v764 = vadd.f32 %v250, %v763
    %765 = vmatprep.mubr.bf16.mxu0 0
    %766 = vmatmul.mubr.bf16.gmra.mrb[0].mxu0 %v201
    %v767 = vpop.f32.mrb[0].mxu0
    %v768 = vadd.f32 %v246, %v767
    %v769 = vpop.f32.mrb[0].mxu0
    %v770 = vadd.f32 %v250, %v769
    %v771 = vpop.f32.mrb[0].mxu0
    %v772 = vadd.f32 %v246, %v771
    %v773 = vpop.f32.mrb[0].mxu0
    %v774 = vadd.f32 %v250, %v773
    %775 = vmatprep.mubr.bf16.mxu0 0
    %776 = vmatmul.mubr.bf16.gmra.mrb[0].mxu0 %v202
    %v777 = vpop.f32.mrb[0].mxu0
    %v778 = vadd.f32 %v246, %v777
    %v779 = vpop.f32.mrb[0].mxu0
    %v780 = vadd.f32 %v250, %v779
    %v781 = vpop.f32.mrb[0].mxu0
    %v782 = vadd.f32 %v246, %v781
    %v783 = vpop.f32.mrb[0].mxu0
    %v784 = vadd.f32 %v250, %v783
    %785 = vmatprep.mubr.bf16.mxu0 0
    %786 = vmatmul.mubr.bf16.gmra.mrb[0].mxu0 %v203
    %v787 = vpop.f32.mrb[0].mxu0
    %v788 = vadd.f32 %v246, %v787
    %v789 = vpop.f32.mrb[0].mxu0
    %v790 = vadd.f32 %v250, %v789
    %v791 = vpop.f32.mrb[0].mxu0
    %v792 = vadd.f32 %v246, %v791
    %v793 = vpop.f32.mrb[0].mxu0
    %v794 = vadd.f32 %v250, %v793
    %795 = vmatprep.mubr.bf16.mxu0 0
    %796 = vmatmul.mubr.bf16.gmra.mrb[0].mxu0 %v204
    %v797 = vpop.f32.mrb[0].mxu0
    %v798 = vadd.f32 %v246, %v797
    %v799 = vpop.f32.mrb[0].mxu0
    %v800 = vadd.f32 %v250, %v799
    %v801 = vpop.f32.mrb[0].mxu0
    %v802 = vadd.f32 %v246, %v801
    %v803 = vpop.f32.mrb[0].mxu0
    %v804 = vadd.f32 %v250, %v803
    %805 = vmatprep.mubr.bf16.mxu0 0
    %806 = vmatmul.mubr.bf16.gmra.mrb[0].mxu0 %v205
    %v807 = vpop.f32.mrb[0].mxu0
    %v808 = vadd.f32 %v246, %v807
    %v809 = vpop.f32.mrb[0].mxu0
    %v810 = vadd.f32 %v250, %v809
    %v811 = vpop.f32.mrb[0].mxu0
    %v812 = vadd.f32 %v246, %v811
    %v813 = vpop.f32.mrb[0].mxu0
    %v814 = vadd.f32 %v250, %v813
    %815 = vmatprep.mubr.bf16.mxu0 0
    %816 = vmatmul.mubr.bf16.gmra.mrb[0].mxu0 %v206
    %v817 = vpop.f32.mrb[0].mxu0
    %v818 = vadd.f32 %v246, %v817
    %v819 = vpop.f32.mrb[0].mxu0
    %v820 = vadd.f32 %v250, %v819
    %v821 = vpop.f32.mrb[0].mxu0
    %v822 = vadd.f32 %v246, %v821
    %v823 = vpop.f32.mrb[0].mxu0
    %v824 = vadd.f32 %v250, %v823
    %825 = vmatprep.mubr.bf16.mxu0 0
    %826 = vmatmul.mubr.bf16.gmra.mrb[0].mxu0 %v207
    %v827 = vpop.f32.mrb[0].mxu0
    %v828 = vadd.f32 %v246, %v827
    %v829 = vpop.f32.mrb[0].mxu0
    %v830 = vadd.f32 %v250, %v829
    %v831 = vpop.f32.mrb[0].mxu0
    %v832 = vadd.f32 %v246, %v831
    %v833 = vpop.f32.mrb[0].mxu0
    %v834 = vadd.f32 %v250, %v833
    %835 = vmatprep.mubr.bf16.mxu0 0
    %836 = vmatmul.mubr.bf16.gmra.mrb[0].mxu0 %v208
    %v837 = vpop.f32.mrb[0].mxu0
    %v838 = vadd.f32 %v246, %v837
    %v839 = vpop.f32.mrb[0].mxu0
    %v840 = vadd.f32 %v250, %v839
    %v841 = vpop.f32.mrb[0].mxu0
    %v842 = vadd.f32 %v246, %v841
    %v843 = vpop.f32.mrb[0].mxu0
    %v844 = vadd.f32 %v250, %v843
    %845 = vmatprep.mubr.bf16.mxu0 0
    %846 = vmatmul.mubr.bf16.gmra.mrb[0].mxu0 %v209
    %v847 = vpop.f32.mrb[0].mxu0
    %v848 = vadd.f32 %v246, %v847
    %v849 = vpop.f32.mrb[0].mxu0
    %v850 = vadd.f32 %v250, %v849
    %v851 = vpop.f32.mrb[0].mxu0
    %v852 = vadd.f32 %v246, %v851
    %v853 = vpop.f32.mrb[0].mxu0
    %v854 = vadd.f32 %v250, %v853
    %855 = vmatprep.mubr.bf16.mxu0 0
    %856 = vmatmul.mubr.bf16.gmra.mrb[0].mxu0 %v210
    %v857 = vpop.f32.mrb[0].mxu0
    %v858 = vadd.f32 %v246, %v857
    %v859 = vpop.f32.mrb[0].mxu0
    %v860 = vadd.f32 %v250, %v859
    %v861 = vpop.f32.mrb[0].mxu0
    %v862 = vadd.f32 %v246, %v861
    %v863 = vpop.f32.mrb[0].mxu0
    %v864 = vadd.f32 %v250, %v863
    %865 = vmatprep.mubr.bf16.mxu0 0
    %866 = vmatmul.mubr.bf16.gmra.mrb[0].mxu0 %v211
    %v867 = vpop.f32.mrb[0].mxu0
    %v868 = vadd.f32 %v246, %v867
    %v869 = vpop.f32.mrb[0].mxu0
    %v870 = vadd.f32 %v250, %v869
    %v871 = vpop.f32.mrb[0].mxu0
    %v872 = vadd.f32 %v246, %v871
    %v873 = vpop.f32.mrb[0].mxu0
    %v874 = vadd.f32 %v250, %v873
    %875 = vmatprep.mubr.bf16.mxu0 0
    %876 = vmatmul.mubr.bf16.gmra.mrb[0].mxu0 %v212
    %v877 = vpop.f32.mrb[0].mxu0
    %v878 = vadd.f32 %v246, %v877
    %v879 = vpop.f32.mrb[0].mxu0
    %v880 = vadd.f32 %v250, %v879
    %v881 = vpop.f32.mrb[0].mxu0
    %v882 = vadd.f32 %v246, %v881
    %v883 = vpop.f32.mrb[0].mxu0
    %v884 = vadd.f32 %v250, %v883
    %885 = vmatprep.mubr.bf16.mxu0 0
    %886 = vmatmul.mubr.bf16.gmra.mrb[0].mxu0 %v213
    %v887 = vpop.f32.mrb[0].mxu0
    %v888 = vadd.f32 %v246, %v887
    %v889 = vpop.f32.mrb[0].mxu0
    %v890 = vadd.f32 %v250, %v889
    %v891 = vpop.f32.mrb[0].mxu0
    %v892 = vadd.f32 %v246, %v891
    %v893 = vpop.f32.mrb[0].mxu0
    %v894 = vadd.f32 %v250, %v893
    %895 = vmatprep.mubr.bf16.mxu0 0
    %896 = vmatmul.mubr.bf16.gmra.mrb[0].mxu0 %v214
    %v897 = vpop.f32.mrb[0].mxu0
    %v898 = vadd.f32 %v246, %v897
    %v899 = vpop.f32.mrb[0].mxu0
    %v900 = vadd.f32 %v250, %v899
    %v901 = vpop.f32.mrb[0].mxu0
    %v902 = vadd.f32 %v246, %v901
    %v903 = vpop.f32.mrb[0].mxu0
    %v904 = vadd.f32 %v250, %v903
    %905 = vmatprep.mubr.bf16.mxu0 0
    %906 = vmatmul.mubr.bf16.gmra.mrb[0].mxu0 %v215
    %v907 = vpop.f32.mrb[0].mxu0
    %v908 = vadd.f32 %v246, %v907
    %v909 = vpop.f32.mrb[0].mxu0
    %v910 = vadd.f32 %v250, %v909
    %v911 = vpop.f32.mrb[0].mxu0
    %v912 = vadd.f32 %v246, %v911
    %v913 = vpop.f32.mrb[0].mxu0
    %v914 = vadd.f32 %v250, %v913
    %915 = vmatprep.mubr.bf16.mxu0 0
    %916 = vmatmul.mubr.bf16.gmra.mrb[0].mxu0 %v216
    %v917 = vpop.f32.mrb[0].mxu0
    %v918 = vadd.f32 %v246, %v917
    %v919 = vpop.f32.mrb[0].mxu0
    %v920 = vadd.f32 %v250, %v919
    %v921 = vpop.f32.mrb[0].mxu0
    %v922 = vadd.f32 %v246, %v921
    %v923 = vpop.f32.mrb[0].mxu0
    %v924 = vadd.f32 %v250, %v923
    %925 = vmatprep.mubr.bf16.mxu0 0
    %926 = vmatmul.mubr.bf16.gmra.mrb[0].mxu0 %v217
    %v927 = vpop.f32.mrb[0].mxu0
    %v928 = vadd.f32 %v246, %v927
    %v929 = vpop.f32.mrb[0].mxu0
    %v930 = vadd.f32 %v250, %v929
    %v931 = vpop.f32.mrb[0].mxu0
    %v932 = vadd.f32 %v246, %v931
    %v933 = vpop.f32.mrb[0].mxu0
    %v934 = vadd.f32 %v250, %v933
    %935 = vmatprep.mubr.bf16.mxu0 0
    %936 = vmatmul.mubr.bf16.gmra.mrb[0].mxu0 %v218
    %v937 = vpop.f32.mrb[0].mxu0
    %v938 = vadd.f32 %v246, %v937
    %v939 = vpop.f32.mrb[0].mxu0
    %v940 = vadd.f32 %v250, %v939
    %v941 = vpop.f32.mrb[0].mxu0
    %v942 = vadd.f32 %v246, %v941
    %v943 = vpop.f32.mrb[0].mxu0
    %v944 = vadd.f32 %v250, %v943
    %945 = vmatprep.mubr.bf16.mxu0 0
    %946 = vmatmul.mubr.bf16.gmra.mrb[0].mxu0 %v219
    %v947 = vpop.f32.mrb[0].mxu0
    %v948 = vadd.f32 %v246, %v947
    %v949 = vpop.f32.mrb[0].mxu0
    %v950 = vadd.f32 %v250, %v949
    %v951 = vpop.f32.mrb[0].mxu0
    %v952 = vadd.f32 %v246, %v951
    %v953 = vpop.f32.mrb[0].mxu0
    %v954 = vadd.f32 %v250, %v953
    %955 = vmatprep.mubr.bf16.mxu0 0
    %956 = vmatmul.mubr.bf16.gmra.mrb[0].mxu0 %v220
    %v957 = vpop.f32.mrb[0].mxu0
    %v958 = vadd.f32 %v246, %v957
    %v959 = vpop.f32.mrb[0].mxu0
    %v960 = vadd.f32 %v250, %v959
    %v961 = vpop.f32.mrb[0].mxu0
    %v962 = vadd.f32 %v246, %v961
    %v963 = vpop.f32.mrb[0].mxu0
    %v964 = vadd.f32 %v250, %v963
    %965 = vmatprep.mubr.bf16.mxu0 0
    %966 = vmatmul.mubr.bf16.gmra.mrb[0].mxu0 %v221
    %v967 = vpop.f32.mrb[0].mxu0
    %v968 = vadd.f32 %v246, %v967
    %v969 = vpop.f32.mrb[0].mxu0
    %v970 = vadd.f32 %v250, %v969
    %v971 = vpop.f32.mrb[0].mxu0
    %v972 = vadd.f32 %v246, %v971
    %v973 = vpop.f32.mrb[0].mxu0
    %v974 = vadd.f32 %v250, %v973
    %975 = vmatprep.mubr.bf16.mxu0 0
    %976 = vmatmul.mubr.bf16.gmra.mrb[0].mxu0 %v222
    %v977 = vpop.f32.mrb[0].mxu0
    %v978 = vadd.f32 %v246, %v977
    %v979 = vpop.f32.mrb[0].mxu0
    %v980 = vadd.f32 %v250, %v979
    %v981 = vpop.f32.mrb[0].mxu0
    %v982 = vadd.f32 %v246, %v981
    %v983 = vpop.f32.mrb[0].mxu0
    %v984 = vadd.f32 %v250, %v983
    %985 = vmatprep.mubr.bf16.mxu0 0
    %986 = vmatmul.mubr.bf16.gmra.mrb[0].mxu0 %v223
    %v987 = vpop.f32.mrb[0].mxu0
    %v988 = vadd.f32 %v246, %v987
    %v989 = vpop.f32.mrb[0].mxu0
    %v990 = vadd.f32 %v250, %v989
    %v991 = vpop.f32.mrb[0].mxu0
    %v992 = vadd.f32 %v246, %v991
    %v993 = vpop.f32.mrb[0].mxu0
    %v994 = vadd.f32 %v250, %v993
    %995 = vmatprep.mubr.bf16.mxu0 0
    %996 = vmatmul.mubr.bf16.gmra.mrb[0].mxu0 %v224
    %v997 = vpop.f32.mrb[0].mxu0
    %v998 = vadd.f32 %v246, %v997
    %v999 = vpop.f32.mrb[0].mxu0
    %v1000 = vadd.f32 %v250, %v999
    %v1001 = vpop.f32.mrb[0].mxu0
    %v1002 = vadd.f32 %v246, %v1001
    %v1003 = vpop.f32.mrb[0].mxu0
    %v1004 = vadd.f32 %v250, %v1003
    %1005 = vdwg.mxu0
    %v1006 = vmax.f32 %v368, 0.0
    %v1007 = vmax.f32 %v370, 0.0
    %v1008 = vmax.f32 %v372, 0.0
    %v1009 = vmax.f32 %v374, 0.0
    %v1010 = vmax.f32 %v378, 0.0
    %v1011 = vmax.f32 %v380, 0.0
    %v1012 = vmax.f32 %v382, 0.0
    %v1013 = vmax.f32 %v384, 0.0
    %v1014 = vmax.f32 %v388, 0.0
    %v1015 = vmax.f32 %v390, 0.0
    %v1016 = vmax.f32 %v392, 0.0
    %v1017 = vmax.f32 %v394, 0.0
    %v1018 = vmax.f32 %v398, 0.0
    %v1019 = vmax.f32 %v400, 0.0
    %v1020 = vmax.f32 %v402, 0.0
    %v1021 = vmax.f32 %v404, 0.0
    %v1022 = vmax.f32 %v408, 0.0
    %v1023 = vmax.f32 %v410, 0.0
    %v1024 = vmax.f32 %v412, 0.0
    %v1025 = vmax.f32 %v414, 0.0
    %v1026 = vmax.f32 %v418, 0.0
    %v1027 = vmax.f32 %v420, 0.0
    %v1028 = vmax.f32 %v422, 0.0
    %v1029 = vmax.f32 %v424, 0.0
    %v1030 = vmax.f32 %v428, 0.0
    %v1031 = vmax.f32 %v430, 0.0
    %v1032 = vmax.f32 %v432, 0.0
    %v1033 = vmax.f32 %v434, 0.0
    %v1034 = vmax.f32 %v438, 0.0
    %v1035 = vmax.f32 %v440, 0.0
    %v1036 = vmax.f32 %v442, 0.0
    %v1037 = vmax.f32 %v444, 0.0
    %v1038 = vmax.f32 %v448, 0.0
    %v1039 = vmax.f32 %v450, 0.0
    %v1040 = vmax.f32 %v452, 0.0
    %v1041 = vmax.f32 %v454, 0.0
    %v1042 = vmax.f32 %v458, 0.0
    %v1043 = vmax.f32 %v460, 0.0
    %v1044 = vmax.f32 %v462, 0.0
    %v1045 = vmax.f32 %v464, 0.0
    %v1046 = vmax.f32 %v468, 0.0
    %v1047 = vmax.f32 %v470, 0.0
    %v1048 = vmax.f32 %v472, 0.0
    %v1049 = vmax.f32 %v474, 0.0
    %v1050 = vmax.f32 %v478, 0.0
    %v1051 = vmax.f32 %v480, 0.0
    %v1052 = vmax.f32 %v482, 0.0
    %v1053 = vmax.f32 %v484, 0.0
    %v1054 = vmax.f32 %v488, 0.0
    %v1055 = vmax.f32 %v490, 0.0
    %v1056 = vmax.f32 %v492, 0.0
    %v1057 = vmax.f32 %v494, 0.0
    %v1058 = vmax.f32 %v498, 0.0
    %v1059 = vmax.f32 %v500, 0.0
    %v1060 = vmax.f32 %v502, 0.0
    %v1061 = vmax.f32 %v504, 0.0
    %v1062 = vmax.f32 %v508, 0.0
    %v1063 = vmax.f32 %v510, 0.0
    %v1064 = vmax.f32 %v512, 0.0
    %v1065 = vmax.f32 %v514, 0.0
    %v1066 = vmax.f32 %v518, 0.0
    %v1067 = vmax.f32 %v520, 0.0
    %v1068 = vmax.f32 %v522, 0.0
    %v1069 = vmax.f32 %v524, 0.0
    %v1070 = vmax.f32 %v528, 0.0
    %v1071 = vmax.f32 %v530, 0.0
    %v1072 = vmax.f32 %v532, 0.0
    %v1073 = vmax.f32 %v534, 0.0
    %v1074 = vmax.f32 %v538, 0.0
    %v1075 = vmax.f32 %v540, 0.0
    %v1076 = vmax.f32 %v542, 0.0
    %v1077 = vmax.f32 %v544, 0.0
    %v1078 = vmax.f32 %v548, 0.0
    %v1079 = vmax.f32 %v550, 0.0
    %v1080 = vmax.f32 %v552, 0.0
    %v1081 = vmax.f32 %v554, 0.0
    %v1082 = vmax.f32 %v558, 0.0
    %v1083 = vmax.f32 %v560, 0.0
    %v1084 = vmax.f32 %v562, 0.0
    %v1085 = vmax.f32 %v564, 0.0
    %v1086 = vmax.f32 %v568, 0.0
    %v1087 = vmax.f32 %v570, 0.0
    %v1088 = vmax.f32 %v572, 0.0
    %v1089 = vmax.f32 %v574, 0.0
    %v1090 = vmax.f32 %v578, 0.0
    %v1091 = vmax.f32 %v580, 0.0
    %v1092 = vmax.f32 %v582, 0.0
    %v1093 = vmax.f32 %v584, 0.0
    %v1094 = vmax.f32 %v588, 0.0
    %v1095 = vmax.f32 %v590, 0.0
    %v1096 = vmax.f32 %v592, 0.0
    %v1097 = vmax.f32 %v594, 0.0
    %v1098 = vmax.f32 %v598, 0.0
    %v1099 = vmax.f32 %v600, 0.0
    %v1100 = vmax.f32 %v602, 0.0
    %v1101 = vmax.f32 %v604, 0.0
    %v1102 = vmax.f32 %v608, 0.0
    %v1103 = vmax.f32 %v610, 0.0
    %v1104 = vmax.f32 %v612, 0.0
    %v1105 = vmax.f32 %v614, 0.0
    %v1106 = vmax.f32 %v618, 0.0
    %v1107 = vmax.f32 %v620, 0.0
    %v1108 = vmax.f32 %v622, 0.0
    %v1109 = vmax.f32 %v624, 0.0
    %v1110 = vmax.f32 %v628, 0.0
    %v1111 = vmax.f32 %v630, 0.0
    %v1112 = vmax.f32 %v632, 0.0
    %v1113 = vmax.f32 %v634, 0.0
    %v1114 = vmax.f32 %v638, 0.0
    %v1115 = vmax.f32 %v640, 0.0
    %v1116 = vmax.f32 %v642, 0.0
    %v1117 = vmax.f32 %v644, 0.0
    %v1118 = vmax.f32 %v648, 0.0
    %v1119 = vmax.f32 %v650, 0.0
    %v1120 = vmax.f32 %v652, 0.0
    %v1121 = vmax.f32 %v654, 0.0
    %v1122 = vmax.f32 %v658, 0.0
    %v1123 = vmax.f32 %v660, 0.0
    %v1124 = vmax.f32 %v662, 0.0
    %v1125 = vmax.f32 %v664, 0.0
    %v1126 = vmax.f32 %v668, 0.0
    %v1127 = vmax.f32 %v670, 0.0
    %v1128 = vmax.f32 %v672, 0.0
    %v1129 = vmax.f32 %v674, 0.0
    %v1130 = vmax.f32 %v678, 0.0
    %v1131 = vmax.f32 %v680, 0.0
    %v1132 = vmax.f32 %v682, 0.0
    %v1133 = vmax.f32 %v684, 0.0
    %v1134 = vmax.f32 %v688, 0.0
    %v1135 = vmax.f32 %v690, 0.0
    %v1136 = vmax.f32 %v692, 0.0
    %v1137 = vmax.f32 %v694, 0.0
    %v1138 = vmax.f32 %v698, 0.0
    %v1139 = vmax.f32 %v700, 0.0
    %v1140 = vmax.f32 %v702, 0.0
    %v1141 = vmax.f32 %v704, 0.0
    %v1142 = vmax.f32 %v708, 0.0
    %v1143 = vmax.f32 %v710, 0.0
    %v1144 = vmax.f32 %v712, 0.0
    %v1145 = vmax.f32 %v714, 0.0
    %v1146 = vmax.f32 %v718, 0.0
    %v1147 = vmax.f32 %v720, 0.0
    %v1148 = vmax.f32 %v722, 0.0
    %v1149 = vmax.f32 %v724, 0.0
    %v1150 = vmax.f32 %v728, 0.0
    %v1151 = vmax.f32 %v730, 0.0
    %v1152 = vmax.f32 %v732, 0.0
    %v1153 = vmax.f32 %v734, 0.0
    %v1154 = vmax.f32 %v738, 0.0
    %v1155 = vmax.f32 %v740, 0.0
    %v1156 = vmax.f32 %v742, 0.0
    %v1157 = vmax.f32 %v744, 0.0
    %v1158 = vmax.f32 %v748, 0.0
    %v1159 = vmax.f32 %v750, 0.0
    %v1160 = vmax.f32 %v752, 0.0
    %v1161 = vmax.f32 %v754, 0.0
    %v1162 = vmax.f32 %v758, 0.0
    %v1163 = vmax.f32 %v760, 0.0
    %v1164 = vmax.f32 %v762, 0.0
    %v1165 = vmax.f32 %v764, 0.0
    %v1166 = vmax.f32 %v768, 0.0
    %v1167 = vmax.f32 %v770, 0.0
    %v1168 = vmax.f32 %v772, 0.0
    %v1169 = vmax.f32 %v774, 0.0
    %v1170 = vmax.f32 %v778, 0.0
    %v1171 = vmax.f32 %v780, 0.0
    %v1172 = vmax.f32 %v782, 0.0
    %v1173 = vmax.f32 %v784, 0.0
    %v1174 = vmax.f32 %v788, 0.0
    %v1175 = vmax.f32 %v790, 0.0
    %v1176 = vmax.f32 %v792, 0.0
    %v1177 = vmax.f32 %v794, 0.0
    %v1178 = vmax.f32 %v798, 0.0
    %v1179 = vmax.f32 %v800, 0.0
    %v1180 = vmax.f32 %v802, 0.0
    %v1181 = vmax.f32 %v804, 0.0
    %v1182 = vmax.f32 %v808, 0.0
    %v1183 = vmax.f32 %v810, 0.0
    %v1184 = vmax.f32 %v812, 0.0
    %v1185 = vmax.f32 %v814, 0.0
    %v1186 = vmax.f32 %v818, 0.0
    %v1187 = vmax.f32 %v820, 0.0
    %v1188 = vmax.f32 %v822, 0.0
    %v1189 = vmax.f32 %v824, 0.0
    %v1190 = vmax.f32 %v828, 0.0
    %v1191 = vmax.f32 %v830, 0.0
    %v1192 = vmax.f32 %v832, 0.0
    %v1193 = vmax.f32 %v834, 0.0
    %v1194 = vmax.f32 %v838, 0.0
    %v1195 = vmax.f32 %v840, 0.0
    %v1196 = vmax.f32 %v842, 0.0
    %v1197 = vmax.f32 %v844, 0.0
    %v1198 = vmax.f32 %v848, 0.0
    %v1199 = vmax.f32 %v850, 0.0
    %v1200 = vmax.f32 %v852, 0.0
    %v1201 = vmax.f32 %v854, 0.0
    %v1202 = vmax.f32 %v858, 0.0
    %v1203 = vmax.f32 %v860, 0.0
    %v1204 = vmax.f32 %v862, 0.0
    %v1205 = vmax.f32 %v864, 0.0
    %v1206 = vmax.f32 %v868, 0.0
    %v1207 = vmax.f32 %v870, 0.0
    %v1208 = vmax.f32 %v872, 0.0
    %v1209 = vmax.f32 %v874, 0.0
    %v1210 = vmax.f32 %v878, 0.0
    %v1211 = vmax.f32 %v880, 0.0
    %v1212 = vmax.f32 %v882, 0.0
    %v1213 = vmax.f32 %v884, 0.0
    %v1214 = vmax.f32 %v888, 0.0
    %v1215 = vmax.f32 %v890, 0.0
    %v1216 = vmax.f32 %v892, 0.0
    %v1217 = vmax.f32 %v894, 0.0
    %v1218 = vmax.f32 %v898, 0.0
    %v1219 = vmax.f32 %v900, 0.0
    %v1220 = vmax.f32 %v902, 0.0
    %v1221 = vmax.f32 %v904, 0.0
    %v1222 = vmax.f32 %v908, 0.0
    %v1223 = vmax.f32 %v910, 0.0
    %v1224 = vmax.f32 %v912, 0.0
    %v1225 = vmax.f32 %v914, 0.0
    %v1226 = vmax.f32 %v918, 0.0
    %v1227 = vmax.f32 %v920, 0.0
    %v1228 = vmax.f32 %v922, 0.0
    %v1229 = vmax.f32 %v924, 0.0
    %v1230 = vmax.f32 %v928, 0.0
    %v1231 = vmax.f32 %v930, 0.0
    %v1232 = vmax.f32 %v932, 0.0
    %v1233 = vmax.f32 %v934, 0.0
    %v1234 = vmax.f32 %v938, 0.0
    %v1235 = vmax.f32 %v940, 0.0
    %v1236 = vmax.f32 %v942, 0.0
    %v1237 = vmax.f32 %v944, 0.0
    %v1238 = vmax.f32 %v948, 0.0
    %v1239 = vmax.f32 %v950, 0.0
    %v1240 = vmax.f32 %v952, 0.0
    %v1241 = vmax.f32 %v954, 0.0
    %v1242 = vmax.f32 %v958, 0.0
    %v1243 = vmax.f32 %v960, 0.0
    %v1244 = vmax.f32 %v962, 0.0
    %v1245 = vmax.f32 %v964, 0.0
    %v1246 = vmax.f32 %v968, 0.0
    %v1247 = vmax.f32 %v970, 0.0
    %v1248 = vmax.f32 %v972, 0.0
    %v1249 = vmax.f32 %v974, 0.0
    %v1250 = vmax.f32 %v978, 0.0
    %v1251 = vmax.f32 %v980, 0.0
    %v1252 = vmax.f32 %v982, 0.0
    %v1253 = vmax.f32 %v984, 0.0
    %v1254 = vmax.f32 %v988, 0.0
    %v1255 = vmax.f32 %v990, 0.0
    %v1256 = vmax.f32 %v992, 0.0
    %v1257 = vmax.f32 %v994, 0.0
    %v1258 = vmax.f32 %v998, 0.0
    %v1259 = vmax.f32 %v1000, 0.0
    %v1260 = vmax.f32 %v1002, 0.0
    %v1261 = vmax.f32 %v1004, 0.0
    %v1262 = vmul.f32 %v1007, -1.0
    %v1263 = vmul.f32 %v1009, -1.0
    %v1264 = vmul.f32 %v1011, -1.0
    %v1265 = vmul.f32 %v1013, -1.0
    %v1266 = vmul.f32 %v1015, -1.0
    %v1267 = vmul.f32 %v1017, -1.0
    %v1268 = vmul.f32 %v1019, -1.0
    %v1269 = vmul.f32 %v1021, -1.0
    %v1270 = vmul.f32 %v1023, -1.0
    %v1271 = vmul.f32 %v1025, -1.0
    %v1272 = vmul.f32 %v1027, -1.0
    %v1273 = vmul.f32 %v1029, -1.0
    %v1274 = vmul.f32 %v1031, -1.0
    %v1275 = vmul.f32 %v1033, -1.0
    %v1276 = vmul.f32 %v1035, -1.0
    %v1277 = vmul.f32 %v1037, -1.0
    %v1278 = vmul.f32 %v1039, -1.0
    %v1279 = vmul.f32 %v1041, -1.0
    %v1280 = vmul.f32 %v1043, -1.0
    %v1281 = vmul.f32 %v1045, -1.0
    %v1282 = vmul.f32 %v1047, -1.0
    %v1283 = vmul.f32 %v1049, -1.0
    %v1284 = vmul.f32 %v1051, -1.0
    %v1285 = vmul.f32 %v1053, -1.0
    %v1286 = vmul.f32 %v1055, -1.0
    %v1287 = vmul.f32 %v1057, -1.0
    %v1288 = vmul.f32 %v1059, -1.0
    %v1289 = vmul.f32 %v1061, -1.0
    %v1290 = vmul.f32 %v1063, -1.0
    %v1291 = vmul.f32 %v1065, -1.0
    %v1292 = vmul.f32 %v1067, -1.0
    %v1293 = vmul.f32 %v1069, -1.0
    %v1294 = vmul.f32 %v1071, -1.0
    %v1295 = vmul.f32 %v1073, -1.0
    %v1296 = vmul.f32 %v1075, -1.0
    %v1297 = vmul.f32 %v1077, -1.0
    %v1298 = vmul.f32 %v1079, -1.0
    %v1299 = vmul.f32 %v1081, -1.0
    %v1300 = vmul.f32 %v1083, -1.0
    %v1301 = vmul.f32 %v1085, -1.0
    %v1302 = vmul.f32 %v1087, -1.0
    %v1303 = vmul.f32 %v1089, -1.0
    %v1304 = vmul.f32 %v1091, -1.0
    %v1305 = vmul.f32 %v1093, -1.0
    %v1306 = vmul.f32 %v1095, -1.0
    %v1307 = vmul.f32 %v1097, -1.0
    %v1308 = vmul.f32 %v1099, -1.0
    %v1309 = vmul.f32 %v1101, -1.0
    %v1310 = vmul.f32 %v1103, -1.0
    %v1311 = vmul.f32 %v1105, -1.0
    %v1312 = vmul.f32 %v1107, -1.0
    %v1313 = vmul.f32 %v1109, -1.0
    %v1314 = vmul.f32 %v1111, -1.0
    %v1315 = vmul.f32 %v1113, -1.0
    %v1316 = vmul.f32 %v1115, -1.0
    %v1317 = vmul.f32 %v1117, -1.0
    %v1318 = vmul.f32 %v1119, -1.0
    %v1319 = vmul.f32 %v1121, -1.0
    %v1320 = vmul.f32 %v1123, -1.0
    %v1321 = vmul.f32 %v1125, -1.0
    %v1322 = vmul.f32 %v1127, -1.0
    %v1323 = vmul.f32 %v1129, -1.0
    %v1324 = vmul.f32 %v1131, -1.0
    %v1325 = vmul.f32 %v1133, -1.0
    %v1326 = vmul.f32 %v1135, -1.0
    %v1327 = vmul.f32 %v1137, -1.0
    %v1328 = vmul.f32 %v1139, -1.0
    %v1329 = vmul.f32 %v1141, -1.0
    %v1330 = vmul.f32 %v1143, -1.0
    %v1331 = vmul.f32 %v1145, -1.0
    %v1332 = vmul.f32 %v1147, -1.0
    %v1333 = vmul.f32 %v1149, -1.0
    %v1334 = vmul.f32 %v1151, -1.0
    %v1335 = vmul.f32 %v1153, -1.0
    %v1336 = vmul.f32 %v1155, -1.0
    %v1337 = vmul.f32 %v1157, -1.0
    %v1338 = vmul.f32 %v1159, -1.0
    %v1339 = vmul.f32 %v1161, -1.0
    %v1340 = vmul.f32 %v1163, -1.0
    %v1341 = vmul.f32 %v1165, -1.0
    %v1342 = vmul.f32 %v1167, -1.0
    %v1343 = vmul.f32 %v1169, -1.0
    %v1344 = vmul.f32 %v1171, -1.0
    %v1345 = vmul.f32 %v1173, -1.0
    %v1346 = vmul.f32 %v1175, -1.0
    %v1347 = vmul.f32 %v1177, -1.0
    %v1348 = vmul.f32 %v1179, -1.0
    %v1349 = vmul.f32 %v1181, -1.0
    %v1350 = vmul.f32 %v1183, -1.0
    %v1351 = vmul.f32 %v1185, -1.0
    %v1352 = vmul.f32 %v1187, -1.0
    %v1353 = vmul.f32 %v1189, -1.0
    %v1354 = vmul.f32 %v1191, -1.0
    %v1355 = vmul.f32 %v1193, -1.0
    %v1356 = vmul.f32 %v1195, -1.0
    %v1357 = vmul.f32 %v1197, -1.0
    %v1358 = vmul.f32 %v1199, -1.0
    %v1359 = vmul.f32 %v1201, -1.0
    %v1360 = vmul.f32 %v1203, -1.0
    %v1361 = vmul.f32 %v1205, -1.0
    %v1362 = vmul.f32 %v1207, -1.0
    %v1363 = vmul.f32 %v1209, -1.0
    %v1364 = vmul.f32 %v1211, -1.0
    %v1365 = vmul.f32 %v1213, -1.0
    %v1366 = vmul.f32 %v1215, -1.0
    %v1367 = vmul.f32 %v1217, -1.0
    %v1368 = vmul.f32 %v1219, -1.0
    %v1369 = vmul.f32 %v1221, -1.0
    %v1370 = vmul.f32 %v1223, -1.0
    %v1371 = vmul.f32 %v1225, -1.0
    %v1372 = vmul.f32 %v1227, -1.0
    %v1373 = vmul.f32 %v1229, -1.0
    %v1374 = vmul.f32 %v1231, -1.0
    %v1375 = vmul.f32 %v1233, -1.0
    %v1376 = vmul.f32 %v1235, -1.0
    %v1377 = vmul.f32 %v1237, -1.0
    %v1378 = vmul.f32 %v1239, -1.0
    %v1379 = vmul.f32 %v1241, -1.0
    %v1380 = vmul.f32 %v1243, -1.0
    %v1381 = vmul.f32 %v1245, -1.0
    %v1382 = vmul.f32 %v1247, -1.0
    %v1383 = vmul.f32 %v1249, -1.0
    %v1384 = vmul.f32 %v1251, -1.0
    %v1385 = vmul.f32 %v1253, -1.0
    %v1386 = vmul.f32 %v1255, -1.0
    %v1387 = vmul.f32 %v1257, -1.0
    %v1388 = vmul.f32 %v1259, -1.0
    %v1389 = vmul.f32 %v1261, -1.0
    %v1390 = vmul.f32 %v1262, 1.442695
    %v1391 = vpow.pop %v1390
    %v1392 = vmul.f32 %v1263, 1.442695
    %v1393 = vpow.pop %v1392
    %v1394 = vmul.f32 %v1264, 1.442695
    %v1395 = vpow.pop %v1394
    %v1396 = vmul.f32 %v1265, 1.442695
    %v1397 = vpow.pop %v1396
    %v1398 = vmul.f32 %v1266, 1.442695
    %v1399 = vpow.pop %v1398
    %v1400 = vmul.f32 %v1267, 1.442695
    %v1401 = vpow.pop %v1400
    %v1402 = vmul.f32 %v1268, 1.442695
    %v1403 = vpow.pop %v1402
    %v1404 = vmul.f32 %v1269, 1.442695
    %v1405 = vpow.pop %v1404
    %v1406 = vmul.f32 %v1270, 1.442695
    %v1407 = vpow.pop %v1406
    %v1408 = vmul.f32 %v1271, 1.442695
    %v1409 = vpow.pop %v1408
    %v1410 = vmul.f32 %v1272, 1.442695
    %v1411 = vpow.pop %v1410
    %v1412 = vmul.f32 %v1273, 1.442695
    %v1413 = vpow.pop %v1412
    %v1414 = vmul.f32 %v1274, 1.442695
    %v1415 = vpow.pop %v1414
    %v1416 = vmul.f32 %v1275, 1.442695
    %v1417 = vpow.pop %v1416
    %v1418 = vmul.f32 %v1276, 1.442695
    %v1419 = vpow.pop %v1418
    %v1420 = vmul.f32 %v1277, 1.442695
    %v1421 = vpow.pop %v1420
    %v1422 = vmul.f32 %v1278, 1.442695
    %v1423 = vpow.pop %v1422
    %v1424 = vmul.f32 %v1279, 1.442695
    %v1425 = vpow.pop %v1424
    %v1426 = vmul.f32 %v1280, 1.442695
    %v1427 = vpow.pop %v1426
    %v1428 = vmul.f32 %v1281, 1.442695
    %v1429 = vpow.pop %v1428
    %v1430 = vmul.f32 %v1282, 1.442695
    %v1431 = vpow.pop %v1430
    %v1432 = vmul.f32 %v1283, 1.442695
    %v1433 = vpow.pop %v1432
    %v1434 = vmul.f32 %v1284, 1.442695
    %v1435 = vpow.pop %v1434
    %v1436 = vmul.f32 %v1285, 1.442695
    %v1437 = vpow.pop %v1436
    %v1438 = vmul.f32 %v1286, 1.442695
    %v1439 = vpow.pop %v1438
    %v1440 = vmul.f32 %v1287, 1.442695
    %v1441 = vpow.pop %v1440
    %v1442 = vmul.f32 %v1288, 1.442695
    %v1443 = vpow.pop %v1442
    %v1444 = vmul.f32 %v1289, 1.442695
    %v1445 = vpow.pop %v1444
    %v1446 = vmul.f32 %v1290, 1.442695
    %v1447 = vpow.pop %v1446
    %v1448 = vmul.f32 %v1291, 1.442695
    %v1449 = vpow.pop %v1448
    %v1450 = vmul.f32 %v1292, 1.442695
    %v1451 = vpow.pop %v1450
    %v1452 = vmul.f32 %v1293, 1.442695
    %v1453 = vpow.pop %v1452
    %v1454 = vmul.f32 %v1294, 1.442695
    %v1455 = vpow.pop %v1454
    %v1456 = vmul.f32 %v1295, 1.442695
    %v1457 = vpow.pop %v1456
    %v1458 = vmul.f32 %v1296, 1.442695
    %v1459 = vpow.pop %v1458
    %v1460 = vmul.f32 %v1297, 1.442695
    %v1461 = vpow.pop %v1460
    %v1462 = vmul.f32 %v1298, 1.442695
    %v1463 = vpow.pop %v1462
    %v1464 = vmul.f32 %v1299, 1.442695
    %v1465 = vpow.pop %v1464
    %v1466 = vmul.f32 %v1300, 1.442695
    %v1467 = vpow.pop %v1466
    %v1468 = vmul.f32 %v1301, 1.442695
    %v1469 = vpow.pop %v1468
    %v1470 = vmul.f32 %v1302, 1.442695
    %v1471 = vpow.pop %v1470
    %v1472 = vmul.f32 %v1303, 1.442695
    %v1473 = vpow.pop %v1472
    %v1474 = vmul.f32 %v1304, 1.442695
    %v1475 = vpow.pop %v1474
    %v1476 = vmul.f32 %v1305, 1.442695
    %v1477 = vpow.pop %v1476
    %v1478 = vmul.f32 %v1306, 1.442695
    %v1479 = vpow.pop %v1478
    %v1480 = vmul.f32 %v1307, 1.442695
    %v1481 = vpow.pop %v1480
    %v1482 = vmul.f32 %v1308, 1.442695
    %v1483 = vpow.pop %v1482
    %v1484 = vmul.f32 %v1309, 1.442695
    %v1485 = vpow.pop %v1484
    %v1486 = vmul.f32 %v1310, 1.442695
    %v1487 = vpow.pop %v1486
    %v1488 = vmul.f32 %v1311, 1.442695
    %v1489 = vpow.pop %v1488
    %v1490 = vmul.f32 %v1312, 1.442695
    %v1491 = vpow.pop %v1490
    %v1492 = vmul.f32 %v1313, 1.442695
    %v1493 = vpow.pop %v1492
    %v1494 = vmul.f32 %v1314, 1.442695
    %v1495 = vpow.pop %v1494
    %v1496 = vmul.f32 %v1315, 1.442695
    %v1497 = vpow.pop %v1496
    %v1498 = vmul.f32 %v1316, 1.442695
    %v1499 = vpow.pop %v1498
    %v1500 = vmul.f32 %v1317, 1.442695
    %v1501 = vpow.pop %v1500
    %v1502 = vmul.f32 %v1318, 1.442695
    %v1503 = vpow.pop %v1502
    %v1504 = vmul.f32 %v1319, 1.442695
    %v1505 = vpow.pop %v1504
    %v1506 = vmul.f32 %v1320, 1.442695
    %v1507 = vpow.pop %v1506
    %v1508 = vmul.f32 %v1321, 1.442695
    %v1509 = vpow.pop %v1508
    %v1510 = vmul.f32 %v1322, 1.442695
    %v1511 = vpow.pop %v1510
    %v1512 = vmul.f32 %v1323, 1.442695
    %v1513 = vpow.pop %v1512
    %v1514 = vmul.f32 %v1324, 1.442695
    %v1515 = vpow.pop %v1514
    %v1516 = vmul.f32 %v1325, 1.442695
    %v1517 = vpow.pop %v1516
    %v1518 = vmul.f32 %v1326, 1.442695
    %v1519 = vpow.pop %v1518
    %v1520 = vmul.f32 %v1327, 1.442695
    %v1521 = vpow.pop %v1520
    %v1522 = vmul.f32 %v1328, 1.442695
    %v1523 = vpow.pop %v1522
    %v1524 = vmul.f32 %v1329, 1.442695
    %v1525 = vpow.pop %v1524
    %v1526 = vmul.f32 %v1330, 1.442695
    %v1527 = vpow.pop %v1526
    %v1528 = vmul.f32 %v1331, 1.442695
    %v1529 = vpow.pop %v1528
    %v1530 = vmul.f32 %v1332, 1.442695
    %v1531 = vpow.pop %v1530
    %v1532 = vmul.f32 %v1333, 1.442695
    %v1533 = vpow.pop %v1532
    %v1534 = vmul.f32 %v1334, 1.442695
    %v1535 = vpow.pop %v1534
    %v1536 = vmul.f32 %v1335, 1.442695
    %v1537 = vpow.pop %v1536
    %v1538 = vmul.f32 %v1336, 1.442695
    %v1539 = vpow.pop %v1538
    %v1540 = vmul.f32 %v1337, 1.442695
    %v1541 = vpow.pop %v1540
    %v1542 = vmul.f32 %v1338, 1.442695
    %v1543 = vpow.pop %v1542
    %v1544 = vmul.f32 %v1339, 1.442695
    %v1545 = vpow.pop %v1544
    %v1546 = vmul.f32 %v1340, 1.442695
    %v1547 = vpow.pop %v1546
    %v1548 = vmul.f32 %v1341, 1.442695
    %v1549 = vpow.pop %v1548
    %v1550 = vmul.f32 %v1342, 1.442695
    %v1551 = vpow.pop %v1550
    %v1552 = vmul.f32 %v1343, 1.442695
    %v1553 = vpow.pop %v1552
    %v1554 = vmul.f32 %v1344, 1.442695
    %v1555 = vpow.pop %v1554
    %v1556 = vmul.f32 %v1345, 1.442695
    %v1557 = vpow.pop %v1556
    %v1558 = vmul.f32 %v1346, 1.442695
    %v1559 = vpow.pop %v1558
    %v1560 = vmul.f32 %v1347, 1.442695
    %v1561 = vpow.pop %v1560
    %v1562 = vmul.f32 %v1348, 1.442695
    %v1563 = vpow.pop %v1562
    %v1564 = vmul.f32 %v1349, 1.442695
    %v1565 = vpow.pop %v1564
    %v1566 = vmul.f32 %v1350, 1.442695
    %v1567 = vpow.pop %v1566
    %v1568 = vmul.f32 %v1351, 1.442695
    %v1569 = vpow.pop %v1568
    %v1570 = vmul.f32 %v1352, 1.442695
    %v1571 = vpow.pop %v1570
    %v1572 = vmul.f32 %v1353, 1.442695
    %v1573 = vpow.pop %v1572
    %v1574 = vmul.f32 %v1354, 1.442695
    %v1575 = vpow.pop %v1574
    %v1576 = vmul.f32 %v1355, 1.442695
    %v1577 = vpow.pop %v1576
    %v1578 = vmul.f32 %v1356, 1.442695
    %v1579 = vpow.pop %v1578
    %v1580 = vmul.f32 %v1357, 1.442695
    %v1581 = vpow.pop %v1580
    %v1582 = vmul.f32 %v1358, 1.442695
    %v1583 = vpow.pop %v1582
    %v1584 = vmul.f32 %v1359, 1.442695
    %v1585 = vpow.pop %v1584
    %v1586 = vmul.f32 %v1360, 1.442695
    %v1587 = vpow.pop %v1586
    %v1588 = vmul.f32 %v1361, 1.442695
    %v1589 = vpow.pop %v1588
    %v1590 = vmul.f32 %v1362, 1.442695
    %v1591 = vpow.pop %v1590
    %v1592 = vmul.f32 %v1363, 1.442695
    %v1593 = vpow.pop %v1592
    %v1594 = vmul.f32 %v1364, 1.442695
    %v1595 = vpow.pop %v1594
    %v1596 = vmul.f32 %v1365, 1.442695
    %v1597 = vpow.pop %v1596
    %v1598 = vmul.f32 %v1366, 1.442695
    %v1599 = vpow.pop %v1598
    %v1600 = vmul.f32 %v1367, 1.442695
    %v1601 = vpow.pop %v1600
    %v1602 = vmul.f32 %v1368, 1.442695
    %v1603 = vpow.pop %v1602
    %v1604 = vmul.f32 %v1369, 1.442695
    %v1605 = vpow.pop %v1604
    %v1606 = vmul.f32 %v1370, 1.442695
    %v1607 = vpow.pop %v1606
    %v1608 = vmul.f32 %v1371, 1.442695
    %v1609 = vpow.pop %v1608
    %v1610 = vmul.f32 %v1372, 1.442695
    %v1611 = vpow.pop %v1610
    %v1612 = vmul.f32 %v1373, 1.442695
    %v1613 = vpow.pop %v1612
    %v1614 = vmul.f32 %v1374, 1.442695
    %v1615 = vpow.pop %v1614
    %v1616 = vmul.f32 %v1375, 1.442695
    %v1617 = vpow.pop %v1616
    %v1618 = vmul.f32 %v1376, 1.442695
    %v1619 = vpow.pop %v1618
    %v1620 = vmul.f32 %v1377, 1.442695
    %v1621 = vpow.pop %v1620
    %v1622 = vmul.f32 %v1378, 1.442695
    %v1623 = vpow.pop %v1622
    %v1624 = vmul.f32 %v1379, 1.442695
    %v1625 = vpow.pop %v1624
    %v1626 = vmul.f32 %v1380, 1.442695
    %v1627 = vpow.pop %v1626
    %v1628 = vmul.f32 %v1381, 1.442695
    %v1629 = vpow.pop %v1628
    %v1630 = vmul.f32 %v1382, 1.442695
    %v1631 = vpow.pop %v1630
    %v1632 = vmul.f32 %v1383, 1.442695
    %v1633 = vpow.pop %v1632
    %v1634 = vmul.f32 %v1384, 1.442695
    %v1635 = vpow.pop %v1634
    %v1636 = vmul.f32 %v1385, 1.442695
    %v1637 = vpow.pop %v1636
    %v1638 = vmul.f32 %v1386, 1.442695
    %v1639 = vpow.pop %v1638
    %v1640 = vmul.f32 %v1387, 1.442695
    %v1641 = vpow.pop %v1640
    %v1642 = vmul.f32 %v1388, 1.442695
    %v1643 = vpow.pop %v1642
    %v1644 = vmul.f32 %v1389, 1.442695
    %v1645 = vpow.pop %v1644
    %v1646 = vld [vmem:[%s1] sm:$0xff]
    %v1647 = vld [vmem:[%s1 + $0x8] sm:$0xff]
    %v1648 = vld [vmem:[%s1 + $0x10] sm:$0xff]
    %v1649 = vld [vmem:[%s1 + $0x18] sm:$0xff]
    %v1650 = vld [vmem:[%s1 + $0x20] sm:$0xff]
    %v1651 = vld [vmem:[%s1 + $0x28] sm:$0xff]
    %v1652 = vld [vmem:[%s1 + $0x30] sm:$0xff]
    %v1653 = vld [vmem:[%s1 + $0x38] sm:$0xff]
    %v1654 = vld [vmem:[%s1 + $0x40] sm:$0xff]
    %v1655 = vld [vmem:[%s1 + $0x48] sm:$0xff]
    %v1656 = vld [vmem:[%s1 + $0x50] sm:$0xff]
    %v1657 = vld [vmem:[%s1 + $0x58] sm:$0xff]
    %v1658 = vld [vmem:[%s1 + $0x60] sm:$0xff]
    %v1659 = vld [vmem:[%s1 + $0x68] sm:$0xff]
    %v1660 = vld [vmem:[%s1 + $0x70] sm:$0xff]
    %v1661 = vld [vmem:[%s1 + $0x78] sm:$0xff]
    %v1662 = vld [vmem:[%s1 + $0x80] sm:$0xff]
    %v1663 = vld [vmem:[%s1 + $0x88] sm:$0xff]
    %v1664 = vld [vmem:[%s1 + $0x90] sm:$0xff]
    %v1665 = vld [vmem:[%s1 + $0x98] sm:$0xff]
    %v1666 = vld [vmem:[%s1 + $0xa0] sm:$0xff]
    %v1667 = vld [vmem:[%s1 + $0xa8] sm:$0xff]
    %v1668 = vld [vmem:[%s1 + $0xb0] sm:$0xff]
    %v1669 = vld [vmem:[%s1 + $0xb8] sm:$0xff]
    %v1670 = vld [vmem:[%s1 + $0xc0] sm:$0xff]
    %v1671 = vld [vmem:[%s1 + $0xc8] sm:$0xff]
    %v1672 = vld [vmem:[%s1 + $0xd0] sm:$0xff]
    %v1673 = vld [vmem:[%s1 + $0xd8] sm:$0xff]
    %v1674 = vld [vmem:[%s1 + $0xe0] sm:$0xff]
    %v1675 = vld [vmem:[%s1 + $0xe8] sm:$0xff]
    %v1676 = vld [vmem:[%s1 + $0xf0] sm:$0xff]
    %v1677 = vld [vmem:[%s1 + $0xf8] sm:$0xff]
    %v1678 = vld [vmem:[%s1 + $0x100] sm:$0xff]
    %v1679 = vld [vmem:[%s1 + $0x108] sm:$0xff]
    %v1680 = vld [vmem:[%s1 + $0x110] sm:$0xff]
    %v1681 = vld [vmem:[%s1 + $0x118] sm:$0xff]
    %v1682 = vld [vmem:[%s1 + $0x120] sm:$0xff]
    %v1683 = vld [vmem:[%s1 + $0x128] sm:$0xff]
    %v1684 = vld [vmem:[%s1 + $0x130] sm:$0xff]
    %v1685 = vld [vmem:[%s1 + $0x138] sm:$0xff]
    %v1686 = vld [vmem:[%s1 + $0x140] sm:$0xff]
    %v1687 = vld [vmem:[%s1 + $0x148] sm:$0xff]
    %v1688 = vld [vmem:[%s1 + $0x150] sm:$0xff]
    %v1689 = vld [vmem:[%s1 + $0x158] sm:$0xff]
    %v1690 = vld [vmem:[%s1 + $0x160] sm:$0xff]
    %v1691 = vld [vmem:[%s1 + $0x168] sm:$0xff]
    %v1692 = vld [vmem:[%s1 + $0x170] sm:$0xff]
    %v1693 = vld [vmem:[%s1 + $0x178] sm:$0xff]
    %v1694 = vld [vmem:[%s1 + $0x180] sm:$0xff]
    %v1695 = vld [vmem:[%s1 + $0x188] sm:$0xff]
    %v1696 = vld [vmem:[%s1 + $0x190] sm:$0xff]
    %v1697 = vld [vmem:[%s1 + $0x198] sm:$0xff]
    %v1698 = vld [vmem:[%s1 + $0x1a0] sm:$0xff]
    %v1699 = vld [vmem:[%s1 + $0x1a8] sm:$0xff]
    %v1700 = vld [vmem:[%s1 + $0x1b0] sm:$0xff]
    %v1701 = vld [vmem:[%s1 + $0x1b8] sm:$0xff]
    %v1702 = vld [vmem:[%s1 + $0x1c0] sm:$0xff]
    %v1703 = vld [vmem:[%s1 + $0x1c8] sm:$0xff]
    %v1704 = vld [vmem:[%s1 + $0x1d0] sm:$0xff]
    %v1705 = vld [vmem:[%s1 + $0x1d8] sm:$0xff]
    %v1706 = vld [vmem:[%s1 + $0x1e0] sm:$0xff]
    %v1707 = vld [vmem:[%s1 + $0x1e8] sm:$0xff]
    %v1708 = vld [vmem:[%s1 + $0x1f0] sm:$0xff]
    %v1709 = vld [vmem:[%s1 + $0x1f8] sm:$0xff]
    %v1710 = vld [vmem:[%s1 + $0x200] sm:$0xff]
    %v1711 = vld [vmem:[%s1 + $0x208] sm:$0xff]
    %v1712 = vld [vmem:[%s1 + $0x210] sm:$0xff]
    %v1713 = vld [vmem:[%s1 + $0x218] sm:$0xff]
    %v1714 = vld [vmem:[%s1 + $0x220] sm:$0xff]
    %v1715 = vld [vmem:[%s1 + $0x228] sm:$0xff]
    %v1716 = vld [vmem:[%s1 + $0x230] sm:$0xff]
    %v1717 = vld [vmem:[%s1 + $0x238] sm:$0xff]
    %v1718 = vld [vmem:[%s1 + $0x240] sm:$0xff]
    %v1719 = vld [vmem:[%s1 + $0x248] sm:$0xff]
    %v1720 = vld [vmem:[%s1 + $0x250] sm:$0xff]
    %v1721 = vld [vmem:[%s1 + $0x258] sm:$0xff]
    %v1722 = vld [vmem:[%s1 + $0x260] sm:$0xff]
    %v1723 = vld [vmem:[%s1 + $0x268] sm:$0xff]
    %v1724 = vld [vmem:[%s1 + $0x270] sm:$0xff]
    %v1725 = vld [vmem:[%s1 + $0x278] sm:$0xff]
    %v1726 = vld [vmem:[%s1 + $0x280] sm:$0xff]
    %v1727 = vld [vmem:[%s1 + $0x288] sm:$0xff]
    %v1728 = vld [vmem:[%s1 + $0x290] sm:$0xff]
    %v1729 = vld [vmem:[%s1 + $0x298] sm:$0xff]
    %v1730 = vld [vmem:[%s1 + $0x2a0] sm:$0xff]
    %v1731 = vld [vmem:[%s1 + $0x2a8] sm:$0xff]
    %v1732 = vld [vmem:[%s1 + $0x2b0] sm:$0xff]
    %v1733 = vld [vmem:[%s1 + $0x2b8] sm:$0xff]
    %v1734 = vld [vmem:[%s1 + $0x2c0] sm:$0xff]
    %v1735 = vld [vmem:[%s1 + $0x2c8] sm:$0xff]
    %v1736 = vld [vmem:[%s1 + $0x2d0] sm:$0xff]
    %v1737 = vld [vmem:[%s1 + $0x2d8] sm:$0xff]
    %v1738 = vld [vmem:[%s1 + $0x2e0] sm:$0xff]
    %v1739 = vld [vmem:[%s1 + $0x2e8] sm:$0xff]
    %v1740 = vld [vmem:[%s1 + $0x2f0] sm:$0xff]
    %v1741 = vld [vmem:[%s1 + $0x2f8] sm:$0xff]
    %v1742 = vld [vmem:[%s1 + $0x300] sm:$0xff]
    %v1743 = vld [vmem:[%s1 + $0x308] sm:$0xff]
    %v1744 = vld [vmem:[%s1 + $0x310] sm:$0xff]
    %v1745 = vld [vmem:[%s1 + $0x318] sm:$0xff]
    %v1746 = vld [vmem:[%s1 + $0x320] sm:$0xff]
    %v1747 = vld [vmem:[%s1 + $0x328] sm:$0xff]
    %v1748 = vld [vmem:[%s1 + $0x330] sm:$0xff]
    %v1749 = vld [vmem:[%s1 + $0x338] sm:$0xff]
    %v1750 = vld [vmem:[%s1 + $0x340] sm:$0xff]
    %v1751 = vld [vmem:[%s1 + $0x348] sm:$0xff]
    %v1752 = vld [vmem:[%s1 + $0x350] sm:$0xff]
    %v1753 = vld [vmem:[%s1 + $0x358] sm:$0xff]
    %v1754 = vld [vmem:[%s1 + $0x360] sm:$0xff]
    %v1755 = vld [vmem:[%s1 + $0x368] sm:$0xff]
    %v1756 = vld [vmem:[%s1 + $0x370] sm:$0xff]
    %v1757 = vld [vmem:[%s1 + $0x378] sm:$0xff]
    %v1758 = vld [vmem:[%s1 + $0x380] sm:$0xff]
    %v1759 = vld [vmem:[%s1 + $0x388] sm:$0xff]
    %v1760 = vld [vmem:[%s1 + $0x390] sm:$0xff]
    %v1761 = vld [vmem:[%s1 + $0x398] sm:$0xff]
    %v1762 = vld [vmem:[%s1 + $0x3a0] sm:$0xff]
    %v1763 = vld [vmem:[%s1 + $0x3a8] sm:$0xff]
    %v1764 = vld [vmem:[%s1 + $0x3b0] sm:$0xff]
    %v1765 = vld [vmem:[%s1 + $0x3b8] sm:$0xff]
    %v1766 = vld [vmem:[%s1 + $0x3c0] sm:$0xff]
    %v1767 = vld [vmem:[%s1 + $0x3c8] sm:$0xff]
    %v1768 = vld [vmem:[%s1 + $0x3d0] sm:$0xff]
    %v1769 = vld [vmem:[%s1 + $0x3d8] sm:$0xff]
    %v1770 = vld [vmem:[%s1 + $0x3e0] sm:$0xff]
    %v1771 = vld [vmem:[%s1 + $0x3e8] sm:$0xff]
    %v1772 = vld [vmem:[%s1 + $0x3f0] sm:$0xff]
    %v1773 = vld [vmem:[%s1 + $0x3f8] sm:$0xff]
    %v1774 = vmul.f32 %v1646, %v1646
    %v1775 = vmul.f32 %v1647, %v1647
    %v1776 = vmul.f32 %v1648, %v1648
    %v1777 = vmul.f32 %v1649, %v1649
    %v1778 = vmul.f32 %v1650, %v1650
    %v1779 = vmul.f32 %v1651, %v1651
    %v1780 = vmul.f32 %v1652, %v1652
    %v1781 = vmul.f32 %v1653, %v1653
    %v1782 = vmul.f32 %v1654, %v1654
    %v1783 = vmul.f32 %v1655, %v1655
    %v1784 = vmul.f32 %v1656, %v1656
    %v1785 = vmul.f32 %v1657, %v1657
    %v1786 = vmul.f32 %v1658, %v1658
    %v1787 = vmul.f32 %v1659, %v1659
    %v1788 = vmul.f32 %v1660, %v1660
    %v1789 = vmul.f32 %v1661, %v1661
    %v1790 = vmul.f32 %v1662, %v1662
    %v1791 = vmul.f32 %v1663, %v1663
    %v1792 = vmul.f32 %v1664, %v1664
    %v1793 = vmul.f32 %v1665, %v1665
    %v1794 = vmul.f32 %v1666, %v1666
    %v1795 = vmul.f32 %v1667, %v1667
    %v1796 = vmul.f32 %v1668, %v1668
    %v1797 = vmul.f32 %v1669, %v1669
    %v1798 = vmul.f32 %v1670, %v1670
    %v1799 = vmul.f32 %v1671, %v1671
    %v1800 = vmul.f32 %v1672, %v1672
    %v1801 = vmul.f32 %v1673, %v1673
    %v1802 = vmul.f32 %v1674, %v1674
    %v1803 = vmul.f32 %v1675, %v1675
    %v1804 = vmul.f32 %v1676, %v1676
    %v1805 = vmul.f32 %v1677, %v1677
    %v1806 = vmul.f32 %v1678, %v1678
    %v1807 = vmul.f32 %v1679, %v1679
    %v1808 = vmul.f32 %v1680, %v1680
    %v1809 = vmul.f32 %v1681, %v1681
    %v1810 = vmul.f32 %v1682, %v1682
    %v1811 = vmul.f32 %v1683, %v1683
    %v1812 = vmul.f32 %v1684, %v1684
    %v1813 = vmul.f32 %v1685, %v1685
    %v1814 = vmul.f32 %v1686, %v1686
    %v1815 = vmul.f32 %v1687, %v1687
    %v1816 = vmul.f32 %v1688, %v1688
    %v1817 = vmul.f32 %v1689, %v1689
    %v1818 = vmul.f32 %v1690, %v1690
    %v1819 = vmul.f32 %v1691, %v1691
    %v1820 = vmul.f32 %v1692, %v1692
    %v1821 = vmul.f32 %v1693, %v1693
    %v1822 = vmul.f32 %v1694, %v1694
    %v1823 = vmul.f32 %v1695, %v1695
    %v1824 = vmul.f32 %v1696, %v1696
    %v1825 = vmul.f32 %v1697, %v1697
    %v1826 = vmul.f32 %v1698, %v1698
    %v1827 = vmul.f32 %v1699, %v1699
    %v1828 = vmul.f32 %v1700, %v1700
    %v1829 = vmul.f32 %v1701, %v1701
    %v1830 = vmul.f32 %v1702, %v1702
    %v1831 = vmul.f32 %v1703, %v1703
    %v1832 = vmul.f32 %v1704, %v1704
    %v1833 = vmul.f32 %v1705, %v1705
    %v1834 = vmul.f32 %v1706, %v1706
    %v1835 = vmul.f32 %v1707, %v1707
    %v1836 = vmul.f32 %v1708, %v1708
    %v1837 = vmul.f32 %v1709, %v1709
    %v1838 = vmul.f32 %v1710, %v1710
    %v1839 = vmul.f32 %v1711, %v1711
    %v1840 = vmul.f32 %v1712, %v1712
    %v1841 = vmul.f32 %v1713, %v1713
    %v1842 = vmul.f32 %v1714, %v1714
    %v1843 = vmul.f32 %v1715, %v1715
    %v1844 = vmul.f32 %v1716, %v1716
    %v1845 = vmul.f32 %v1717, %v1717
    %v1846 = vmul.f32 %v1718, %v1718
    %v1847 = vmul.f32 %v1719, %v1719
    %v1848 = vmul.f32 %v1720, %v1720
    %v1849 = vmul.f32 %v1721, %v1721
    %v1850 = vmul.f32 %v1722, %v1722
    %v1851 = vmul.f32 %v1723, %v1723
    %v1852 = vmul.f32 %v1724, %v1724
    %v1853 = vmul.f32 %v1725, %v1725
    %v1854 = vmul.f32 %v1726, %v1726
    %v1855 = vmul.f32 %v1727, %v1727
    %v1856 = vmul.f32 %v1728, %v1728
    %v1857 = vmul.f32 %v1729, %v1729
    %v1858 = vmul.f32 %v1730, %v1730
    %v1859 = vmul.f32 %v1731, %v1731
    %v1860 = vmul.f32 %v1732, %v1732
    %v1861 = vmul.f32 %v1733, %v1733
    %v1862 = vmul.f32 %v1734, %v1734
    %v1863 = vmul.f32 %v1735, %v1735
    %v1864 = vmul.f32 %v1736, %v1736
    %v1865 = vmul.f32 %v1737, %v1737
    %v1866 = vmul.f32 %v1738, %v1738
    %v1867 = vmul.f32 %v1739, %v1739
    %v1868 = vmul.f32 %v1740, %v1740
    %v1869 = vmul.f32 %v1741, %v1741
    %v1870 = vmul.f32 %v1742, %v1742
    %v1871 = vmul.f32 %v1743, %v1743
    %v1872 = vmul.f32 %v1744, %v1744
    %v1873 = vmul.f32 %v1745, %v1745
    %v1874 = vmul.f32 %v1746, %v1746
    %v1875 = vmul.f32 %v1747, %v1747
    %v1876 = vmul.f32 %v1748, %v1748
    %v1877 = vmul.f32 %v1749, %v1749
    %v1878 = vmul.f32 %v1750, %v1750
    %v1879 = vmul.f32 %v1751, %v1751
    %v1880 = vmul.f32 %v1752, %v1752
    %v1881 = vmul.f32 %v1753, %v1753
    %v1882 = vmul.f32 %v1754, %v1754
    %v1883 = vmul.f32 %v1755, %v1755
    %v1884 = vmul.f32 %v1756, %v1756
    %v1885 = vmul.f32 %v1757, %v1757
    %v1886 = vmul.f32 %v1758, %v1758
    %v1887 = vmul.f32 %v1759, %v1759
    %v1888 = vmul.f32 %v1760, %v1760
    %v1889 = vmul.f32 %v1761, %v1761
    %v1890 = vmul.f32 %v1762, %v1762
    %v1891 = vmul.f32 %v1763, %v1763
    %v1892 = vmul.f32 %v1764, %v1764
    %v1893 = vmul.f32 %v1765, %v1765
    %v1894 = vmul.f32 %v1766, %v1766
    %v1895 = vmul.f32 %v1767, %v1767
    %v1896 = vmul.f32 %v1768, %v1768
    %v1897 = vmul.f32 %v1769, %v1769
    %v1898 = vmul.f32 %v1770, %v1770
    %v1899 = vmul.f32 %v1771, %v1771
    %v1900 = vmul.f32 %v1772, %v1772
    %v1901 = vmul.f32 %v1773, %v1773
    %v1902 = vmul.f32 %v1006, %v1391
    %v1903 = vmul.f32 %v1008, %v1393
    %v1904 = vmul.f32 %v1010, %v1395
    %v1905 = vmul.f32 %v1012, %v1397
    %v1906 = vmul.f32 %v1014, %v1399
    %v1907 = vmul.f32 %v1016, %v1401
    %v1908 = vmul.f32 %v1018, %v1403
    %v1909 = vmul.f32 %v1020, %v1405
    %v1910 = vmul.f32 %v1022, %v1407
    %v1911 = vmul.f32 %v1024, %v1409
    %v1912 = vmul.f32 %v1026, %v1411
    %v1913 = vmul.f32 %v1028, %v1413
    %v1914 = vmul.f32 %v1030, %v1415
    %v1915 = vmul.f32 %v1032, %v1417
    %v1916 = vmul.f32 %v1034, %v1419
    %v1917 = vmul.f32 %v1036, %v1421
    %v1918 = vmul.f32 %v1038, %v1423
    %v1919 = vmul.f32 %v1040, %v1425
    %v1920 = vmul.f32 %v1042, %v1427
    %v1921 = vmul.f32 %v1044, %v1429
    %v1922 = vmul.f32 %v1046, %v1431
    %v1923 = vmul.f32 %v1048, %v1433
    %v1924 = vmul.f32 %v1050, %v1435
    %v1925 = vmul.f32 %v1052, %v1437
    %v1926 = vmul.f32 %v1054, %v1439
    %v1927 = vmul.f32 %v1056, %v1441
    %v1928 = vmul.f32 %v1058, %v1443
    %v1929 = vmul.f32 %v1060, %v1445
    %v1930 = vmul.f32 %v1062, %v1447
    %v1931 = vmul.f32 %v1064, %v1449
    %v1932 = vmul.f32 %v1066, %v1451
    %v1933 = vmul.f32 %v1068, %v1453
    %v1934 = vmul.f32 %v1070, %v1455
    %v1935 = vmul.f32 %v1072, %v1457
    %v1936 = vmul.f32 %v1074, %v1459
    %v1937 = vmul.f32 %v1076, %v1461
    %v1938 = vmul.f32 %v1078, %v1463
    %v1939 = vmul.f32 %v1080, %v1465
    %v1940 = vmul.f32 %v1082, %v1467
    %v1941 = vmul.f32 %v1084, %v1469
    %v1942 = vmul.f32 %v1086, %v1471
    %v1943 = vmul.f32 %v1088, %v1473
    %v1944 = vmul.f32 %v1090, %v1475
    %v1945 = vmul.f32 %v1092, %v1477
    %v1946 = vmul.f32 %v1094, %v1479
    %v1947 = vmul.f32 %v1096, %v1481
    %v1948 = vmul.f32 %v1098, %v1483
    %v1949 = vmul.f32 %v1100, %v1485
    %v1950 = vmul.f32 %v1102, %v1487
    %v1951 = vmul.f32 %v1104, %v1489
    %v1952 = vmul.f32 %v1106, %v1491
    %v1953 = vmul.f32 %v1108, %v1493
    %v1954 = vmul.f32 %v1110, %v1495
    %v1955 = vmul.f32 %v1112, %v1497
    %v1956 = vmul.f32 %v1114, %v1499
    %v1957 = vmul.f32 %v1116, %v1501
    %v1958 = vmul.f32 %v1118, %v1503
    %v1959 = vmul.f32 %v1120, %v1505
    %v1960 = vmul.f32 %v1122, %v1507
    %v1961 = vmul.f32 %v1124, %v1509
    %v1962 = vmul.f32 %v1126, %v1511
    %v1963 = vmul.f32 %v1128, %v1513
    %v1964 = vmul.f32 %v1130, %v1515
    %v1965 = vmul.f32 %v1132, %v1517
    %v1966 = vmul.f32 %v1134, %v1519
    %v1967 = vmul.f32 %v1136, %v1521
    %v1968 = vmul.f32 %v1138, %v1523
    %v1969 = vmul.f32 %v1140, %v1525
    %v1970 = vmul.f32 %v1142, %v1527
    %v1971 = vmul.f32 %v1144, %v1529
    %v1972 = vmul.f32 %v1146, %v1531
    %v1973 = vmul.f32 %v1148, %v1533
    %v1974 = vmul.f32 %v1150, %v1535
    %v1975 = vmul.f32 %v1152, %v1537
    %v1976 = vmul.f32 %v1154, %v1539
    %v1977 = vmul.f32 %v1156, %v1541
    %v1978 = vmul.f32 %v1158, %v1543
    %v1979 = vmul.f32 %v1160, %v1545
    %v1980 = vmul.f32 %v1162, %v1547
    %v1981 = vmul.f32 %v1164, %v1549
    %v1982 = vmul.f32 %v1166, %v1551
    %v1983 = vmul.f32 %v1168, %v1553
    %v1984 = vmul.f32 %v1170, %v1555
    %v1985 = vmul.f32 %v1172, %v1557
    %v1986 = vmul.f32 %v1174, %v1559
    %v1987 = vmul.f32 %v1176, %v1561
    %v1988 = vmul.f32 %v1178, %v1563
    %v1989 = vmul.f32 %v1180, %v1565
    %v1990 = vmul.f32 %v1182, %v1567
    %v1991 = vmul.f32 %v1184, %v1569
    %v1992 = vmul.f32 %v1186, %v1571
    %v1993 = vmul.f32 %v1188, %v1573
    %v1994 = vmul.f32 %v1190, %v1575
    %v1995 = vmul.f32 %v1192, %v1577
    %v1996 = vmul.f32 %v1194, %v1579
    %v1997 = vmul.f32 %v1196, %v1581
    %v1998 = vmul.f32 %v1198, %v1583
    %v1999 = vmul.f32 %v1200, %v1585
    %v2000 = vmul.f32 %v1202, %v1587
    %v2001 = vmul.f32 %v1204, %v1589
    %v2002 = vmul.f32 %v1206, %v1591
    %v2003 = vmul.f32 %v1208, %v1593
    %v2004 = vmul.f32 %v1210, %v1595
    %v2005 = vmul.f32 %v1212, %v1597
    %v2006 = vmul.f32 %v1214, %v1599
    %v2007 = vmul.f32 %v1216, %v1601
    %v2008 = vmul.f32 %v1218, %v1603
    %v2009 = vmul.f32 %v1220, %v1605
    %v2010 = vmul.f32 %v1222, %v1607
    %v2011 = vmul.f32 %v1224, %v1609
    %v2012 = vmul.f32 %v1226, %v1611
    %v2013 = vmul.f32 %v1228, %v1613
    %v2014 = vmul.f32 %v1230, %v1615
    %v2015 = vmul.f32 %v1232, %v1617
    %v2016 = vmul.f32 %v1234, %v1619
    %v2017 = vmul.f32 %v1236, %v1621
    %v2018 = vmul.f32 %v1238, %v1623
    %v2019 = vmul.f32 %v1240, %v1625
    %v2020 = vmul.f32 %v1242, %v1627
    %v2021 = vmul.f32 %v1244, %v1629
    %v2022 = vmul.f32 %v1246, %v1631
    %v2023 = vmul.f32 %v1248, %v1633
    %v2024 = vmul.f32 %v1250, %v1635
    %v2025 = vmul.f32 %v1252, %v1637
    %v2026 = vmul.f32 %v1254, %v1639
    %v2027 = vmul.f32 %v1256, %v1641
    %v2028 = vmul.f32 %v1258, %v1643
    %v2029 = vmul.f32 %v1260, %v1645
    %2031 = vset.pattern.permute.xlu0 0
    %2032 = vperm.xlu0 %2031, %v1646
    %v2033 = vpop.permute.xlu0 %2032
    %2036 = vset.pattern.permute.xlu0 0
    %2037 = vperm.xlu0 %2036, %v1647
    %v2038 = vpop.permute.xlu0 %2037
    %2041 = vset.pattern.permute.xlu0 0
    %2042 = vperm.xlu0 %2041, %v1648
    %v2043 = vpop.permute.xlu0 %2042
    %2046 = vset.pattern.permute.xlu0 0
    %2047 = vperm.xlu0 %2046, %v1649
    %v2048 = vpop.permute.xlu0 %2047
    %2051 = vset.pattern.permute.xlu0 0
    %2052 = vperm.xlu0 %2051, %v1650
    %v2053 = vpop.permute.xlu0 %2052
    %2056 = vset.pattern.permute.xlu0 0
    %2057 = vperm.xlu0 %2056, %v1651
    %v2058 = vpop.permute.xlu0 %2057
    %2061 = vset.pattern.permute.xlu0 0
    %2062 = vperm.xlu0 %2061, %v1652
    %v2063 = vpop.permute.xlu0 %2062
    %2066 = vset.pattern.permute.xlu0 0
    %2067 = vperm.xlu0 %2066, %v1653
    %v2068 = vpop.permute.xlu0 %2067
    %2071 = vset.pattern.permute.xlu0 0
    %2072 = vperm.xlu0 %2071, %v1654
    %v2073 = vpop.permute.xlu0 %2072
    %2076 = vset.pattern.permute.xlu0 0
    %2077 = vperm.xlu0 %2076, %v1655
    %v2078 = vpop.permute.xlu0 %2077
    %2081 = vset.pattern.permute.xlu0 0
    %2082 = vperm.xlu0 %2081, %v1656
    %v2083 = vpop.permute.xlu0 %2082
    %2086 = vset.pattern.permute.xlu0 0
    %2087 = vperm.xlu0 %2086, %v1657
    %v2088 = vpop.permute.xlu0 %2087
    %2091 = vset.pattern.permute.xlu0 0
    %2092 = vperm.xlu0 %2091, %v1658
    %v2093 = vpop.permute.xlu0 %2092
    %2096 = vset.pattern.permute.xlu0 0
    %2097 = vperm.xlu0 %2096, %v1659
    %v2098 = vpop.permute.xlu0 %2097
    %2101 = vset.pattern.permute.xlu0 0
    %2102 = vperm.xlu0 %2101, %v1660
    %v2103 = vpop.permute.xlu0 %2102
    %2106 = vset.pattern.permute.xlu0 0
    %2107 = vperm.xlu0 %2106, %v1661
    %v2108 = vpop.permute.xlu0 %2107
    %2111 = vset.pattern.permute.xlu0 0
    %2112 = vperm.xlu0 %2111, %v1662
    %v2113 = vpop.permute.xlu0 %2112
    %2116 = vset.pattern.permute.xlu0 0
    %2117 = vperm.xlu0 %2116, %v1663
    %v2118 = vpop.permute.xlu0 %2117
    %2121 = vset.pattern.permute.xlu0 0
    %2122 = vperm.xlu0 %2121, %v1664
    %v2123 = vpop.permute.xlu0 %2122
    %2126 = vset.pattern.permute.xlu0 0
    %2127 = vperm.xlu0 %2126, %v1665
    %v2128 = vpop.permute.xlu0 %2127
    %2131 = vset.pattern.permute.xlu0 0
    %2132 = vperm.xlu0 %2131, %v1666
    %v2133 = vpop.permute.xlu0 %2132
    %2136 = vset.pattern.permute.xlu0 0
    %2137 = vperm.xlu0 %2136, %v1667
    %v2138 = vpop.permute.xlu0 %2137
    %2141 = vset.pattern.permute.xlu0 0
    %2142 = vperm.xlu0 %2141, %v1668
    %v2143 = vpop.permute.xlu0 %2142
    %2146 = vset.pattern.permute.xlu0 0
    %2147 = vperm.xlu0 %2146, %v1669
    %v2148 = vpop.permute.xlu0 %2147
    %2151 = vset.pattern.permute.xlu0 0
    %2152 = vperm.xlu0 %2151, %v1670
    %v2153 = vpop.permute.xlu0 %2152
    %2156 = vset.pattern.permute.xlu0 0
    %2157 = vperm.xlu0 %2156, %v1671
    %v2158 = vpop.permute.xlu0 %2157
    %2161 = vset.pattern.permute.xlu0 0
    %2162 = vperm.xlu0 %2161, %v1672
    %v2163 = vpop.permute.xlu0 %2162
    %2166 = vset.pattern.permute.xlu0 0
    %2167 = vperm.xlu0 %2166, %v1673
    %v2168 = vpop.permute.xlu0 %2167
    %2171 = vset.pattern.permute.xlu0 0
    %2172 = vperm.xlu0 %2171, %v1674
    %v2173 = vpop.permute.xlu0 %2172
    %2176 = vset.pattern.permute.xlu0 0
    %2177 = vperm.xlu0 %2176, %v1675
    %v2178 = vpop.permute.xlu0 %2177
    %2181 = vset.pattern.permute.xlu0 0
    %2182 = vperm.xlu0 %2181, %v1676
    %v2183 = vpop.permute.xlu0 %2182
    %2186 = vset.pattern.permute.xlu0 0
    %2187 = vperm.xlu0 %2186, %v1677
    %v2188 = vpop.permute.xlu0 %2187
    %2191 = vset.pattern.permute.xlu0 0
    %2192 = vperm.xlu0 %2191, %v1678
    %v2193 = vpop.permute.xlu0 %2192
    %2196 = vset.pattern.permute.xlu0 0
    %2197 = vperm.xlu0 %2196, %v1679
    %v2198 = vpop.permute.xlu0 %2197
    %2201 = vset.pattern.permute.xlu0 0
    %2202 = vperm.xlu0 %2201, %v1680
    %v2203 = vpop.permute.xlu0 %2202
    %2206 = vset.pattern.permute.xlu0 0
    %2207 = vperm.xlu0 %2206, %v1681
    %v2208 = vpop.permute.xlu0 %2207
    %2211 = vset.pattern.permute.xlu0 0
    %2212 = vperm.xlu0 %2211, %v1682
    %v2213 = vpop.permute.xlu0 %2212
    %2216 = vset.pattern.permute.xlu0 0
    %2217 = vperm.xlu0 %2216, %v1683
    %v2218 = vpop.permute.xlu0 %2217
    %2221 = vset.pattern.permute.xlu0 0
    %2222 = vperm.xlu0 %2221, %v1684
    %v2223 = vpop.permute.xlu0 %2222
    %2226 = vset.pattern.permute.xlu0 0
    %2227 = vperm.xlu0 %2226, %v1685
    %v2228 = vpop.permute.xlu0 %2227
    %2231 = vset.pattern.permute.xlu0 0
    %2232 = vperm.xlu0 %2231, %v1686
    %v2233 = vpop.permute.xlu0 %2232
    %2236 = vset.pattern.permute.xlu0 0
    %2237 = vperm.xlu0 %2236, %v1687
    %v2238 = vpop.permute.xlu0 %2237
    %2241 = vset.pattern.permute.xlu0 0
    %2242 = vperm.xlu0 %2241, %v1688
    %v2243 = vpop.permute.xlu0 %2242
    %2246 = vset.pattern.permute.xlu0 0
    %2247 = vperm.xlu0 %2246, %v1689
    %v2248 = vpop.permute.xlu0 %2247
    %2251 = vset.pattern.permute.xlu0 0
    %2252 = vperm.xlu0 %2251, %v1690
    %v2253 = vpop.permute.xlu0 %2252
    %2256 = vset.pattern.permute.xlu0 0
    %2257 = vperm.xlu0 %2256, %v1691
    %v2258 = vpop.permute.xlu0 %2257
    %2261 = vset.pattern.permute.xlu0 0
    %2262 = vperm.xlu0 %2261, %v1692
    %v2263 = vpop.permute.xlu0 %2262
    %2266 = vset.pattern.permute.xlu0 0
    %2267 = vperm.xlu0 %2266, %v1693
    %v2268 = vpop.permute.xlu0 %2267
    %2271 = vset.pattern.permute.xlu0 0
    %2272 = vperm.xlu0 %2271, %v1694
    %v2273 = vpop.permute.xlu0 %2272
    %2276 = vset.pattern.permute.xlu0 0
    %2277 = vperm.xlu0 %2276, %v1695
    %v2278 = vpop.permute.xlu0 %2277
    %2281 = vset.pattern.permute.xlu0 0
    %2282 = vperm.xlu0 %2281, %v1696
    %v2283 = vpop.permute.xlu0 %2282
    %2286 = vset.pattern.permute.xlu0 0
    %2287 = vperm.xlu0 %2286, %v1697
    %v2288 = vpop.permute.xlu0 %2287
    %2291 = vset.pattern.permute.xlu0 0
    %2292 = vperm.xlu0 %2291, %v1698
    %v2293 = vpop.permute.xlu0 %2292
    %2296 = vset.pattern.permute.xlu0 0
    %2297 = vperm.xlu0 %2296, %v1699
    %v2298 = vpop.permute.xlu0 %2297
    %2301 = vset.pattern.permute.xlu0 0
    %2302 = vperm.xlu0 %2301, %v1700
    %v2303 = vpop.permute.xlu0 %2302
    %2306 = vset.pattern.permute.xlu0 0
    %2307 = vperm.xlu0 %2306, %v1701
    %v2308 = vpop.permute.xlu0 %2307
    %2311 = vset.pattern.permute.xlu0 0
    %2312 = vperm.xlu0 %2311, %v1702
    %v2313 = vpop.permute.xlu0 %2312
    %2316 = vset.pattern.permute.xlu0 0
    %2317 = vperm.xlu0 %2316, %v1703
    %v2318 = vpop.permute.xlu0 %2317
    %2321 = vset.pattern.permute.xlu0 0
    %2322 = vperm.xlu0 %2321, %v1704
    %v2323 = vpop.permute.xlu0 %2322
    %2326 = vset.pattern.permute.xlu0 0
    %2327 = vperm.xlu0 %2326, %v1705
    %v2328 = vpop.permute.xlu0 %2327
    %2331 = vset.pattern.permute.xlu0 0
    %2332 = vperm.xlu0 %2331, %v1706
    %v2333 = vpop.permute.xlu0 %2332
    %2336 = vset.pattern.permute.xlu0 0
    %2337 = vperm.xlu0 %2336, %v1707
    %v2338 = vpop.permute.xlu0 %2337
    %2341 = vset.pattern.permute.xlu0 0
    %2342 = vperm.xlu0 %2341, %v1708
    %v2343 = vpop.permute.xlu0 %2342
    %2346 = vset.pattern.permute.xlu0 0
    %2347 = vperm.xlu0 %2346, %v1709
    %v2348 = vpop.permute.xlu0 %2347
    %2351 = vset.pattern.permute.xlu0 0
    %2352 = vperm.xlu0 %2351, %v1710
    %v2353 = vpop.permute.xlu0 %2352
    %2356 = vset.pattern.permute.xlu0 0
    %2357 = vperm.xlu0 %2356, %v1711
    %v2358 = vpop.permute.xlu0 %2357
    %2361 = vset.pattern.permute.xlu0 0
    %2362 = vperm.xlu0 %2361, %v1712
    %v2363 = vpop.permute.xlu0 %2362
    %2366 = vset.pattern.permute.xlu0 0
    %2367 = vperm.xlu0 %2366, %v1713
    %v2368 = vpop.permute.xlu0 %2367
    %2371 = vset.pattern.permute.xlu0 0
    %2372 = vperm.xlu0 %2371, %v1714
    %v2373 = vpop.permute.xlu0 %2372
    %2376 = vset.pattern.permute.xlu0 0
    %2377 = vperm.xlu0 %2376, %v1715
    %v2378 = vpop.permute.xlu0 %2377
    %2381 = vset.pattern.permute.xlu0 0
    %2382 = vperm.xlu0 %2381, %v1716
    %v2383 = vpop.permute.xlu0 %2382
    %2386 = vset.pattern.permute.xlu0 0
    %2387 = vperm.xlu0 %2386, %v1717
    %v2388 = vpop.permute.xlu0 %2387
    %2391 = vset.pattern.permute.xlu0 0
    %2392 = vperm.xlu0 %2391, %v1718
    %v2393 = vpop.permute.xlu0 %2392
    %2396 = vset.pattern.permute.xlu0 0
    %2397 = vperm.xlu0 %2396, %v1719
    %v2398 = vpop.permute.xlu0 %2397
    %2401 = vset.pattern.permute.xlu0 0
    %2402 = vperm.xlu0 %2401, %v1720
    %v2403 = vpop.permute.xlu0 %2402
    %2406 = vset.pattern.permute.xlu0 0
    %2407 = vperm.xlu0 %2406, %v1721
    %v2408 = vpop.permute.xlu0 %2407
    %2411 = vset.pattern.permute.xlu0 0
    %2412 = vperm.xlu0 %2411, %v1722
    %v2413 = vpop.permute.xlu0 %2412
    %2416 = vset.pattern.permute.xlu0 0
    %2417 = vperm.xlu0 %2416, %v1723
    %v2418 = vpop.permute.xlu0 %2417
    %2421 = vset.pattern.permute.xlu0 0
    %2422 = vperm.xlu0 %2421, %v1724
    %v2423 = vpop.permute.xlu0 %2422
    %2426 = vset.pattern.permute.xlu0 0
    %2427 = vperm.xlu0 %2426, %v1725
    %v2428 = vpop.permute.xlu0 %2427
    %2431 = vset.pattern.permute.xlu0 0
    %2432 = vperm.xlu0 %2431, %v1726
    %v2433 = vpop.permute.xlu0 %2432
    %2436 = vset.pattern.permute.xlu0 0
    %2437 = vperm.xlu0 %2436, %v1727
    %v2438 = vpop.permute.xlu0 %2437
    %2441 = vset.pattern.permute.xlu0 0
    %2442 = vperm.xlu0 %2441, %v1728
    %v2443 = vpop.permute.xlu0 %2442
    %2446 = vset.pattern.permute.xlu0 0
    %2447 = vperm.xlu0 %2446, %v1729
    %v2448 = vpop.permute.xlu0 %2447
    %2451 = vset.pattern.permute.xlu0 0
    %2452 = vperm.xlu0 %2451, %v1730
    %v2453 = vpop.permute.xlu0 %2452
    %2456 = vset.pattern.permute.xlu0 0
    %2457 = vperm.xlu0 %2456, %v1731
    %v2458 = vpop.permute.xlu0 %2457
    %2461 = vset.pattern.permute.xlu0 0
    %2462 = vperm.xlu0 %2461, %v1732
    %v2463 = vpop.permute.xlu0 %2462
    %2466 = vset.pattern.permute.xlu0 0
    %2467 = vperm.xlu0 %2466, %v1733
    %v2468 = vpop.permute.xlu0 %2467
    %2471 = vset.pattern.permute.xlu0 0
    %2472 = vperm.xlu0 %2471, %v1734
    %v2473 = vpop.permute.xlu0 %2472
    %2476 = vset.pattern.permute.xlu0 0
    %2477 = vperm.xlu0 %2476, %v1735
    %v2478 = vpop.permute.xlu0 %2477
    %2481 = vset.pattern.permute.xlu0 0
    %2482 = vperm.xlu0 %2481, %v1736
    %v2483 = vpop.permute.xlu0 %2482
    %2486 = vset.pattern.permute.xlu0 0
    %2487 = vperm.xlu0 %2486, %v1737
    %v2488 = vpop.permute.xlu0 %2487
    %2491 = vset.pattern.permute.xlu0 0
    %2492 = vperm.xlu0 %2491, %v1738
    %v2493 = vpop.permute.xlu0 %2492
    %2496 = vset.pattern.permute.xlu0 0
    %2497 = vperm.xlu0 %2496, %v1739
    %v2498 = vpop.permute.xlu0 %2497
    %2501 = vset.pattern.permute.xlu0 0
    %2502 = vperm.xlu0 %2501, %v1740
    %v2503 = vpop.permute.xlu0 %2502
    %2506 = vset.pattern.permute.xlu0 0
    %2507 = vperm.xlu0 %2506, %v1741
    %v2508 = vpop.permute.xlu0 %2507
    %2511 = vset.pattern.permute.xlu0 0
    %2512 = vperm.xlu0 %2511, %v1742
    %v2513 = vpop.permute.xlu0 %2512
    %2516 = vset.pattern.permute.xlu0 0
    %2517 = vperm.xlu0 %2516, %v1743
    %v2518 = vpop.permute.xlu0 %2517
    %2521 = vset.pattern.permute.xlu0 0
    %2522 = vperm.xlu0 %2521, %v1744
    %v2523 = vpop.permute.xlu0 %2522
    %2526 = vset.pattern.permute.xlu0 0
    %2527 = vperm.xlu0 %2526, %v1745
    %v2528 = vpop.permute.xlu0 %2527
    %2531 = vset.pattern.permute.xlu0 0
    %2532 = vperm.xlu0 %2531, %v1746
    %v2533 = vpop.permute.xlu0 %2532
    %2536 = vset.pattern.permute.xlu0 0
    %2537 = vperm.xlu0 %2536, %v1747
    %v2538 = vpop.permute.xlu0 %2537
    %2541 = vset.pattern.permute.xlu0 0
    %2542 = vperm.xlu0 %2541, %v1748
    %v2543 = vpop.permute.xlu0 %2542
    %2546 = vset.pattern.permute.xlu0 0
    %2547 = vperm.xlu0 %2546, %v1749
    %v2548 = vpop.permute.xlu0 %2547
    %2551 = vset.pattern.permute.xlu0 0
    %2552 = vperm.xlu0 %2551, %v1750
    %v2553 = vpop.permute.xlu0 %2552
    %2556 = vset.pattern.permute.xlu0 0
    %2557 = vperm.xlu0 %2556, %v1751
    %v2558 = vpop.permute.xlu0 %2557
    %2561 = vset.pattern.permute.xlu0 0
    %2562 = vperm.xlu0 %2561, %v1752
    %v2563 = vpop.permute.xlu0 %2562
    %2566 = vset.pattern.permute.xlu0 0
    %2567 = vperm.xlu0 %2566, %v1753
    %v2568 = vpop.permute.xlu0 %2567
    %2571 = vset.pattern.permute.xlu0 0
    %2572 = vperm.xlu0 %2571, %v1754
    %v2573 = vpop.permute.xlu0 %2572
    %2576 = vset.pattern.permute.xlu0 0
    %2577 = vperm.xlu0 %2576, %v1755
    %v2578 = vpop.permute.xlu0 %2577
    %2581 = vset.pattern.permute.xlu0 0
    %2582 = vperm.xlu0 %2581, %v1756
    %v2583 = vpop.permute.xlu0 %2582
    %2586 = vset.pattern.permute.xlu0 0
    %2587 = vperm.xlu0 %2586, %v1757
    %v2588 = vpop.permute.xlu0 %2587
    %2591 = vset.pattern.permute.xlu0 0
    %2592 = vperm.xlu0 %2591, %v1758
    %v2593 = vpop.permute.xlu0 %2592
    %2596 = vset.pattern.permute.xlu0 0
    %2597 = vperm.xlu0 %2596, %v1759
    %v2598 = vpop.permute.xlu0 %2597
    %2601 = vset.pattern.permute.xlu0 0
    %2602 = vperm.xlu0 %2601, %v1760
    %v2603 = vpop.permute.xlu0 %2602
    %2606 = vset.pattern.permute.xlu0 0
    %2607 = vperm.xlu0 %2606, %v1761
    %v2608 = vpop.permute.xlu0 %2607
    %2611 = vset.pattern.permute.xlu0 0
    %2612 = vperm.xlu0 %2611, %v1762
    %v2613 = vpop.permute.xlu0 %2612
    %2616 = vset.pattern.permute.xlu0 0
    %2617 = vperm.xlu0 %2616, %v1763
    %v2618 = vpop.permute.xlu0 %2617
    %2621 = vset.pattern.permute.xlu0 0
    %2622 = vperm.xlu0 %2621, %v1764
    %v2623 = vpop.permute.xlu0 %2622
    %2626 = vset.pattern.permute.xlu0 0
    %2627 = vperm.xlu0 %2626, %v1765
    %v2628 = vpop.permute.xlu0 %2627
    %2631 = vset.pattern.permute.xlu0 0
    %2632 = vperm.xlu0 %2631, %v1766
    %v2633 = vpop.permute.xlu0 %2632
    %2636 = vset.pattern.permute.xlu0 0
    %2637 = vperm.xlu0 %2636, %v1767
    %v2638 = vpop.permute.xlu0 %2637
    %2641 = vset.pattern.permute.xlu0 0
    %2642 = vperm.xlu0 %2641, %v1768
    %v2643 = vpop.permute.xlu0 %2642
    %2646 = vset.pattern.permute.xlu0 0
    %2647 = vperm.xlu0 %2646, %v1769
    %v2648 = vpop.permute.xlu0 %2647
    %2651 = vset.pattern.permute.xlu0 0
    %2652 = vperm.xlu0 %2651, %v1770
    %v2653 = vpop.permute.xlu0 %2652
    %2656 = vset.pattern.permute.xlu0 0
    %2657 = vperm.xlu0 %2656, %v1771
    %v2658 = vpop.permute.xlu0 %2657
    %2661 = vset.pattern.permute.xlu0 0
    %2662 = vperm.xlu0 %2661, %v1772
    %v2663 = vpop.permute.xlu0 %2662
    %2666 = vset.pattern.permute.xlu0 0
    %2667 = vperm.xlu0 %2666, %v1773
    %v2668 = vpop.permute.xlu0 %2667
    %v2670 = vmul.f32 %v1902, %v2033
    %v2671 = vmul.f32 %v1903, %v2038
    %v2672 = vmul.f32 %v1904, %v2043
    %v2673 = vmul.f32 %v1905, %v2048
    %v2674 = vmul.f32 %v1906, %v2053
    %v2675 = vmul.f32 %v1907, %v2058
    %v2676 = vmul.f32 %v1908, %v2063
    %v2677 = vmul.f32 %v1909, %v2068
    %v2678 = vmul.f32 %v1910, %v2073
    %v2679 = vmul.f32 %v1911, %v2078
    %v2680 = vmul.f32 %v1912, %v2083
    %v2681 = vmul.f32 %v1913, %v2088
    %v2682 = vmul.f32 %v1914, %v2093
    %v2683 = vmul.f32 %v1915, %v2098
    %v2684 = vmul.f32 %v1916, %v2103
    %v2685 = vmul.f32 %v1917, %v2108
    %v2686 = vmul.f32 %v1918, %v2113
    %v2687 = vmul.f32 %v1919, %v2118
    %v2688 = vmul.f32 %v1920, %v2123
    %v2689 = vmul.f32 %v1921, %v2128
    %v2690 = vmul.f32 %v1922, %v2133
    %v2691 = vmul.f32 %v1923, %v2138
    %v2692 = vmul.f32 %v1924, %v2143
    %v2693 = vmul.f32 %v1925, %v2148
    %v2694 = vmul.f32 %v1926, %v2153
    %v2695 = vmul.f32 %v1927, %v2158
    %v2696 = vmul.f32 %v1928, %v2163
    %v2697 = vmul.f32 %v1929, %v2168
    %v2698 = vmul.f32 %v1930, %v2173
    %v2699 = vmul.f32 %v1931, %v2178
    %v2700 = vmul.f32 %v1932, %v2183
    %v2701 = vmul.f32 %v1933, %v2188
    %v2702 = vmul.f32 %v1934, %v2193
    %v2703 = vmul.f32 %v1935, %v2198
    %v2704 = vmul.f32 %v1936, %v2203
    %v2705 = vmul.f32 %v1937, %v2208
    %v2706 = vmul.f32 %v1938, %v2213
    %v2707 = vmul.f32 %v1939, %v2218
    %v2708 = vmul.f32 %v1940, %v2223
    %v2709 = vmul.f32 %v1941, %v2228
    %v2710 = vmul.f32 %v1942, %v2233
    %v2711 = vmul.f32 %v1943, %v2238
    %v2712 = vmul.f32 %v1944, %v2243
    %v2713 = vmul.f32 %v1945, %v2248
    %v2714 = vmul.f32 %v1946, %v2253
    %v2715 = vmul.f32 %v1947, %v2258
    %v2716 = vmul.f32 %v1948, %v2263
    %v2717 = vmul.f32 %v1949, %v2268
    %v2718 = vmul.f32 %v1950, %v2273
    %v2719 = vmul.f32 %v1951, %v2278
    %v2720 = vmul.f32 %v1952, %v2283
    %v2721 = vmul.f32 %v1953, %v2288
    %v2722 = vmul.f32 %v1954, %v2293
    %v2723 = vmul.f32 %v1955, %v2298
    %v2724 = vmul.f32 %v1956, %v2303
    %v2725 = vmul.f32 %v1957, %v2308
    %v2726 = vmul.f32 %v1958, %v2313
    %v2727 = vmul.f32 %v1959, %v2318
    %v2728 = vmul.f32 %v1960, %v2323
    %v2729 = vmul.f32 %v1961, %v2328
    %v2730 = vmul.f32 %v1962, %v2333
    %v2731 = vmul.f32 %v1963, %v2338
    %v2732 = vmul.f32 %v1964, %v2343
    %v2733 = vmul.f32 %v1965, %v2348
    %v2734 = vmul.f32 %v1966, %v2353
    %v2735 = vmul.f32 %v1967, %v2358
    %v2736 = vmul.f32 %v1968, %v2363
    %v2737 = vmul.f32 %v1969, %v2368
    %v2738 = vmul.f32 %v1970, %v2373
    %v2739 = vmul.f32 %v1971, %v2378
    %v2740 = vmul.f32 %v1972, %v2383
    %v2741 = vmul.f32 %v1973, %v2388
    %v2742 = vmul.f32 %v1974, %v2393
    %v2743 = vmul.f32 %v1975, %v2398
    %v2744 = vmul.f32 %v1976, %v2403
    %v2745 = vmul.f32 %v1977, %v2408
    %v2746 = vmul.f32 %v1978, %v2413
    %v2747 = vmul.f32 %v1979, %v2418
    %v2748 = vmul.f32 %v1980, %v2423
    %v2749 = vmul.f32 %v1981, %v2428
    %v2750 = vmul.f32 %v1982, %v2433
    %v2751 = vmul.f32 %v1983, %v2438
    %v2752 = vmul.f32 %v1984, %v2443
    %v2753 = vmul.f32 %v1985, %v2448
    %v2754 = vmul.f32 %v1986, %v2453
    %v2755 = vmul.f32 %v1987, %v2458
    %v2756 = vmul.f32 %v1988, %v2463
    %v2757 = vmul.f32 %v1989, %v2468
    %v2758 = vmul.f32 %v1990, %v2473
    %v2759 = vmul.f32 %v1991, %v2478
    %v2760 = vmul.f32 %v1992, %v2483
    %v2761 = vmul.f32 %v1993, %v2488
    %v2762 = vmul.f32 %v1994, %v2493
    %v2763 = vmul.f32 %v1995, %v2498
    %v2764 = vmul.f32 %v1996, %v2503
    %v2765 = vmul.f32 %v1997, %v2508
    %v2766 = vmul.f32 %v1998, %v2513
    %v2767 = vmul.f32 %v1999, %v2518
    %v2768 = vmul.f32 %v2000, %v2523
    %v2769 = vmul.f32 %v2001, %v2528
    %v2770 = vmul.f32 %v2002, %v2533
    %v2771 = vmul.f32 %v2003, %v2538
    %v2772 = vmul.f32 %v2004, %v2543
    %v2773 = vmul.f32 %v2005, %v2548
    %v2774 = vmul.f32 %v2006, %v2553
    %v2775 = vmul.f32 %v2007, %v2558
    %v2776 = vmul.f32 %v2008, %v2563
    %v2777 = vmul.f32 %v2009, %v2568
    %v2778 = vmul.f32 %v2010, %v2573
    %v2779 = vmul.f32 %v2011, %v2578
    %v2780 = vmul.f32 %v2012, %v2583
    %v2781 = vmul.f32 %v2013, %v2588
    %v2782 = vmul.f32 %v2014, %v2593
    %v2783 = vmul.f32 %v2015, %v2598
    %v2784 = vmul.f32 %v2016, %v2603
    %v2785 = vmul.f32 %v2017, %v2608
    %v2786 = vmul.f32 %v2018, %v2613
    %v2787 = vmul.f32 %v2019, %v2618
    %v2788 = vmul.f32 %v2020, %v2623
    %v2789 = vmul.f32 %v2021, %v2628
    %v2790 = vmul.f32 %v2022, %v2633
    %v2791 = vmul.f32 %v2023, %v2638
    %v2792 = vmul.f32 %v2024, %v2643
    %v2793 = vmul.f32 %v2025, %v2648
    %v2794 = vmul.f32 %v2026, %v2653
    %v2795 = vmul.f32 %v2027, %v2658
    %v2796 = vmul.f32 %v2028, %v2663
    %v2797 = vmul.f32 %v2029, %v2668
    %v2798 = vpack.c.bf16 %v2671, %v2670
    %v2799 = vpack.c.bf16 %v2673, %v2672
    %v2800 = vpack.c.bf16 %v2675, %v2674
    %v2801 = vpack.c.bf16 %v2677, %v2676
    %v2802 = vpack.c.bf16 %v2679, %v2678
    %v2803 = vpack.c.bf16 %v2681, %v2680
    %v2804 = vpack.c.bf16 %v2683, %v2682
    %v2805 = vpack.c.bf16 %v2685, %v2684
    %v2806 = vpack.c.bf16 %v2687, %v2686
    %v2807 = vpack.c.bf16 %v2689, %v2688
    %v2808 = vpack.c.bf16 %v2691, %v2690
    %v2809 = vpack.c.bf16 %v2693, %v2692
    %v2810 = vpack.c.bf16 %v2695, %v2694
    %v2811 = vpack.c.bf16 %v2697, %v2696
    %v2812 = vpack.c.bf16 %v2699, %v2698
    %v2813 = vpack.c.bf16 %v2701, %v2700
    %v2814 = vpack.c.bf16 %v2703, %v2702
    %v2815 = vpack.c.bf16 %v2705, %v2704
    %v2816 = vpack.c.bf16 %v2707, %v2706
    %v2817 = vpack.c.bf16 %v2709, %v2708
    %v2818 = vpack.c.bf16 %v2711, %v2710
    %v2819 = vpack.c.bf16 %v2713, %v2712
    %v2820 = vpack.c.bf16 %v2715, %v2714
    %v2821 = vpack.c.bf16 %v2717, %v2716
    %v2822 = vpack.c.bf16 %v2719, %v2718
    %v2823 = vpack.c.bf16 %v2721, %v2720
    %v2824 = vpack.c.bf16 %v2723, %v2722
    %v2825 = vpack.c.bf16 %v2725, %v2724
    %v2826 = vpack.c.bf16 %v2727, %v2726
    %v2827 = vpack.c.bf16 %v2729, %v2728
    %v2828 = vpack.c.bf16 %v2731, %v2730
    %v2829 = vpack.c.bf16 %v2733, %v2732
    %v2830 = vpack.c.bf16 %v2735, %v2734
    %v2831 = vpack.c.bf16 %v2737, %v2736
    %v2832 = vpack.c.bf16 %v2739, %v2738
    %v2833 = vpack.c.bf16 %v2741, %v2740
    %v2834 = vpack.c.bf16 %v2743, %v2742
    %v2835 = vpack.c.bf16 %v2745, %v2744
    %v2836 = vpack.c.bf16 %v2747, %v2746
    %v2837 = vpack.c.bf16 %v2749, %v2748
    %v2838 = vpack.c.bf16 %v2751, %v2750
    %v2839 = vpack.c.bf16 %v2753, %v2752
    %v2840 = vpack.c.bf16 %v2755, %v2754
    %v2841 = vpack.c.bf16 %v2757, %v2756
    %v2842 = vpack.c.bf16 %v2759, %v2758
    %v2843 = vpack.c.bf16 %v2761, %v2760
    %v2844 = vpack.c.bf16 %v2763, %v2762
    %v2845 = vpack.c.bf16 %v2765, %v2764
    %v2846 = vpack.c.bf16 %v2767, %v2766
    %v2847 = vpack.c.bf16 %v2769, %v2768
    %v2848 = vpack.c.bf16 %v2771, %v2770
    %v2849 = vpack.c.bf16 %v2773, %v2772
    %v2850 = vpack.c.bf16 %v2775, %v2774
    %v2851 = vpack.c.bf16 %v2777, %v2776
    %v2852 = vpack.c.bf16 %v2779, %v2778
    %v2853 = vpack.c.bf16 %v2781, %v2780
    %v2854 = vpack.c.bf16 %v2783, %v2782
    %v2855 = vpack.c.bf16 %v2785, %v2784
    %v2856 = vpack.c.bf16 %v2787, %v2786
    %v2857 = vpack.c.bf16 %v2789, %v2788
    %v2858 = vpack.c.bf16 %v2791, %v2790
    %v2859 = vpack.c.bf16 %v2793, %v2792
    %v2860 = vpack.c.bf16 %v2795, %v2794
    %v2861 = vpack.c.bf16 %v2797, %v2796
    %v2926 = vunpack.c.l.b16 %v2798
    %v2927 = vunpack.c.h.b16 %v2798
    %v2928 = vunpack.c.l.b16 %v2799
    %v2929 = vunpack.c.h.b16 %v2799
    %v2930 = vunpack.c.l.b16 %v2800
    %v2931 = vunpack.c.h.b16 %v2800
    %v2932 = vunpack.c.l.b16 %v2801
    %v2933 = vunpack.c.h.b16 %v2801
    %v2934 = vunpack.c.l.b16 %v2802
    %v2935 = vunpack.c.h.b16 %v2802
    %v2936 = vunpack.c.l.b16 %v2803
    %v2937 = vunpack.c.h.b16 %v2803
    %v2938 = vunpack.c.l.b16 %v2804
    %v2939 = vunpack.c.h.b16 %v2804
    %v2940 = vunpack.c.l.b16 %v2805
    %v2941 = vunpack.c.h.b16 %v2805
    %v2942 = vunpack.c.l.b16 %v2806
    %v2943 = vunpack.c.h.b16 %v2806
    %v2944 = vunpack.c.l.b16 %v2807
    %v2945 = vunpack.c.h.b16 %v2807
    %v2946 = vunpack.c.l.b16 %v2808
    %v2947 = vunpack.c.h.b16 %v2808
    %v2948 = vunpack.c.l.b16 %v2809
    %v2949 = vunpack.c.h.b16 %v2809
    %v2950 = vunpack.c.l.b16 %v2810
    %v2951 = vunpack.c.h.b16 %v2810
    %v2952 = vunpack.c.l.b16 %v2811
    %v2953 = vunpack.c.h.b16 %v2811
    %v2954 = vunpack.c.l.b16 %v2812
    %v2955 = vunpack.c.h.b16 %v2812
    %v2956 = vunpack.c.l.b16 %v2813
    %v2957 = vunpack.c.h.b16 %v2813
    %v2958 = vunpack.c.l.b16 %v2814
    %v2959 = vunpack.c.h.b16 %v2814
    %v2960 = vunpack.c.l.b16 %v2815
    %v2961 = vunpack.c.h.b16 %v2815
    %v2962 = vunpack.c.l.b16 %v2816
    %v2963 = vunpack.c.h.b16 %v2816
    %v2964 = vunpack.c.l.b16 %v2817
    %v2965 = vunpack.c.h.b16 %v2817
    %v2966 = vunpack.c.l.b16 %v2818
    %v2967 = vunpack.c.h.b16 %v2818
    %v2968 = vunpack.c.l.b16 %v2819
    %v2969 = vunpack.c.h.b16 %v2819
    %v2970 = vunpack.c.l.b16 %v2820
    %v2971 = vunpack.c.h.b16 %v2820
    %v2972 = vunpack.c.l.b16 %v2821
    %v2973 = vunpack.c.h.b16 %v2821
    %v2974 = vunpack.c.l.b16 %v2822
    %v2975 = vunpack.c.h.b16 %v2822
    %v2976 = vunpack.c.l.b16 %v2823
    %v2977 = vunpack.c.h.b16 %v2823
    %v2978 = vunpack.c.l.b16 %v2824
    %v2979 = vunpack.c.h.b16 %v2824
    %v2980 = vunpack.c.l.b16 %v2825
    %v2981 = vunpack.c.h.b16 %v2825
    %v2982 = vunpack.c.l.b16 %v2826
    %v2983 = vunpack.c.h.b16 %v2826
    %v2984 = vunpack.c.l.b16 %v2827
    %v2985 = vunpack.c.h.b16 %v2827
    %v2986 = vunpack.c.l.b16 %v2828
    %v2987 = vunpack.c.h.b16 %v2828
    %v2988 = vunpack.c.l.b16 %v2829
    %v2989 = vunpack.c.h.b16 %v2829
    %v2990 = vunpack.c.l.b16 %v2830
    %v2991 = vunpack.c.h.b16 %v2830
    %v2992 = vunpack.c.l.b16 %v2831
    %v2993 = vunpack.c.h.b16 %v2831
    %v2994 = vunpack.c.l.b16 %v2832
    %v2995 = vunpack.c.h.b16 %v2832
    %v2996 = vunpack.c.l.b16 %v2833
    %v2997 = vunpack.c.h.b16 %v2833
    %v2998 = vunpack.c.l.b16 %v2834
    %v2999 = vunpack.c.h.b16 %v2834
    %v3000 = vunpack.c.l.b16 %v2835
    %v3001 = vunpack.c.h.b16 %v2835
    %v3002 = vunpack.c.l.b16 %v2836
    %v3003 = vunpack.c.h.b16 %v2836
    %v3004 = vunpack.c.l.b16 %v2837
    %v3005 = vunpack.c.h.b16 %v2837
    %v3006 = vunpack.c.l.b16 %v2838
    %v3007 = vunpack.c.h.b16 %v2838
    %v3008 = vunpack.c.l.b16 %v2839
    %v3009 = vunpack.c.h.b16 %v2839
    %v3010 = vunpack.c.l.b16 %v2840
    %v3011 = vunpack.c.h.b16 %v2840
    %v3012 = vunpack.c.l.b16 %v2841
    %v3013 = vunpack.c.h.b16 %v2841
    %v3014 = vunpack.c.l.b16 %v2842
    %v3015 = vunpack.c.h.b16 %v2842
    %v3016 = vunpack.c.l.b16 %v2843
    %v3017 = vunpack.c.h.b16 %v2843
    %v3018 = vunpack.c.l.b16 %v2844
    %v3019 = vunpack.c.h.b16 %v2844
    %v3020 = vunpack.c.l.b16 %v2845
    %v3021 = vunpack.c.h.b16 %v2845
    %v3022 = vunpack.c.l.b16 %v2846
    %v3023 = vunpack.c.h.b16 %v2846
    %v3024 = vunpack.c.l.b16 %v2847
    %v3025 = vunpack.c.h.b16 %v2847
    %v3026 = vunpack.c.l.b16 %v2848
    %v3027 = vunpack.c.h.b16 %v2848
    %v3028 = vunpack.c.l.b16 %v2849
    %v3029 = vunpack.c.h.b16 %v2849
    %v3030 = vunpack.c.l.b16 %v2850
    %v3031 = vunpack.c.h.b16 %v2850
    %v3032 = vunpack.c.l.b16 %v2851
    %v3033 = vunpack.c.h.b16 %v2851
    %v3034 = vunpack.c.l.b16 %v2852
    %v3035 = vunpack.c.h.b16 %v2852
    %v3036 = vunpack.c.l.b16 %v2853
    %v3037 = vunpack.c.h.b16 %v2853
    %v3038 = vunpack.c.l.b16 %v2854
    %v3039 = vunpack.c.h.b16 %v2854
    %v3040 = vunpack.c.l.b16 %v2855
    %v3041 = vunpack.c.h.b16 %v2855
    %v3042 = vunpack.c.l.b16 %v2856
    %v3043 = vunpack.c.h.b16 %v2856
    %v3044 = vunpack.c.l.b16 %v2857
    %v3045 = vunpack.c.h.b16 %v2857
    %v3046 = vunpack.c.l.b16 %v2858
    %v3047 = vunpack.c.h.b16 %v2858
    %v3048 = vunpack.c.l.b16 %v2859
    %v3049 = vunpack.c.h.b16 %v2859
    %v3050 = vunpack.c.l.b16 %v2860
    %v3051 = vunpack.c.h.b16 %v2860
    %v3052 = vunpack.c.l.b16 %v2861
    %v3053 = vunpack.c.h.b16 %v2861
    %v3054 = vpack.c.b16 %v2926, %v2926
    %v3055 = vpack.c.b16 %v2927, %v2927
    %v3056 = vpack.c.b16 %v2928, %v2928
    %v3057 = vpack.c.b16 %v2929, %v2929
    %v3058 = vpack.c.b16 %v2930, %v2930
    %v3059 = vpack.c.b16 %v2931, %v2931
    %v3060 = vpack.c.b16 %v2932, %v2932
    %v3061 = vpack.c.b16 %v2933, %v2933
    %v3062 = vpack.c.b16 %v2934, %v2934
    %v3063 = vpack.c.b16 %v2935, %v2935
    %v3064 = vpack.c.b16 %v2936, %v2936
    %v3065 = vpack.c.b16 %v2937, %v2937
    %v3066 = vpack.c.b16 %v2938, %v2938
    %v3067 = vpack.c.b16 %v2939, %v2939
    %v3068 = vpack.c.b16 %v2940, %v2940
    %v3069 = vpack.c.b16 %v2941, %v2941
    %v3070 = vpack.c.b16 %v2942, %v2942
    %v3071 = vpack.c.b16 %v2943, %v2943
    %v3072 = vpack.c.b16 %v2944, %v2944
    %v3073 = vpack.c.b16 %v2945, %v2945
    %v3074 = vpack.c.b16 %v2946, %v2946
    %v3075 = vpack.c.b16 %v2947, %v2947
    %v3076 = vpack.c.b16 %v2948, %v2948
    %v3077 = vpack.c.b16 %v2949, %v2949
    %v3078 = vpack.c.b16 %v2950, %v2950
    %v3079 = vpack.c.b16 %v2951, %v2951
    %v3080 = vpack.c.b16 %v2952, %v2952
    %v3081 = vpack.c.b16 %v2953, %v2953
    %v3082 = vpack.c.b16 %v2954, %v2954
    %v3083 = vpack.c.b16 %v2955, %v2955
    %v3084 = vpack.c.b16 %v2956, %v2956
    %v3085 = vpack.c.b16 %v2957, %v2957
    %v3086 = vpack.c.b16 %v2958, %v2958
    %v3087 = vpack.c.b16 %v2959, %v2959
    %v3088 = vpack.c.b16 %v2960, %v2960
    %v3089 = vpack.c.b16 %v2961, %v2961
    %v3090 = vpack.c.b16 %v2962, %v2962
    %v3091 = vpack.c.b16 %v2963, %v2963
    %v3092 = vpack.c.b16 %v2964, %v2964
    %v3093 = vpack.c.b16 %v2965, %v2965
    %v3094 = vpack.c.b16 %v2966, %v2966
    %v3095 = vpack.c.b16 %v2967, %v2967
    %v3096 = vpack.c.b16 %v2968, %v2968
    %v3097 = vpack.c.b16 %v2969, %v2969
    %v3098 = vpack.c.b16 %v2970, %v2970
    %v3099 = vpack.c.b16 %v2971, %v2971
    %v3100 = vpack.c.b16 %v2972, %v2972
    %v3101 = vpack.c.b16 %v2973, %v2973
    %v3102 = vpack.c.b16 %v2974, %v2974
    %v3103 = vpack.c.b16 %v2975, %v2975
    %v3104 = vpack.c.b16 %v2976, %v2976
    %v3105 = vpack.c.b16 %v2977, %v2977
    %v3106 = vpack.c.b16 %v2978, %v2978
    %v3107 = vpack.c.b16 %v2979, %v2979
    %v3108 = vpack.c.b16 %v2980, %v2980
    %v3109 = vpack.c.b16 %v2981, %v2981
    %v3110 = vpack.c.b16 %v2982, %v2982
    %v3111 = vpack.c.b16 %v2983, %v2983
    %v3112 = vpack.c.b16 %v2984, %v2984
    %v3113 = vpack.c.b16 %v2985, %v2985
    %v3114 = vpack.c.b16 %v2986, %v2986
    %v3115 = vpack.c.b16 %v2987, %v2987
    %v3116 = vpack.c.b16 %v2988, %v2988
    %v3117 = vpack.c.b16 %v2989, %v2989
    %v3118 = vpack.c.b16 %v2990, %v2990
    %v3119 = vpack.c.b16 %v2991, %v2991
    %v3120 = vpack.c.b16 %v2992, %v2992
    %v3121 = vpack.c.b16 %v2993, %v2993
    %v3122 = vpack.c.b16 %v2994, %v2994
    %v3123 = vpack.c.b16 %v2995, %v2995
    %v3124 = vpack.c.b16 %v2996, %v2996
    %v3125 = vpack.c.b16 %v2997, %v2997
    %v3126 = vpack.c.b16 %v2998, %v2998
    %v3127 = vpack.c.b16 %v2999, %v2999
    %v3128 = vpack.c.b16 %v3000, %v3000
    %v3129 = vpack.c.b16 %v3001, %v3001
    %v3130 = vpack.c.b16 %v3002, %v3002
    %v3131 = vpack.c.b16 %v3003, %v3003
    %v3132 = vpack.c.b16 %v3004, %v3004
    %v3133 = vpack.c.b16 %v3005, %v3005
    %v3134 = vpack.c.b16 %v3006, %v3006
    %v3135 = vpack.c.b16 %v3007, %v3007
    %v3136 = vpack.c.b16 %v3008, %v3008
    %v3137 = vpack.c.b16 %v3009, %v3009
    %v3138 = vpack.c.b16 %v3010, %v3010
    %v3139 = vpack.c.b16 %v3011, %v3011
    %v3140 = vpack.c.b16 %v3012, %v3012
    %v3141 = vpack.c.b16 %v3013, %v3013
    %v3142 = vpack.c.b16 %v3014, %v3014
    %v3143 = vpack.c.b16 %v3015, %v3015
    %v3144 = vpack.c.b16 %v3016, %v3016
    %v3145 = vpack.c.b16 %v3017, %v3017
    %v3146 = vpack.c.b16 %v3018, %v3018
    %v3147 = vpack.c.b16 %v3019, %v3019
    %v3148 = vpack.c.b16 %v3020, %v3020
    %v3149 = vpack.c.b16 %v3021, %v3021
    %v3150 = vpack.c.b16 %v3022, %v3022
    %v3151 = vpack.c.b16 %v3023, %v3023
    %v3152 = vpack.c.b16 %v3024, %v3024
    %v3153 = vpack.c.b16 %v3025, %v3025
    %v3154 = vpack.c.b16 %v3026, %v3026
    %v3155 = vpack.c.b16 %v3027, %v3027
    %v3156 = vpack.c.b16 %v3028, %v3028
    %v3157 = vpack.c.b16 %v3029, %v3029
    %v3158 = vpack.c.b16 %v3030, %v3030
    %v3159 = vpack.c.b16 %v3031, %v3031
    %v3160 = vpack.c.b16 %v3032, %v3032
    %v3161 = vpack.c.b16 %v3033, %v3033
    %v3162 = vpack.c.b16 %v3034, %v3034
    %v3163 = vpack.c.b16 %v3035, %v3035
    %v3164 = vpack.c.b16 %v3036, %v3036
    %v3165 = vpack.c.b16 %v3037, %v3037
    %v3166 = vpack.c.b16 %v3038, %v3038
    %v3167 = vpack.c.b16 %v3039, %v3039
    %v3168 = vpack.c.b16 %v3040, %v3040
    %v3169 = vpack.c.b16 %v3041, %v3041
    %v3170 = vpack.c.b16 %v3042, %v3042
    %v3171 = vpack.c.b16 %v3043, %v3043
    %v3172 = vpack.c.b16 %v3044, %v3044
    %v3173 = vpack.c.b16 %v3045, %v3045
    %v3174 = vpack.c.b16 %v3046, %v3046
    %v3175 = vpack.c.b16 %v3047, %v3047
    %v3176 = vpack.c.b16 %v3048, %v3048
    %v3177 = vpack.c.b16 %v3049, %v3049
    %v3178 = vpack.c.b16 %v3050, %v3050
    %v3179 = vpack.c.b16 %v3051, %v3051
    %v3180 = vpack.c.b16 %v3052, %v3052
    %v3181 = vpack.c.b16 %v3053, %v3053
    %3310 = vst [vmem:[#allocation5] sm:$0xf] %v3054
    %3311 = vst [vmem:[#allocation5 + $0x8] sm:$0xf] %v3055
    %3312 = vst [vmem:[#allocation5 + $0x10] sm:$0xf] %v3056
    %3313 = vst [vmem:[#allocation5 + $0x18] sm:$0xf] %v3057
    %3314 = vst [vmem:[#allocation5 + $0x20] sm:$0xf] %v3058
    %3315 = vst [vmem:[#allocation5 + $0x28] sm:$0xf] %v3059
    %3316 = vst [vmem:[#allocation5 + $0x30] sm:$0xf] %v3060
    %3317 = vst [vmem:[#allocation5 + $0x38] sm:$0xf] %v3061
    %3318 = vst [vmem:[#allocation5 + $0x40] sm:$0xf] %v3062
    %3319 = vst [vmem:[#allocation5 + $0x48] sm:$0xf] %v3063
    %3320 = vst [vmem:[#allocation5 + $0x50] sm:$0xf] %v3064
    %3321 = vst [vmem:[#allocation5 + $0x58] sm:$0xf] %v3065
    %3322 = vst [vmem:[#allocation5 + $0x60] sm:$0xf] %v3066
    %3323 = vst [vmem:[#allocation5 + $0x68] sm:$0xf] %v3067
    %3324 = vst [vmem:[#allocation5 + $0x70] sm:$0xf] %v3068
    %3325 = vst [vmem:[#allocation5 + $0x78] sm:$0xf] %v3069
    %3326 = vst [vmem:[#allocation5 + $0x80] sm:$0xf] %v3070
    %3327 = vst [vmem:[#allocation5 + $0x88] sm:$0xf] %v3071
    %3328 = vst [vmem:[#allocation5 + $0x90] sm:$0xf] %v3072
    %3329 = vst [vmem:[#allocation5 + $0x98] sm:$0xf] %v3073
    %3330 = vst [vmem:[#allocation5 + $0xa0] sm:$0xf] %v3074
    %3331 = vst [vmem:[#allocation5 + $0xa8] sm:$0xf] %v3075
    %3332 = vst [vmem:[#allocation5 + $0xb0] sm:$0xf] %v3076
    %3333 = vst [vmem:[#allocation5 + $0xb8] sm:$0xf] %v3077
    %3334 = vst [vmem:[#allocation5 + $0xc0] sm:$0xf] %v3078
    %3335 = vst [vmem:[#allocation5 + $0xc8] sm:$0xf] %v3079
    %3336 = vst [vmem:[#allocation5 + $0xd0] sm:$0xf] %v3080
    %3337 = vst [vmem:[#allocation5 + $0xd8] sm:$0xf] %v3081
    %3338 = vst [vmem:[#allocation5 + $0xe0] sm:$0xf] %v3082
    %3339 = vst [vmem:[#allocation5 + $0xe8] sm:$0xf] %v3083
    %3340 = vst [vmem:[#allocation5 + $0xf0] sm:$0xf] %v3084
    %3341 = vst [vmem:[#allocation5 + $0xf8] sm:$0xf] %v3085
    %3342 = vst [vmem:[#allocation5 + $0x100] sm:$0xf] %v3086
    %3343 = vst [vmem:[#allocation5 + $0x108] sm:$0xf] %v3087
    %3344 = vst [vmem:[#allocation5 + $0x110] sm:$0xf] %v3088
    %3345 = vst [vmem:[#allocation5 + $0x118] sm:$0xf] %v3089
    %3346 = vst [vmem:[#allocation5 + $0x120] sm:$0xf] %v3090
    %3347 = vst [vmem:[#allocation5 + $0x128] sm:$0xf] %v3091
    %3348 = vst [vmem:[#allocation5 + $0x130] sm:$0xf] %v3092
    %3349 = vst [vmem:[#allocation5 + $0x138] sm:$0xf] %v3093
    %3350 = vst [vmem:[#allocation5 + $0x140] sm:$0xf] %v3094
    %3351 = vst [vmem:[#allocation5 + $0x148] sm:$0xf] %v3095
    %3352 = vst [vmem:[#allocation5 + $0x150] sm:$0xf] %v3096
    %3353 = vst [vmem:[#allocation5 + $0x158] sm:$0xf] %v3097
    %3354 = vst [vmem:[#allocation5 + $0x160] sm:$0xf] %v3098
    %3355 = vst [vmem:[#allocation5 + $0x168] sm:$0xf] %v3099
    %3356 = vst [vmem:[#allocation5 + $0x170] sm:$0xf] %v3100
    %3357 = vst [vmem:[#allocation5 + $0x178] sm:$0xf] %v3101
    %3358 = vst [vmem:[#allocation5 + $0x180] sm:$0xf] %v3102
    %3359 = vst [vmem:[#allocation5 + $0x188] sm:$0xf] %v3103
    %3360 = vst [vmem:[#allocation5 + $0x190] sm:$0xf] %v3104
    %3361 = vst [vmem:[#allocation5 + $0x198] sm:$0xf] %v3105
    %3362 = vst [vmem:[#allocation5 + $0x1a0] sm:$0xf] %v3106
    %3363 = vst [vmem:[#allocation5 + $0x1a8] sm:$0xf] %v3107
    %3364 = vst [vmem:[#allocation5 + $0x1b0] sm:$0xf] %v3108
    %3365 = vst [vmem:[#allocation5 + $0x1b8] sm:$0xf] %v3109
    %3366 = vst [vmem:[#allocation5 + $0x1c0] sm:$0xf] %v3110
    %3367 = vst [vmem:[#allocation5 + $0x1c8] sm:$0xf] %v3111
    %3368 = vst [vmem:[#allocation5 + $0x1d0] sm:$0xf] %v3112
    %3369 = vst [vmem:[#allocation5 + $0x1d8] sm:$0xf] %v3113
    %3370 = vst [vmem:[#allocation5 + $0x1e0] sm:$0xf] %v3114
    %3371 = vst [vmem:[#allocation5 + $0x1e8] sm:$0xf] %v3115
    %3372 = vst [vmem:[#allocation5 + $0x1f0] sm:$0xf] %v3116
    %3373 = vst [vmem:[#allocation5 + $0x1f8] sm:$0xf] %v3117
    %3374 = vst [vmem:[#allocation5 + $0x200] sm:$0xf] %v3118
    %3375 = vst [vmem:[#allocation5 + $0x208] sm:$0xf] %v3119
    %3376 = vst [vmem:[#allocation5 + $0x210] sm:$0xf] %v3120
    %3377 = vst [vmem:[#allocation5 + $0x218] sm:$0xf] %v3121
    %3378 = vst [vmem:[#allocation5 + $0x220] sm:$0xf] %v3122
    %3379 = vst [vmem:[#allocation5 + $0x228] sm:$0xf] %v3123
    %3380 = vst [vmem:[#allocation5 + $0x230] sm:$0xf] %v3124
    %3381 = vst [vmem:[#allocation5 + $0x238] sm:$0xf] %v3125
    %3382 = vst [vmem:[#allocation5 + $0x240] sm:$0xf] %v3126
    %3383 = vst [vmem:[#allocation5 + $0x248] sm:$0xf] %v3127
    %3384 = vst [vmem:[#allocation5 + $0x250] sm:$0xf] %v3128
    %3385 = vst [vmem:[#allocation5 + $0x258] sm:$0xf] %v3129
    %3386 = vst [vmem:[#allocation5 + $0x260] sm:$0xf] %v3130
    %3387 = vst [vmem:[#allocation5 + $0x268] sm:$0xf] %v3131
    %3388 = vst [vmem:[#allocation5 + $0x270] sm:$0xf] %v3132
    %3389 = vst [vmem:[#allocation5 + $0x278] sm:$0xf] %v3133
    %3390 = vst [vmem:[#allocation5 + $0x280] sm:$0xf] %v3134
    %3391 = vst [vmem:[#allocation5 + $0x288] sm:$0xf] %v3135
    %3392 = vst [vmem:[#allocation5 + $0x290] sm:$0xf] %v3136
    %3393 = vst [vmem:[#allocation5 + $0x298] sm:$0xf] %v3137
    %3394 = vst [vmem:[#allocation5 + $0x2a0] sm:$0xf] %v3138
    %3395 = vst [vmem:[#allocation5 + $0x2a8] sm:$0xf] %v3139
    %3396 = vst [vmem:[#allocation5 + $0x2b0] sm:$0xf] %v3140
    %3397 = vst [vmem:[#allocation5 + $0x2b8] sm:$0xf] %v3141
    %3398 = vst [vmem:[#allocation5 + $0x2c0] sm:$0xf] %v3142
    %3399 = vst [vmem:[#allocation5 + $0x2c8] sm:$0xf] %v3143
    %3400 = vst [vmem:[#allocation5 + $0x2d0] sm:$0xf] %v3144
    %3401 = vst [vmem:[#allocation5 + $0x2d8] sm:$0xf] %v3145
    %3402 = vst [vmem:[#allocation5 + $0x2e0] sm:$0xf] %v3146
    %3403 = vst [vmem:[#allocation5 + $0x2e8] sm:$0xf] %v3147
    %3404 = vst [vmem:[#allocation5 + $0x2f0] sm:$0xf] %v3148
    %3405 = vst [vmem:[#allocation5 + $0x2f8] sm:$0xf] %v3149
    %3406 = vst [vmem:[#allocation5 + $0x300] sm:$0xf] %v3150
    %3407 = vst [vmem:[#allocation5 + $0x308] sm:$0xf] %v3151
    %3408 = vst [vmem:[#allocation5 + $0x310] sm:$0xf] %v3152
    %3409 = vst [vmem:[#allocation5 + $0x318] sm:$0xf] %v3153
    %3410 = vst [vmem:[#allocation5 + $0x320] sm:$0xf] %v3154
    %3411 = vst [vmem:[#allocation5 + $0x328] sm:$0xf] %v3155
    %3412 = vst [vmem:[#allocation5 + $0x330] sm:$0xf] %v3156
    %3413 = vst [vmem:[#allocation5 + $0x338] sm:$0xf] %v3157
    %3414 = vst [vmem:[#allocation5 + $0x340] sm:$0xf] %v3158
    %3415 = vst [vmem:[#allocation5 + $0x348] sm:$0xf] %v3159
    %3416 = vst [vmem:[#allocation5 + $0x350] sm:$0xf] %v3160
    %3417 = vst [vmem:[#allocation5 + $0x358] sm:$0xf] %v3161
    %3418 = vst [vmem:[#allocation5 + $0x360] sm:$0xf] %v3162
    %3419 = vst [vmem:[#allocation5 + $0x368] sm:$0xf] %v3163
    %3420 = vst [vmem:[#allocation5 + $0x370] sm:$0xf] %v3164
    %3421 = vst [vmem:[#allocation5 + $0x378] sm:$0xf] %v3165
    %3422 = vst [vmem:[#allocation5 + $0x380] sm:$0xf] %v3166
    %3423 = vst [vmem:[#allocation5 + $0x388] sm:$0xf] %v3167
    %3424 = vst [vmem:[#allocation5 + $0x390] sm:$0xf] %v3168
    %3425 = vst [vmem:[#allocation5 + $0x398] sm:$0xf] %v3169
    %3426 = vst [vmem:[#allocation5 + $0x3a0] sm:$0xf] %v3170
    %3427 = vst [vmem:[#allocation5 + $0x3a8] sm:$0xf] %v3171
    %3428 = vst [vmem:[#allocation5 + $0x3b0] sm:$0xf] %v3172
    %3429 = vst [vmem:[#allocation5 + $0x3b8] sm:$0xf] %v3173
    %3430 = vst [vmem:[#allocation5 + $0x3c0] sm:$0xf] %v3174
    %3431 = vst [vmem:[#allocation5 + $0x3c8] sm:$0xf] %v3175
    %3432 = vst [vmem:[#allocation5 + $0x3d0] sm:$0xf] %v3176
    %3433 = vst [vmem:[#allocation5 + $0x3d8] sm:$0xf] %v3177
    %3434 = vst [vmem:[#allocation5 + $0x3e0] sm:$0xf] %v3178
    %3435 = vst [vmem:[#allocation5 + $0x3e8] sm:$0xf] %v3179
    %3436 = vst [vmem:[#allocation5 + $0x3f0] sm:$0xf] %v3180
    %3437 = vst [vmem:[#allocation5 + $0x3f8] sm:$0xf] %v3181
    %v3438 = vmul.f32 %v1391, %v1391
    %v3439 = vmul.f32 %v1393, %v1393
    %v3440 = vmul.f32 %v1395, %v1395
    %v3441 = vmul.f32 %v1397, %v1397
    %v3442 = vmul.f32 %v1399, %v1399
    %v3443 = vmul.f32 %v1401, %v1401
    %v3444 = vmul.f32 %v1403, %v1403
    %v3445 = vmul.f32 %v1405, %v1405
    %v3446 = vmul.f32 %v1407, %v1407
    %v3447 = vmul.f32 %v1409, %v1409
    %v3448 = vmul.f32 %v1411, %v1411
    %v3449 = vmul.f32 %v1413, %v1413
    %v3450 = vmul.f32 %v1415, %v1415
    %v3451 = vmul.f32 %v1417, %v1417
    %v3452 = vmul.f32 %v1419, %v1419
    %v3453 = vmul.f32 %v1421, %v1421
    %v3454 = vmul.f32 %v1423, %v1423
    %v3455 = vmul.f32 %v1425, %v1425
    %v3456 = vmul.f32 %v1427, %v1427
    %v3457 = vmul.f32 %v1429, %v1429
    %v3458 = vmul.f32 %v1431, %v1431
    %v3459 = vmul.f32 %v1433, %v1433
    %v3460 = vmul.f32 %v1435, %v1435
    %v3461 = vmul.f32 %v1437, %v1437
    %v3462 = vmul.f32 %v1439, %v1439
    %v3463 = vmul.f32 %v1441, %v1441
    %v3464 = vmul.f32 %v1443, %v1443
    %v3465 = vmul.f32 %v1445, %v1445
    %v3466 = vmul.f32 %v1447, %v1447
    %v3467 = vmul.f32 %v1449, %v1449
    %v3468 = vmul.f32 %v1451, %v1451
    %v3469 = vmul.f32 %v1453, %v1453
    %v3470 = vmul.f32 %v1455, %v1455
    %v3471 = vmul.f32 %v1457, %v1457
    %v3472 = vmul.f32 %v1459, %v1459
    %v3473 = vmul.f32 %v1461, %v1461
    %v3474 = vmul.f32 %v1463, %v1463
    %v3475 = vmul.f32 %v1465, %v1465
    %v3476 = vmul.f32 %v1467, %v1467
    %v3477 = vmul.f32 %v1469, %v1469
    %v3478 = vmul.f32 %v1471, %v1471
    %v3479 = vmul.f32 %v1473, %v1473
    %v3480 = vmul.f32 %v1475, %v1475
    %v3481 = vmul.f32 %v1477, %v1477
    %v3482 = vmul.f32 %v1479, %v1479
    %v3483 = vmul.f32 %v1481, %v1481
    %v3484 = vmul.f32 %v1483, %v1483
    %v3485 = vmul.f32 %v1485, %v1485
    %v3486 = vmul.f32 %v1487, %v1487
    %v3487 = vmul.f32 %v1489, %v1489
    %v3488 = vmul.f32 %v1491, %v1491
    %v3489 = vmul.f32 %v1493, %v1493
    %v3490 = vmul.f32 %v1495, %v1495
    %v3491 = vmul.f32 %v1497, %v1497
    %v3492 = vmul.f32 %v1499, %v1499
    %v3493 = vmul.f32 %v1501, %v1501
    %v3494 = vmul.f32 %v1503, %v1503
    %v3495 = vmul.f32 %v1505, %v1505
    %v3496 = vmul.f32 %v1507, %v1507
    %v3497 = vmul.f32 %v1509, %v1509
    %v3498 = vmul.f32 %v1511, %v1511
    %v3499 = vmul.f32 %v1513, %v1513
    %v3500 = vmul.f32 %v1515, %v1515
    %v3501 = vmul.f32 %v1517, %v1517
    %v3502 = vmul.f32 %v1519, %v1519
    %v3503 = vmul.f32 %v1521, %v1521
    %v3504 = vmul.f32 %v1523, %v1523
    %v3505 = vmul.f32 %v1525, %v1525
    %v3506 = vmul.f32 %v1527, %v1527
    %v3507 = vmul.f32 %v1529, %v1529
    %v3508 = vmul.f32 %v1531, %v1531
    %v3509 = vmul.f32 %v1533, %v1533
    %v3510 = vmul.f32 %v1535, %v1535
    %v3511 = vmul.f32 %v1537, %v1537
    %v3512 = vmul.f32 %v1539, %v1539
    %v3513 = vmul.f32 %v1541, %v1541
    %v3514 = vmul.f32 %v1543, %v1543
    %v3515 = vmul.f32 %v1545, %v1545
    %v3516 = vmul.f32 %v1547, %v1547
    %v3517 = vmul.f32 %v1549, %v1549
    %v3518 = vmul.f32 %v1551, %v1551
    %v3519 = vmul.f32 %v1553, %v1553
    %v3520 = vmul.f32 %v1555, %v1555
    %v3521 = vmul.f32 %v1557, %v1557
    %v3522 = vmul.f32 %v1559, %v1559
    %v3523 = vmul.f32 %v1561, %v1561
    %v3524 = vmul.f32 %v1563, %v1563
    %v3525 = vmul.f32 %v1565, %v1565
    %v3526 = vmul.f32 %v1567, %v1567
    %v3527 = vmul.f32 %v1569, %v1569
    %v3528 = vmul.f32 %v1571, %v1571
    %v3529 = vmul.f32 %v1573, %v1573
    %v3530 = vmul.f32 %v1575, %v1575
    %v3531 = vmul.f32 %v1577, %v1577
    %v3532 = vmul.f32 %v1579, %v1579
    %v3533 = vmul.f32 %v1581, %v1581
    %v3534 = vmul.f32 %v1583, %v1583
    %v3535 = vmul.f32 %v1585, %v1585
    %v3536 = vmul.f32 %v1587, %v1587
    %v3537 = vmul.f32 %v1589, %v1589
    %v3538 = vmul.f32 %v1591, %v1591
    %v3539 = vmul.f32 %v1593, %v1593
    %v3540 = vmul.f32 %v1595, %v1595
    %v3541 = vmul.f32 %v1597, %v1597
    %v3542 = vmul.f32 %v1599, %v1599
    %v3543 = vmul.f32 %v1601, %v1601
    %v3544 = vmul.f32 %v1603, %v1603
    %v3545 = vmul.f32 %v1605, %v1605
    %v3546 = vmul.f32 %v1607, %v1607
    %v3547 = vmul.f32 %v1609, %v1609
    %v3548 = vmul.f32 %v1611, %v1611
    %v3549 = vmul.f32 %v1613, %v1613
    %v3550 = vmul.f32 %v1615, %v1615
    %v3551 = vmul.f32 %v1617, %v1617
    %v3552 = vmul.f32 %v1619, %v1619
    %v3553 = vmul.f32 %v1621, %v1621
    %v3554 = vmul.f32 %v1623, %v1623
    %v3555 = vmul.f32 %v1625, %v1625
    %v3556 = vmul.f32 %v1627, %v1627
    %v3557 = vmul.f32 %v1629, %v1629
    %v3558 = vmul.f32 %v1631, %v1631
    %v3559 = vmul.f32 %v1633, %v1633
    %v3560 = vmul.f32 %v1635, %v1635
    %v3561 = vmul.f32 %v1637, %v1637
    %v3562 = vmul.f32 %v1639, %v1639
    %v3563 = vmul.f32 %v1641, %v1641
    %v3564 = vmul.f32 %v1643, %v1643
    %v3565 = vmul.f32 %v1645, %v1645
    %v3566 = vmul.f32 %v1007, %v3438
    %v3567 = vmul.f32 %v1009, %v3439
    %v3568 = vmul.f32 %v1011, %v3440
    %v3569 = vmul.f32 %v1013, %v3441
    %v3570 = vmul.f32 %v1015, %v3442
    %v3571 = vmul.f32 %v1017, %v3443
    %v3572 = vmul.f32 %v1019, %v3444
    %v3573 = vmul.f32 %v1021, %v3445
    %v3574 = vmul.f32 %v1023, %v3446
    %v3575 = vmul.f32 %v1025, %v3447
    %v3576 = vmul.f32 %v1027, %v3448
    %v3577 = vmul.f32 %v1029, %v3449
    %v3578 = vmul.f32 %v1031, %v3450
    %v3579 = vmul.f32 %v1033, %v3451
    %v3580 = vmul.f32 %v1035, %v3452
    %v3581 = vmul.f32 %v1037, %v3453
    %v3582 = vmul.f32 %v1039, %v3454
    %v3583 = vmul.f32 %v1041, %v3455
    %v3584 = vmul.f32 %v1043, %v3456
    %v3585 = vmul.f32 %v1045, %v3457
    %v3586 = vmul.f32 %v1047, %v3458
    %v3587 = vmul.f32 %v1049, %v3459
    %v3588 = vmul.f32 %v1051, %v3460
    %v3589 = vmul.f32 %v1053, %v3461
    %v3590 = vmul.f32 %v1055, %v3462
    %v3591 = vmul.f32 %v1057, %v3463
    %v3592 = vmul.f32 %v1059, %v3464
    %v3593 = vmul.f32 %v1061, %v3465
    %v3594 = vmul.f32 %v1063, %v3466
    %v3595 = vmul.f32 %v1065, %v3467
    %v3596 = vmul.f32 %v1067, %v3468
    %v3597 = vmul.f32 %v1069, %v3469
    %v3598 = vmul.f32 %v1071, %v3470
    %v3599 = vmul.f32 %v1073, %v3471
    %v3600 = vmul.f32 %v1075, %v3472
    %v3601 = vmul.f32 %v1077, %v3473
    %v3602 = vmul.f32 %v1079, %v3474
    %v3603 = vmul.f32 %v1081, %v3475
    %v3604 = vmul.f32 %v1083, %v3476
    %v3605 = vmul.f32 %v1085, %v3477
    %v3606 = vmul.f32 %v1087, %v3478
    %v3607 = vmul.f32 %v1089, %v3479
    %v3608 = vmul.f32 %v1091, %v3480
    %v3609 = vmul.f32 %v1093, %v3481
    %v3610 = vmul.f32 %v1095, %v3482
    %v3611 = vmul.f32 %v1097, %v3483
    %v3612 = vmul.f32 %v1099, %v3484
    %v3613 = vmul.f32 %v1101, %v3485
    %v3614 = vmul.f32 %v1103, %v3486
    %v3615 = vmul.f32 %v1105, %v3487
    %v3616 = vmul.f32 %v1107, %v3488
    %v3617 = vmul.f32 %v1109, %v3489
    %v3618 = vmul.f32 %v1111, %v3490
    %v3619 = vmul.f32 %v1113, %v3491
    %v3620 = vmul.f32 %v1115, %v3492
    %v3621 = vmul.f32 %v1117, %v3493
    %v3622 = vmul.f32 %v1119, %v3494
    %v3623 = vmul.f32 %v1121, %v3495
    %v3624 = vmul.f32 %v1123, %v3496
    %v3625 = vmul.f32 %v1125, %v3497
    %v3626 = vmul.f32 %v1127, %v3498
    %v3627 = vmul.f32 %v1129, %v3499
    %v3628 = vmul.f32 %v1131, %v3500
    %v3629 = vmul.f32 %v1133, %v3501
    %v3630 = vmul.f32 %v1135, %v3502
    %v3631 = vmul.f32 %v1137, %v3503
    %v3632 = vmul.f32 %v1139, %v3504
    %v3633 = vmul.f32 %v1141, %v3505
    %v3634 = vmul.f32 %v1143, %v3506
    %v3635 = vmul.f32 %v1145, %v3507
    %v3636 = vmul.f32 %v1147, %v3508
    %v3637 = vmul.f32 %v1149, %v3509
    %v3638 = vmul.f32 %v1151, %v3510
    %v3639 = vmul.f32 %v1153, %v3511
    %v3640 = vmul.f32 %v1155, %v3512
    %v3641 = vmul.f32 %v1157, %v3513
    %v3642 = vmul.f32 %v1159, %v3514
    %v3643 = vmul.f32 %v1161, %v3515
    %v3644 = vmul.f32 %v1163, %v3516
    %v3645 = vmul.f32 %v1165, %v3517
    %v3646 = vmul.f32 %v1167, %v3518
    %v3647 = vmul.f32 %v1169, %v3519
    %v3648 = vmul.f32 %v1171, %v3520
    %v3649 = vmul.f32 %v1173, %v3521
    %v3650 = vmul.f32 %v1175, %v3522
    %v3651 = vmul.f32 %v1177, %v3523
    %v3652 = vmul.f32 %v1179, %v3524
    %v3653 = vmul.f32 %v1181, %v3525
    %v3654 = vmul.f32 %v1183, %v3526
    %v3655 = vmul.f32 %v1185, %v3527
    %v3656 = vmul.f32 %v1187, %v3528
    %v3657 = vmul.f32 %v1189, %v3529
    %v3658 = vmul.f32 %v1191, %v3530
    %v3659 = vmul.f32 %v1193, %v3531
    %v3660 = vmul.f32 %v1195, %v3532
    %v3661 = vmul.f32 %v1197, %v3533
    %v3662 = vmul.f32 %v1199, %v3534
    %v3663 = vmul.f32 %v1201, %v3535
    %v3664 = vmul.f32 %v1203, %v3536
    %v3665 = vmul.f32 %v1205, %v3537
    %v3666 = vmul.f32 %v1207, %v3538
    %v3667 = vmul.f32 %v1209, %v3539
    %v3668 = vmul.f32 %v1211, %v3540
    %v3669 = vmul.f32 %v1213, %v3541
    %v3670 = vmul.f32 %v1215, %v3542
    %v3671 = vmul.f32 %v1217, %v3543
    %v3672 = vmul.f32 %v1219, %v3544
    %v3673 = vmul.f32 %v1221, %v3545
    %v3674 = vmul.f32 %v1223, %v3546
    %v3675 = vmul.f32 %v1225, %v3547
    %v3676 = vmul.f32 %v1227, %v3548
    %v3677 = vmul.f32 %v1229, %v3549
    %v3678 = vmul.f32 %v1231, %v3550
    %v3679 = vmul.f32 %v1233, %v3551
    %v3680 = vmul.f32 %v1235, %v3552
    %v3681 = vmul.f32 %v1237, %v3553
    %v3682 = vmul.f32 %v1239, %v3554
    %v3683 = vmul.f32 %v1241, %v3555
    %v3684 = vmul.f32 %v1243, %v3556
    %v3685 = vmul.f32 %v1245, %v3557
    %v3686 = vmul.f32 %v1247, %v3558
    %v3687 = vmul.f32 %v1249, %v3559
    %v3688 = vmul.f32 %v1251, %v3560
    %v3689 = vmul.f32 %v1253, %v3561
    %v3690 = vmul.f32 %v1255, %v3562
    %v3691 = vmul.f32 %v1257, %v3563
    %v3692 = vmul.f32 %v1259, %v3564
    %v3693 = vmul.f32 %v1261, %v3565
    %3695 = vset.pattern.permute.xlu0 0
    %3696 = vperm.xlu0 %3695, %v1774
    %v3697 = vpop.permute.xlu0 %3696
    %3700 = vset.pattern.permute.xlu0 0
    %3701 = vperm.xlu0 %3700, %v1775
    %v3702 = vpop.permute.xlu0 %3701
    %3705 = vset.pattern.permute.xlu0 0
    %3706 = vperm.xlu0 %3705, %v1776
    %v3707 = vpop.permute.xlu0 %3706
    %3710 = vset.pattern.permute.xlu0 0
    %3711 = vperm.xlu0 %3710, %v1777
    %v3712 = vpop.permute.xlu0 %3711
    %3715 = vset.pattern.permute.xlu0 0
    %3716 = vperm.xlu0 %3715, %v1778
    %v3717 = vpop.permute.xlu0 %3716
    %3720 = vset.pattern.permute.xlu0 0
    %3721 = vperm.xlu0 %3720, %v1779
    %v3722 = vpop.permute.xlu0 %3721
    %3725 = vset.pattern.permute.xlu0 0
    %3726 = vperm.xlu0 %3725, %v1780
    %v3727 = vpop.permute.xlu0 %3726
    %3730 = vset.pattern.permute.xlu0 0
    %3731 = vperm.xlu0 %3730, %v1781
    %v3732 = vpop.permute.xlu0 %3731
    %3735 = vset.pattern.permute.xlu0 0
    %3736 = vperm.xlu0 %3735, %v1782
    %v3737 = vpop.permute.xlu0 %3736
    %3740 = vset.pattern.permute.xlu0 0
    %3741 = vperm.xlu0 %3740, %v1783
    %v3742 = vpop.permute.xlu0 %3741
    %3745 = vset.pattern.permute.xlu0 0
    %3746 = vperm.xlu0 %3745, %v1784
    %v3747 = vpop.permute.xlu0 %3746
    %3750 = vset.pattern.permute.xlu0 0
    %3751 = vperm.xlu0 %3750, %v1785
    %v3752 = vpop.permute.xlu0 %3751
    %3755 = vset.pattern.permute.xlu0 0
    %3756 = vperm.xlu0 %3755, %v1786
    %v3757 = vpop.permute.xlu0 %3756
    %3760 = vset.pattern.permute.xlu0 0
    %3761 = vperm.xlu0 %3760, %v1787
    %v3762 = vpop.permute.xlu0 %3761
    %3765 = vset.pattern.permute.xlu0 0
    %3766 = vperm.xlu0 %3765, %v1788
    %v3767 = vpop.permute.xlu0 %3766
    %3770 = vset.pattern.permute.xlu0 0
    %3771 = vperm.xlu0 %3770, %v1789
    %v3772 = vpop.permute.xlu0 %3771
    %3775 = vset.pattern.permute.xlu0 0
    %3776 = vperm.xlu0 %3775, %v1790
    %v3777 = vpop.permute.xlu0 %3776
    %3780 = vset.pattern.permute.xlu0 0
    %3781 = vperm.xlu0 %3780, %v1791
    %v3782 = vpop.permute.xlu0 %3781
    %3785 = vset.pattern.permute.xlu0 0
    %3786 = vperm.xlu0 %3785, %v1792
    %v3787 = vpop.permute.xlu0 %3786
    %3790 = vset.pattern.permute.xlu0 0
    %3791 = vperm.xlu0 %3790, %v1793
    %v3792 = vpop.permute.xlu0 %3791
    %3795 = vset.pattern.permute.xlu0 0
    %3796 = vperm.xlu0 %3795, %v1794
    %v3797 = vpop.permute.xlu0 %3796
    %3800 = vset.pattern.permute.xlu0 0
    %3801 = vperm.xlu0 %3800, %v1795
    %v3802 = vpop.permute.xlu0 %3801
    %3805 = vset.pattern.permute.xlu0 0
    %3806 = vperm.xlu0 %3805, %v1796
    %v3807 = vpop.permute.xlu0 %3806
    %3810 = vset.pattern.permute.xlu0 0
    %3811 = vperm.xlu0 %3810, %v1797
    %v3812 = vpop.permute.xlu0 %3811
    %3815 = vset.pattern.permute.xlu0 0
    %3816 = vperm.xlu0 %3815, %v1798
    %v3817 = vpop.permute.xlu0 %3816
    %3820 = vset.pattern.permute.xlu0 0
    %3821 = vperm.xlu0 %3820, %v1799
    %v3822 = vpop.permute.xlu0 %3821
    %3825 = vset.pattern.permute.xlu0 0
    %3826 = vperm.xlu0 %3825, %v1800
    %v3827 = vpop.permute.xlu0 %3826
    %3830 = vset.pattern.permute.xlu0 0
    %3831 = vperm.xlu0 %3830, %v1801
    %v3832 = vpop.permute.xlu0 %3831
    %3835 = vset.pattern.permute.xlu0 0
    %3836 = vperm.xlu0 %3835, %v1802
    %v3837 = vpop.permute.xlu0 %3836
    %3840 = vset.pattern.permute.xlu0 0
    %3841 = vperm.xlu0 %3840, %v1803
    %v3842 = vpop.permute.xlu0 %3841
    %3845 = vset.pattern.permute.xlu0 0
    %3846 = vperm.xlu0 %3845, %v1804
    %v3847 = vpop.permute.xlu0 %3846
    %3850 = vset.pattern.permute.xlu0 0
    %3851 = vperm.xlu0 %3850, %v1805
    %v3852 = vpop.permute.xlu0 %3851
    %3855 = vset.pattern.permute.xlu0 0
    %3856 = vperm.xlu0 %3855, %v1806
    %v3857 = vpop.permute.xlu0 %3856
    %3860 = vset.pattern.permute.xlu0 0
    %3861 = vperm.xlu0 %3860, %v1807
    %v3862 = vpop.permute.xlu0 %3861
    %3865 = vset.pattern.permute.xlu0 0
    %3866 = vperm.xlu0 %3865, %v1808
    %v3867 = vpop.permute.xlu0 %3866
    %3870 = vset.pattern.permute.xlu0 0
    %3871 = vperm.xlu0 %3870, %v1809
    %v3872 = vpop.permute.xlu0 %3871
    %3875 = vset.pattern.permute.xlu0 0
    %3876 = vperm.xlu0 %3875, %v1810
    %v3877 = vpop.permute.xlu0 %3876
    %3880 = vset.pattern.permute.xlu0 0
    %3881 = vperm.xlu0 %3880, %v1811
    %v3882 = vpop.permute.xlu0 %3881
    %3885 = vset.pattern.permute.xlu0 0
    %3886 = vperm.xlu0 %3885, %v1812
    %v3887 = vpop.permute.xlu0 %3886
    %3890 = vset.pattern.permute.xlu0 0
    %3891 = vperm.xlu0 %3890, %v1813
    %v3892 = vpop.permute.xlu0 %3891
    %3895 = vset.pattern.permute.xlu0 0
    %3896 = vperm.xlu0 %3895, %v1814
    %v3897 = vpop.permute.xlu0 %3896
    %3900 = vset.pattern.permute.xlu0 0
    %3901 = vperm.xlu0 %3900, %v1815
    %v3902 = vpop.permute.xlu0 %3901
    %3905 = vset.pattern.permute.xlu0 0
    %3906 = vperm.xlu0 %3905, %v1816
    %v3907 = vpop.permute.xlu0 %3906
    %3910 = vset.pattern.permute.xlu0 0
    %3911 = vperm.xlu0 %3910, %v1817
    %v3912 = vpop.permute.xlu0 %3911
    %3915 = vset.pattern.permute.xlu0 0
    %3916 = vperm.xlu0 %3915, %v1818
    %v3917 = vpop.permute.xlu0 %3916
    %3920 = vset.pattern.permute.xlu0 0
    %3921 = vperm.xlu0 %3920, %v1819
    %v3922 = vpop.permute.xlu0 %3921
    %3925 = vset.pattern.permute.xlu0 0
    %3926 = vperm.xlu0 %3925, %v1820
    %v3927 = vpop.permute.xlu0 %3926
    %3930 = vset.pattern.permute.xlu0 0
    %3931 = vperm.xlu0 %3930, %v1821
    %v3932 = vpop.permute.xlu0 %3931
    %3935 = vset.pattern.permute.xlu0 0
    %3936 = vperm.xlu0 %3935, %v1822
    %v3937 = vpop.permute.xlu0 %3936
    %3940 = vset.pattern.permute.xlu0 0
    %3941 = vperm.xlu0 %3940, %v1823
    %v3942 = vpop.permute.xlu0 %3941
    %3945 = vset.pattern.permute.xlu0 0
    %3946 = vperm.xlu0 %3945, %v1824
    %v3947 = vpop.permute.xlu0 %3946
    %3950 = vset.pattern.permute.xlu0 0
    %3951 = vperm.xlu0 %3950, %v1825
    %v3952 = vpop.permute.xlu0 %3951
    %3955 = vset.pattern.permute.xlu0 0
    %3956 = vperm.xlu0 %3955, %v1826
    %v3957 = vpop.permute.xlu0 %3956
    %3960 = vset.pattern.permute.xlu0 0
    %3961 = vperm.xlu0 %3960, %v1827
    %v3962 = vpop.permute.xlu0 %3961
    %3965 = vset.pattern.permute.xlu0 0
    %3966 = vperm.xlu0 %3965, %v1828
    %v3967 = vpop.permute.xlu0 %3966
    %3970 = vset.pattern.permute.xlu0 0
    %3971 = vperm.xlu0 %3970, %v1829
    %v3972 = vpop.permute.xlu0 %3971
    %3975 = vset.pattern.permute.xlu0 0
    %3976 = vperm.xlu0 %3975, %v1830
    %v3977 = vpop.permute.xlu0 %3976
    %3980 = vset.pattern.permute.xlu0 0
    %3981 = vperm.xlu0 %3980, %v1831
    %v3982 = vpop.permute.xlu0 %3981
    %3985 = vset.pattern.permute.xlu0 0
    %3986 = vperm.xlu0 %3985, %v1832
    %v3987 = vpop.permute.xlu0 %3986
    %3990 = vset.pattern.permute.xlu0 0
    %3991 = vperm.xlu0 %3990, %v1833
    %v3992 = vpop.permute.xlu0 %3991
    %3995 = vset.pattern.permute.xlu0 0
    %3996 = vperm.xlu0 %3995, %v1834
    %v3997 = vpop.permute.xlu0 %3996
    %4000 = vset.pattern.permute.xlu0 0
    %4001 = vperm.xlu0 %4000, %v1835
    %v4002 = vpop.permute.xlu0 %4001
    %4005 = vset.pattern.permute.xlu0 0
    %4006 = vperm.xlu0 %4005, %v1836
    %v4007 = vpop.permute.xlu0 %4006
    %4010 = vset.pattern.permute.xlu0 0
    %4011 = vperm.xlu0 %4010, %v1837
    %v4012 = vpop.permute.xlu0 %4011
    %4015 = vset.pattern.permute.xlu0 0
    %4016 = vperm.xlu0 %4015, %v1838
    %v4017 = vpop.permute.xlu0 %4016
    %4020 = vset.pattern.permute.xlu0 0
    %4021 = vperm.xlu0 %4020, %v1839
    %v4022 = vpop.permute.xlu0 %4021
    %4025 = vset.pattern.permute.xlu0 0
    %4026 = vperm.xlu0 %4025, %v1840
    %v4027 = vpop.permute.xlu0 %4026
    %4030 = vset.pattern.permute.xlu0 0
    %4031 = vperm.xlu0 %4030, %v1841
    %v4032 = vpop.permute.xlu0 %4031
    %4035 = vset.pattern.permute.xlu0 0
    %4036 = vperm.xlu0 %4035, %v1842
    %v4037 = vpop.permute.xlu0 %4036
    %4040 = vset.pattern.permute.xlu0 0
    %4041 = vperm.xlu0 %4040, %v1843
    %v4042 = vpop.permute.xlu0 %4041
    %4045 = vset.pattern.permute.xlu0 0
    %4046 = vperm.xlu0 %4045, %v1844
    %v4047 = vpop.permute.xlu0 %4046
    %4050 = vset.pattern.permute.xlu0 0
    %4051 = vperm.xlu0 %4050, %v1845
    %v4052 = vpop.permute.xlu0 %4051
    %4055 = vset.pattern.permute.xlu0 0
    %4056 = vperm.xlu0 %4055, %v1846
    %v4057 = vpop.permute.xlu0 %4056
    %4060 = vset.pattern.permute.xlu0 0
    %4061 = vperm.xlu0 %4060, %v1847
    %v4062 = vpop.permute.xlu0 %4061
    %4065 = vset.pattern.permute.xlu0 0
    %4066 = vperm.xlu0 %4065, %v1848
    %v4067 = vpop.permute.xlu0 %4066
    %4070 = vset.pattern.permute.xlu0 0
    %4071 = vperm.xlu0 %4070, %v1849
    %v4072 = vpop.permute.xlu0 %4071
    %4075 = vset.pattern.permute.xlu0 0
    %4076 = vperm.xlu0 %4075, %v1850
    %v4077 = vpop.permute.xlu0 %4076
    %4080 = vset.pattern.permute.xlu0 0
    %4081 = vperm.xlu0 %4080, %v1851
    %v4082 = vpop.permute.xlu0 %4081
    %4085 = vset.pattern.permute.xlu0 0
    %4086 = vperm.xlu0 %4085, %v1852
    %v4087 = vpop.permute.xlu0 %4086
    %4090 = vset.pattern.permute.xlu0 0
    %4091 = vperm.xlu0 %4090, %v1853
    %v4092 = vpop.permute.xlu0 %4091
    %4095 = vset.pattern.permute.xlu0 0
    %4096 = vperm.xlu0 %4095, %v1854
    %v4097 = vpop.permute.xlu0 %4096
    %4100 = vset.pattern.permute.xlu0 0
    %4101 = vperm.xlu0 %4100, %v1855
    %v4102 = vpop.permute.xlu0 %4101
    %4105 = vset.pattern.permute.xlu0 0
    %4106 = vperm.xlu0 %4105, %v1856
    %v4107 = vpop.permute.xlu0 %4106
    %4110 = vset.pattern.permute.xlu0 0
    %4111 = vperm.xlu0 %4110, %v1857
    %v4112 = vpop.permute.xlu0 %4111
    %4115 = vset.pattern.permute.xlu0 0
    %4116 = vperm.xlu0 %4115, %v1858
    %v4117 = vpop.permute.xlu0 %4116
    %4120 = vset.pattern.permute.xlu0 0
    %4121 = vperm.xlu0 %4120, %v1859
    %v4122 = vpop.permute.xlu0 %4121
    %4125 = vset.pattern.permute.xlu0 0
    %4126 = vperm.xlu0 %4125, %v1860
    %v4127 = vpop.permute.xlu0 %4126
    %4130 = vset.pattern.permute.xlu0 0
    %4131 = vperm.xlu0 %4130, %v1861
    %v4132 = vpop.permute.xlu0 %4131
    %4135 = vset.pattern.permute.xlu0 0
    %4136 = vperm.xlu0 %4135, %v1862
    %v4137 = vpop.permute.xlu0 %4136
    %4140 = vset.pattern.permute.xlu0 0
    %4141 = vperm.xlu0 %4140, %v1863
    %v4142 = vpop.permute.xlu0 %4141
    %4145 = vset.pattern.permute.xlu0 0
    %4146 = vperm.xlu0 %4145, %v1864
    %v4147 = vpop.permute.xlu0 %4146
    %4150 = vset.pattern.permute.xlu0 0
    %4151 = vperm.xlu0 %4150, %v1865
    %v4152 = vpop.permute.xlu0 %4151
    %4155 = vset.pattern.permute.xlu0 0
    %4156 = vperm.xlu0 %4155, %v1866
    %v4157 = vpop.permute.xlu0 %4156
    %4160 = vset.pattern.permute.xlu0 0
    %4161 = vperm.xlu0 %4160, %v1867
    %v4162 = vpop.permute.xlu0 %4161
    %4165 = vset.pattern.permute.xlu0 0
    %4166 = vperm.xlu0 %4165, %v1868
    %v4167 = vpop.permute.xlu0 %4166
    %4170 = vset.pattern.permute.xlu0 0
    %4171 = vperm.xlu0 %4170, %v1869
    %v4172 = vpop.permute.xlu0 %4171
    %4175 = vset.pattern.permute.xlu0 0
    %4176 = vperm.xlu0 %4175, %v1870
    %v4177 = vpop.permute.xlu0 %4176
    %4180 = vset.pattern.permute.xlu0 0
    %4181 = vperm.xlu0 %4180, %v1871
    %v4182 = vpop.permute.xlu0 %4181
    %4185 = vset.pattern.permute.xlu0 0
    %4186 = vperm.xlu0 %4185, %v1872
    %v4187 = vpop.permute.xlu0 %4186
    %4190 = vset.pattern.permute.xlu0 0
    %4191 = vperm.xlu0 %4190, %v1873
    %v4192 = vpop.permute.xlu0 %4191
    %4195 = vset.pattern.permute.xlu0 0
    %4196 = vperm.xlu0 %4195, %v1874
    %v4197 = vpop.permute.xlu0 %4196
    %4200 = vset.pattern.permute.xlu0 0
    %4201 = vperm.xlu0 %4200, %v1875
    %v4202 = vpop.permute.xlu0 %4201
    %4205 = vset.pattern.permute.xlu0 0
    %4206 = vperm.xlu0 %4205, %v1876
    %v4207 = vpop.permute.xlu0 %4206
    %4210 = vset.pattern.permute.xlu0 0
    %4211 = vperm.xlu0 %4210, %v1877
    %v4212 = vpop.permute.xlu0 %4211
    %4215 = vset.pattern.permute.xlu0 0
    %4216 = vperm.xlu0 %4215, %v1878
    %v4217 = vpop.permute.xlu0 %4216
    %4220 = vset.pattern.permute.xlu0 0
    %4221 = vperm.xlu0 %4220, %v1879
    %v4222 = vpop.permute.xlu0 %4221
    %4225 = vset.pattern.permute.xlu0 0
    %4226 = vperm.xlu0 %4225, %v1880
    %v4227 = vpop.permute.xlu0 %4226
    %4230 = vset.pattern.permute.xlu0 0
    %4231 = vperm.xlu0 %4230, %v1881
    %v4232 = vpop.permute.xlu0 %4231
    %4235 = vset.pattern.permute.xlu0 0
    %4236 = vperm.xlu0 %4235, %v1882
    %v4237 = vpop.permute.xlu0 %4236
    %4240 = vset.pattern.permute.xlu0 0
    %4241 = vperm.xlu0 %4240, %v1883
    %v4242 = vpop.permute.xlu0 %4241
    %4245 = vset.pattern.permute.xlu0 0
    %4246 = vperm.xlu0 %4245, %v1884
    %v4247 = vpop.permute.xlu0 %4246
    %4250 = vset.pattern.permute.xlu0 0
    %4251 = vperm.xlu0 %4250, %v1885
    %v4252 = vpop.permute.xlu0 %4251
    %4255 = vset.pattern.permute.xlu0 0
    %4256 = vperm.xlu0 %4255, %v1886
    %v4257 = vpop.permute.xlu0 %4256
    %4260 = vset.pattern.permute.xlu0 0
    %4261 = vperm.xlu0 %4260, %v1887
    %v4262 = vpop.permute.xlu0 %4261
    %4265 = vset.pattern.permute.xlu0 0
    %4266 = vperm.xlu0 %4265, %v1888
    %v4267 = vpop.permute.xlu0 %4266
    %4270 = vset.pattern.permute.xlu0 0
    %4271 = vperm.xlu0 %4270, %v1889
    %v4272 = vpop.permute.xlu0 %4271
    %4275 = vset.pattern.permute.xlu0 0
    %4276 = vperm.xlu0 %4275, %v1890
    %v4277 = vpop.permute.xlu0 %4276
    %4280 = vset.pattern.permute.xlu0 0
    %4281 = vperm.xlu0 %4280, %v1891
    %v4282 = vpop.permute.xlu0 %4281
    %4285 = vset.pattern.permute.xlu0 0
    %4286 = vperm.xlu0 %4285, %v1892
    %v4287 = vpop.permute.xlu0 %4286
    %4290 = vset.pattern.permute.xlu0 0
    %4291 = vperm.xlu0 %4290, %v1893
    %v4292 = vpop.permute.xlu0 %4291
    %4295 = vset.pattern.permute.xlu0 0
    %4296 = vperm.xlu0 %4295, %v1894
    %v4297 = vpop.permute.xlu0 %4296
    %4300 = vset.pattern.permute.xlu0 0
    %4301 = vperm.xlu0 %4300, %v1895
    %v4302 = vpop.permute.xlu0 %4301
    %4305 = vset.pattern.permute.xlu0 0
    %4306 = vperm.xlu0 %4305, %v1896
    %v4307 = vpop.permute.xlu0 %4306
    %4310 = vset.pattern.permute.xlu0 0
    %4311 = vperm.xlu0 %4310, %v1897
    %v4312 = vpop.permute.xlu0 %4311
    %4315 = vset.pattern.permute.xlu0 0
    %4316 = vperm.xlu0 %4315, %v1898
    %v4317 = vpop.permute.xlu0 %4316
    %4320 = vset.pattern.permute.xlu0 0
    %4321 = vperm.xlu0 %4320, %v1899
    %v4322 = vpop.permute.xlu0 %4321
    %4325 = vset.pattern.permute.xlu0 0
    %4326 = vperm.xlu0 %4325, %v1900
    %v4327 = vpop.permute.xlu0 %4326
    %4330 = vset.pattern.permute.xlu0 0
    %4331 = vperm.xlu0 %4330, %v1901
    %v4332 = vpop.permute.xlu0 %4331
    %v4334 = vmul.f32 %v3566, %v3697
    %v4335 = vmul.f32 %v3567, %v3702
    %v4336 = vmul.f32 %v3568, %v3707
    %v4337 = vmul.f32 %v3569, %v3712
    %v4338 = vmul.f32 %v3570, %v3717
    %v4339 = vmul.f32 %v3571, %v3722
    %v4340 = vmul.f32 %v3572, %v3727
    %v4341 = vmul.f32 %v3573, %v3732
    %v4342 = vmul.f32 %v3574, %v3737
    %v4343 = vmul.f32 %v3575, %v3742
    %v4344 = vmul.f32 %v3576, %v3747
    %v4345 = vmul.f32 %v3577, %v3752
    %v4346 = vmul.f32 %v3578, %v3757
    %v4347 = vmul.f32 %v3579, %v3762
    %v4348 = vmul.f32 %v3580, %v3767
    %v4349 = vmul.f32 %v3581, %v3772
    %v4350 = vmul.f32 %v3582, %v3777
    %v4351 = vmul.f32 %v3583, %v3782
    %v4352 = vmul.f32 %v3584, %v3787
    %v4353 = vmul.f32 %v3585, %v3792
    %v4354 = vmul.f32 %v3586, %v3797
    %v4355 = vmul.f32 %v3587, %v3802
    %v4356 = vmul.f32 %v3588, %v3807
    %v4357 = vmul.f32 %v3589, %v3812
    %v4358 = vmul.f32 %v3590, %v3817
    %v4359 = vmul.f32 %v3591, %v3822
    %v4360 = vmul.f32 %v3592, %v3827
    %v4361 = vmul.f32 %v3593, %v3832
    %v4362 = vmul.f32 %v3594, %v3837
    %v4363 = vmul.f32 %v3595, %v3842
    %v4364 = vmul.f32 %v3596, %v3847
    %v4365 = vmul.f32 %v3597, %v3852
    %v4366 = vmul.f32 %v3598, %v3857
    %v4367 = vmul.f32 %v3599, %v3862
    %v4368 = vmul.f32 %v3600, %v3867
    %v4369 = vmul.f32 %v3601, %v3872
    %v4370 = vmul.f32 %v3602, %v3877
    %v4371 = vmul.f32 %v3603, %v3882
    %v4372 = vmul.f32 %v3604, %v3887
    %v4373 = vmul.f32 %v3605, %v3892
    %v4374 = vmul.f32 %v3606, %v3897
    %v4375 = vmul.f32 %v3607, %v3902
    %v4376 = vmul.f32 %v3608, %v3907
    %v4377 = vmul.f32 %v3609, %v3912
    %v4378 = vmul.f32 %v3610, %v3917
    %v4379 = vmul.f32 %v3611, %v3922
    %v4380 = vmul.f32 %v3612, %v3927
    %v4381 = vmul.f32 %v3613, %v3932
    %v4382 = vmul.f32 %v3614, %v3937
    %v4383 = vmul.f32 %v3615, %v3942
    %v4384 = vmul.f32 %v3616, %v3947
    %v4385 = vmul.f32 %v3617, %v3952
    %v4386 = vmul.f32 %v3618, %v3957
    %v4387 = vmul.f32 %v3619, %v3962
    %v4388 = vmul.f32 %v3620, %v3967
    %v4389 = vmul.f32 %v3621, %v3972
    %v4390 = vmul.f32 %v3622, %v3977
    %v4391 = vmul.f32 %v3623, %v3982
    %v4392 = vmul.f32 %v3624, %v3987
    %v4393 = vmul.f32 %v3625, %v3992
    %v4394 = vmul.f32 %v3626, %v3997
    %v4395 = vmul.f32 %v3627, %v4002
    %v4396 = vmul.f32 %v3628, %v4007
    %v4397 = vmul.f32 %v3629, %v4012
    %v4398 = vmul.f32 %v3630, %v4017
    %v4399 = vmul.f32 %v3631, %v4022
    %v4400 = vmul.f32 %v3632, %v4027
    %v4401 = vmul.f32 %v3633, %v4032
    %v4402 = vmul.f32 %v3634, %v4037
    %v4403 = vmul.f32 %v3635, %v4042
    %v4404 = vmul.f32 %v3636, %v4047
    %v4405 = vmul.f32 %v3637, %v4052
    %v4406 = vmul.f32 %v3638, %v4057
    %v4407 = vmul.f32 %v3639, %v4062
    %v4408 = vmul.f32 %v3640, %v4067
    %v4409 = vmul.f32 %v3641, %v4072
    %v4410 = vmul.f32 %v3642, %v4077
    %v4411 = vmul.f32 %v3643, %v4082
    %v4412 = vmul.f32 %v3644, %v4087
    %v4413 = vmul.f32 %v3645, %v4092
    %v4414 = vmul.f32 %v3646, %v4097
    %v4415 = vmul.f32 %v3647, %v4102
    %v4416 = vmul.f32 %v3648, %v4107
    %v4417 = vmul.f32 %v3649, %v4112
    %v4418 = vmul.f32 %v3650, %v4117
    %v4419 = vmul.f32 %v3651, %v4122
    %v4420 = vmul.f32 %v3652, %v4127
    %v4421 = vmul.f32 %v3653, %v4132
    %v4422 = vmul.f32 %v3654, %v4137
    %v4423 = vmul.f32 %v3655, %v4142
    %v4424 = vmul.f32 %v3656, %v4147
    %v4425 = vmul.f32 %v3657, %v4152
    %v4426 = vmul.f32 %v3658, %v4157
    %v4427 = vmul.f32 %v3659, %v4162
    %v4428 = vmul.f32 %v3660, %v4167
    %v4429 = vmul.f32 %v3661, %v4172
    %v4430 = vmul.f32 %v3662, %v4177
    %v4431 = vmul.f32 %v3663, %v4182
    %v4432 = vmul.f32 %v3664, %v4187
    %v4433 = vmul.f32 %v3665, %v4192
    %v4434 = vmul.f32 %v3666, %v4197
    %v4435 = vmul.f32 %v3667, %v4202
    %v4436 = vmul.f32 %v3668, %v4207
    %v4437 = vmul.f32 %v3669, %v4212
    %v4438 = vmul.f32 %v3670, %v4217
    %v4439 = vmul.f32 %v3671, %v4222
    %v4440 = vmul.f32 %v3672, %v4227
    %v4441 = vmul.f32 %v3673, %v4232
    %v4442 = vmul.f32 %v3674, %v4237
    %v4443 = vmul.f32 %v3675, %v4242
    %v4444 = vmul.f32 %v3676, %v4247
    %v4445 = vmul.f32 %v3677, %v4252
    %v4446 = vmul.f32 %v3678, %v4257
    %v4447 = vmul.f32 %v3679, %v4262
    %v4448 = vmul.f32 %v3680, %v4267
    %v4449 = vmul.f32 %v3681, %v4272
    %v4450 = vmul.f32 %v3682, %v4277
    %v4451 = vmul.f32 %v3683, %v4282
    %v4452 = vmul.f32 %v3684, %v4287
    %v4453 = vmul.f32 %v3685, %v4292
    %v4454 = vmul.f32 %v3686, %v4297
    %v4455 = vmul.f32 %v3687, %v4302
    %v4456 = vmul.f32 %v3688, %v4307
    %v4457 = vmul.f32 %v3689, %v4312
    %v4458 = vmul.f32 %v3690, %v4317
    %v4459 = vmul.f32 %v3691, %v4322
    %v4460 = vmul.f32 %v3692, %v4327
    %v4461 = vmul.f32 %v3693, %v4332
    %v4462 = vpack.c.bf16 %v4335, %v4334
    %v4463 = vpack.c.bf16 %v4337, %v4336
    %v4464 = vpack.c.bf16 %v4339, %v4338
    %v4465 = vpack.c.bf16 %v4341, %v4340
    %v4466 = vpack.c.bf16 %v4343, %v4342
    %v4467 = vpack.c.bf16 %v4345, %v4344
    %v4468 = vpack.c.bf16 %v4347, %v4346
    %v4469 = vpack.c.bf16 %v4349, %v4348
    %v4470 = vpack.c.bf16 %v4351, %v4350
    %v4471 = vpack.c.bf16 %v4353, %v4352
    %v4472 = vpack.c.bf16 %v4355, %v4354
    %v4473 = vpack.c.bf16 %v4357, %v4356
    %v4474 = vpack.c.bf16 %v4359, %v4358
    %v4475 = vpack.c.bf16 %v4361, %v4360
    %v4476 = vpack.c.bf16 %v4363, %v4362
    %v4477 = vpack.c.bf16 %v4365, %v4364
    %v4478 = vpack.c.bf16 %v4367, %v4366
    %v4479 = vpack.c.bf16 %v4369, %v4368
    %v4480 = vpack.c.bf16 %v4371, %v4370
    %v4481 = vpack.c.bf16 %v4373, %v4372
    %v4482 = vpack.c.bf16 %v4375, %v4374
    %v4483 = vpack.c.bf16 %v4377, %v4376
    %v4484 = vpack.c.bf16 %v4379, %v4378
    %v4485 = vpack.c.bf16 %v4381, %v4380
    %v4486 = vpack.c.bf16 %v4383, %v4382
    %v4487 = vpack.c.bf16 %v4385, %v4384
    %v4488 = vpack.c.bf16 %v4387, %v4386
    %v4489 = vpack.c.bf16 %v4389, %v4388
    %v4490 = vpack.c.bf16 %v4391, %v4390
    %v4491 = vpack.c.bf16 %v4393, %v4392
    %v4492 = vpack.c.bf16 %v4395, %v4394
    %v4493 = vpack.c.bf16 %v4397, %v4396
    %v4494 = vpack.c.bf16 %v4399, %v4398
    %v4495 = vpack.c.bf16 %v4401, %v4400
    %v4496 = vpack.c.bf16 %v4403, %v4402
    %v4497 = vpack.c.bf16 %v4405, %v4404
    %v4498 = vpack.c.bf16 %v4407, %v4406
    %v4499 = vpack.c.bf16 %v4409, %v4408
    %v4500 = vpack.c.bf16 %v4411, %v4410
    %v4501 = vpack.c.bf16 %v4413, %v4412
    %v4502 = vpack.c.bf16 %v4415, %v4414
    %v4503 = vpack.c.bf16 %v4417, %v4416
    %v4504 = vpack.c.bf16 %v4419, %v4418
    %v4505 = vpack.c.bf16 %v4421, %v4420
    %v4506 = vpack.c.bf16 %v4423, %v4422
    %v4507 = vpack.c.bf16 %v4425, %v4424
    %v4508 = vpack.c.bf16 %v4427, %v4426
    %v4509 = vpack.c.bf16 %v4429, %v4428
    %v4510 = vpack.c.bf16 %v4431, %v4430
    %v4511 = vpack.c.bf16 %v4433, %v4432
    %v4512 = vpack.c.bf16 %v4435, %v4434
    %v4513 = vpack.c.bf16 %v4437, %v4436
    %v4514 = vpack.c.bf16 %v4439, %v4438
    %v4515 = vpack.c.bf16 %v4441, %v4440
    %v4516 = vpack.c.bf16 %v4443, %v4442
    %v4517 = vpack.c.bf16 %v4445, %v4444
    %v4518 = vpack.c.bf16 %v4447, %v4446
    %v4519 = vpack.c.bf16 %v4449, %v4448
    %v4520 = vpack.c.bf16 %v4451, %v4450
    %v4521 = vpack.c.bf16 %v4453, %v4452
    %v4522 = vpack.c.bf16 %v4455, %v4454
    %v4523 = vpack.c.bf16 %v4457, %v4456
    %v4524 = vpack.c.bf16 %v4459, %v4458
    %v4525 = vpack.c.bf16 %v4461, %v4460
    %v4590 = vunpack.c.l.b16 %v4462
    %v4591 = vunpack.c.h.b16 %v4462
    %v4592 = vunpack.c.l.b16 %v4463
    %v4593 = vunpack.c.h.b16 %v4463
    %v4594 = vunpack.c.l.b16 %v4464
    %v4595 = vunpack.c.h.b16 %v4464
    %v4596 = vunpack.c.l.b16 %v4465
    %v4597 = vunpack.c.h.b16 %v4465
    %v4598 = vunpack.c.l.b16 %v4466
    %v4599 = vunpack.c.h.b16 %v4466
    %v4600 = vunpack.c.l.b16 %v4467
    %v4601 = vunpack.c.h.b16 %v4467
    %v4602 = vunpack.c.l.b16 %v4468
    %v4603 = vunpack.c.h.b16 %v4468
    %v4604 = vunpack.c.l.b16 %v4469
    %v4605 = vunpack.c.h.b16 %v4469
    %v4606 = vunpack.c.l.b16 %v4470
    %v4607 = vunpack.c.h.b16 %v4470
    %v4608 = vunpack.c.l.b16 %v4471
    %v4609 = vunpack.c.h.b16 %v4471
    %v4610 = vunpack.c.l.b16 %v4472
    %v4611 = vunpack.c.h.b16 %v4472
    %v4612 = vunpack.c.l.b16 %v4473
    %v4613 = vunpack.c.h.b16 %v4473
    %v4614 = vunpack.c.l.b16 %v4474
    %v4615 = vunpack.c.h.b16 %v4474
    %v4616 = vunpack.c.l.b16 %v4475
    %v4617 = vunpack.c.h.b16 %v4475
    %v4618 = vunpack.c.l.b16 %v4476
    %v4619 = vunpack.c.h.b16 %v4476
    %v4620 = vunpack.c.l.b16 %v4477
    %v4621 = vunpack.c.h.b16 %v4477
    %v4622 = vunpack.c.l.b16 %v4478
    %v4623 = vunpack.c.h.b16 %v4478
    %v4624 = vunpack.c.l.b16 %v4479
    %v4625 = vunpack.c.h.b16 %v4479
    %v4626 = vunpack.c.l.b16 %v4480
    %v4627 = vunpack.c.h.b16 %v4480
    %v4628 = vunpack.c.l.b16 %v4481
    %v4629 = vunpack.c.h.b16 %v4481
    %v4630 = vunpack.c.l.b16 %v4482
    %v4631 = vunpack.c.h.b16 %v4482
    %v4632 = vunpack.c.l.b16 %v4483
    %v4633 = vunpack.c.h.b16 %v4483
    %v4634 = vunpack.c.l.b16 %v4484
    %v4635 = vunpack.c.h.b16 %v4484
    %v4636 = vunpack.c.l.b16 %v4485
    %v4637 = vunpack.c.h.b16 %v4485
    %v4638 = vunpack.c.l.b16 %v4486
    %v4639 = vunpack.c.h.b16 %v4486
    %v4640 = vunpack.c.l.b16 %v4487
    %v4641 = vunpack.c.h.b16 %v4487
    %v4642 = vunpack.c.l.b16 %v4488
    %v4643 = vunpack.c.h.b16 %v4488
    %v4644 = vunpack.c.l.b16 %v4489
    %v4645 = vunpack.c.h.b16 %v4489
    %v4646 = vunpack.c.l.b16 %v4490
    %v4647 = vunpack.c.h.b16 %v4490
    %v4648 = vunpack.c.l.b16 %v4491
    %v4649 = vunpack.c.h.b16 %v4491
    %v4650 = vunpack.c.l.b16 %v4492
    %v4651 = vunpack.c.h.b16 %v4492
    %v4652 = vunpack.c.l.b16 %v4493
    %v4653 = vunpack.c.h.b16 %v4493
    %v4654 = vunpack.c.l.b16 %v4494
    %v4655 = vunpack.c.h.b16 %v4494
    %v4656 = vunpack.c.l.b16 %v4495
    %v4657 = vunpack.c.h.b16 %v4495
    %v4658 = vunpack.c.l.b16 %v4496
    %v4659 = vunpack.c.h.b16 %v4496
    %v4660 = vunpack.c.l.b16 %v4497
    %v4661 = vunpack.c.h.b16 %v4497
    %v4662 = vunpack.c.l.b16 %v4498
    %v4663 = vunpack.c.h.b16 %v4498
    %v4664 = vunpack.c.l.b16 %v4499
    %v4665 = vunpack.c.h.b16 %v4499
    %v4666 = vunpack.c.l.b16 %v4500
    %v4667 = vunpack.c.h.b16 %v4500
    %v4668 = vunpack.c.l.b16 %v4501
    %v4669 = vunpack.c.h.b16 %v4501
    %v4670 = vunpack.c.l.b16 %v4502
    %v4671 = vunpack.c.h.b16 %v4502
    %v4672 = vunpack.c.l.b16 %v4503
    %v4673 = vunpack.c.h.b16 %v4503
    %v4674 = vunpack.c.l.b16 %v4504
    %v4675 = vunpack.c.h.b16 %v4504
    %v4676 = vunpack.c.l.b16 %v4505
    %v4677 = vunpack.c.h.b16 %v4505
    %v4678 = vunpack.c.l.b16 %v4506
    %v4679 = vunpack.c.h.b16 %v4506
    %v4680 = vunpack.c.l.b16 %v4507
    %v4681 = vunpack.c.h.b16 %v4507
    %v4682 = vunpack.c.l.b16 %v4508
    %v4683 = vunpack.c.h.b16 %v4508
    %v4684 = vunpack.c.l.b16 %v4509
    %v4685 = vunpack.c.h.b16 %v4509
    %v4686 = vunpack.c.l.b16 %v4510
    %v4687 = vunpack.c.h.b16 %v4510
    %v4688 = vunpack.c.l.b16 %v4511
    %v4689 = vunpack.c.h.b16 %v4511
    %v4690 = vunpack.c.l.b16 %v4512
    %v4691 = vunpack.c.h.b16 %v4512
    %v4692 = vunpack.c.l.b16 %v4513
    %v4693 = vunpack.c.h.b16 %v4513
    %v4694 = vunpack.c.l.b16 %v4514
    %v4695 = vunpack.c.h.b16 %v4514
    %v4696 = vunpack.c.l.b16 %v4515
    %v4697 = vunpack.c.h.b16 %v4515
    %v4698 = vunpack.c.l.b16 %v4516
    %v4699 = vunpack.c.h.b16 %v4516
    %v4700 = vunpack.c.l.b16 %v4517
    %v4701 = vunpack.c.h.b16 %v4517
    %v4702 = vunpack.c.l.b16 %v4518
    %v4703 = vunpack.c.h.b16 %v4518
    %v4704 = vunpack.c.l.b16 %v4519
    %v4705 = vunpack.c.h.b16 %v4519
    %v4706 = vunpack.c.l.b16 %v4520
    %v4707 = vunpack.c.h.b16 %v4520
    %v4708 = vunpack.c.l.b16 %v4521
    %v4709 = vunpack.c.h.b16 %v4521
    %v4710 = vunpack.c.l.b16 %v4522
    %v4711 = vunpack.c.h.b16 %v4522
    %v4712 = vunpack.c.l.b16 %v4523
    %v4713 = vunpack.c.h.b16 %v4523
    %v4714 = vunpack.c.l.b16 %v4524
    %v4715 = vunpack.c.h.b16 %v4524
    %v4716 = vunpack.c.l.b16 %v4525
    %v4717 = vunpack.c.h.b16 %v4525
    %v4718 = vpack.c.b16 %v4590, %v4590
    %v4719 = vpack.c.b16 %v4591, %v4591
    %v4720 = vpack.c.b16 %v4592, %v4592
    %v4721 = vpack.c.b16 %v4593, %v4593
    %v4722 = vpack.c.b16 %v4594, %v4594
    %v4723 = vpack.c.b16 %v4595, %v4595
    %v4724 = vpack.c.b16 %v4596, %v4596
    %v4725 = vpack.c.b16 %v4597, %v4597
    %v4726 = vpack.c.b16 %v4598, %v4598
    %v4727 = vpack.c.b16 %v4599, %v4599
    %v4728 = vpack.c.b16 %v4600, %v4600
    %v4729 = vpack.c.b16 %v4601, %v4601
    %v4730 = vpack.c.b16 %v4602, %v4602
    %v4731 = vpack.c.b16 %v4603, %v4603
    %v4732 = vpack.c.b16 %v4604, %v4604
    %v4733 = vpack.c.b16 %v4605, %v4605
    %v4734 = vpack.c.b16 %v4606, %v4606
    %v4735 = vpack.c.b16 %v4607, %v4607
    %v4736 = vpack.c.b16 %v4608, %v4608
    %v4737 = vpack.c.b16 %v4609, %v4609
    %v4738 = vpack.c.b16 %v4610, %v4610
    %v4739 = vpack.c.b16 %v4611, %v4611
    %v4740 = vpack.c.b16 %v4612, %v4612
    %v4741 = vpack.c.b16 %v4613, %v4613
    %v4742 = vpack.c.b16 %v4614, %v4614
    %v4743 = vpack.c.b16 %v4615, %v4615
    %v4744 = vpack.c.b16 %v4616, %v4616
    %v4745 = vpack.c.b16 %v4617, %v4617
    %v4746 = vpack.c.b16 %v4618, %v4618
    %v4747 = vpack.c.b16 %v4619, %v4619
    %v4748 = vpack.c.b16 %v4620, %v4620
    %v4749 = vpack.c.b16 %v4621, %v4621
    %v4750 = vpack.c.b16 %v4622, %v4622
    %v4751 = vpack.c.b16 %v4623, %v4623
    %v4752 = vpack.c.b16 %v4624, %v4624
    %v4753 = vpack.c.b16 %v4625, %v4625
    %v4754 = vpack.c.b16 %v4626, %v4626
    %v4755 = vpack.c.b16 %v4627, %v4627
    %v4756 = vpack.c.b16 %v4628, %v4628
    %v4757 = vpack.c.b16 %v4629, %v4629
    %v4758 = vpack.c.b16 %v4630, %v4630
    %v4759 = vpack.c.b16 %v4631, %v4631
    %v4760 = vpack.c.b16 %v4632, %v4632
    %v4761 = vpack.c.b16 %v4633, %v4633
    %v4762 = vpack.c.b16 %v4634, %v4634
    %v4763 = vpack.c.b16 %v4635, %v4635
    %v4764 = vpack.c.b16 %v4636, %v4636
    %v4765 = vpack.c.b16 %v4637, %v4637
    %v4766 = vpack.c.b16 %v4638, %v4638
    %v4767 = vpack.c.b16 %v4639, %v4639
    %v4768 = vpack.c.b16 %v4640, %v4640
    %v4769 = vpack.c.b16 %v4641, %v4641
    %v4770 = vpack.c.b16 %v4642, %v4642
    %v4771 = vpack.c.b16 %v4643, %v4643
    %v4772 = vpack.c.b16 %v4644, %v4644
    %v4773 = vpack.c.b16 %v4645, %v4645
    %v4774 = vpack.c.b16 %v4646, %v4646
    %v4775 = vpack.c.b16 %v4647, %v4647
    %v4776 = vpack.c.b16 %v4648, %v4648
    %v4777 = vpack.c.b16 %v4649, %v4649
    %v4778 = vpack.c.b16 %v4650, %v4650
    %v4779 = vpack.c.b16 %v4651, %v4651
    %v4780 = vpack.c.b16 %v4652, %v4652
    %v4781 = vpack.c.b16 %v4653, %v4653
    %v4782 = vpack.c.b16 %v4654, %v4654
    %v4783 = vpack.c.b16 %v4655, %v4655
    %v4784 = vpack.c.b16 %v4656, %v4656
    %v4785 = vpack.c.b16 %v4657, %v4657
    %v4786 = vpack.c.b16 %v4658, %v4658
    %v4787 = vpack.c.b16 %v4659, %v4659
    %v4788 = vpack.c.b16 %v4660, %v4660
    %v4789 = vpack.c.b16 %v4661, %v4661
    %v4790 = vpack.c.b16 %v4662, %v4662
    %v4791 = vpack.c.b16 %v4663, %v4663
    %v4792 = vpack.c.b16 %v4664, %v4664
    %v4793 = vpack.c.b16 %v4665, %v4665
    %v4794 = vpack.c.b16 %v4666, %v4666
    %v4795 = vpack.c.b16 %v4667, %v4667
    %v4796 = vpack.c.b16 %v4668, %v4668
    %v4797 = vpack.c.b16 %v4669, %v4669
    %v4798 = vpack.c.b16 %v4670, %v4670
    %v4799 = vpack.c.b16 %v4671, %v4671
    %v4800 = vpack.c.b16 %v4672, %v4672
    %v4801 = vpack.c.b16 %v4673, %v4673
    %v4802 = vpack.c.b16 %v4674, %v4674
    %v4803 = vpack.c.b16 %v4675, %v4675
    %v4804 = vpack.c.b16 %v4676, %v4676
    %v4805 = vpack.c.b16 %v4677, %v4677
    %v4806 = vpack.c.b16 %v4678, %v4678
    %v4807 = vpack.c.b16 %v4679, %v4679
    %v4808 = vpack.c.b16 %v4680, %v4680
    %v4809 = vpack.c.b16 %v4681, %v4681
    %v4810 = vpack.c.b16 %v4682, %v4682
    %v4811 = vpack.c.b16 %v4683, %v4683
    %v4812 = vpack.c.b16 %v4684, %v4684
    %v4813 = vpack.c.b16 %v4685, %v4685
    %v4814 = vpack.c.b16 %v4686, %v4686
    %v4815 = vpack.c.b16 %v4687, %v4687
    %v4816 = vpack.c.b16 %v4688, %v4688
    %v4817 = vpack.c.b16 %v4689, %v4689
    %v4818 = vpack.c.b16 %v4690, %v4690
    %v4819 = vpack.c.b16 %v4691, %v4691
    %v4820 = vpack.c.b16 %v4692, %v4692
    %v4821 = vpack.c.b16 %v4693, %v4693
    %v4822 = vpack.c.b16 %v4694, %v4694
    %v4823 = vpack.c.b16 %v4695, %v4695
    %v4824 = vpack.c.b16 %v4696, %v4696
    %v4825 = vpack.c.b16 %v4697, %v4697
    %v4826 = vpack.c.b16 %v4698, %v4698
    %v4827 = vpack.c.b16 %v4699, %v4699
    %v4828 = vpack.c.b16 %v4700, %v4700
    %v4829 = vpack.c.b16 %v4701, %v4701
    %v4830 = vpack.c.b16 %v4702, %v4702
    %v4831 = vpack.c.b16 %v4703, %v4703
    %v4832 = vpack.c.b16 %v4704, %v4704
    %v4833 = vpack.c.b16 %v4705, %v4705
    %v4834 = vpack.c.b16 %v4706, %v4706
    %v4835 = vpack.c.b16 %v4707, %v4707
    %v4836 = vpack.c.b16 %v4708, %v4708
    %v4837 = vpack.c.b16 %v4709, %v4709
    %v4838 = vpack.c.b16 %v4710, %v4710
    %v4839 = vpack.c.b16 %v4711, %v4711
    %v4840 = vpack.c.b16 %v4712, %v4712
    %v4841 = vpack.c.b16 %v4713, %v4713
    %v4842 = vpack.c.b16 %v4714, %v4714
    %v4843 = vpack.c.b16 %v4715, %v4715
    %v4844 = vpack.c.b16 %v4716, %v4716
    %v4845 = vpack.c.b16 %v4717, %v4717
    %4974 = vst [vmem:[#allocation5 + $0x4] sm:$0xf] %v4718
    %4975 = vst [vmem:[#allocation5 + $0xc] sm:$0xf] %v4719
    %4976 = vst [vmem:[#allocation5 + $0x14] sm:$0xf] %v4720
    %4977 = vst [vmem:[#allocation5 + $0x1c] sm:$0xf] %v4721
    %4978 = vst [vmem:[#allocation5 + $0x24] sm:$0xf] %v4722
    %4979 = vst [vmem:[#allocation5 + $0x2c] sm:$0xf] %v4723
    %4980 = vst [vmem:[#allocation5 + $0x34] sm:$0xf] %v4724
    %4981 = vst [vmem:[#allocation5 + $0x3c] sm:$0xf] %v4725
    %4982 = vst [vmem:[#allocation5 + $0x44] sm:$0xf] %v4726
    %4983 = vst [vmem:[#allocation5 + $0x4c] sm:$0xf] %v4727
    %4984 = vst [vmem:[#allocation5 + $0x54] sm:$0xf] %v4728
    %4985 = vst [vmem:[#allocation5 + $0x5c] sm:$0xf] %v4729
    %4986 = vst [vmem:[#allocation5 + $0x64] sm:$0xf] %v4730
    %4987 = vst [vmem:[#allocation5 + $0x6c] sm:$0xf] %v4731
    %4988 = vst [vmem:[#allocation5 + $0x74] sm:$0xf] %v4732
    %4989 = vst [vmem:[#allocation5 + $0x7c] sm:$0xf] %v4733
    %4990 = vst [vmem:[#allocation5 + $0x84] sm:$0xf] %v4734
    %4991 = vst [vmem:[#allocation5 + $0x8c] sm:$0xf] %v4735
    %4992 = vst [vmem:[#allocation5 + $0x94] sm:$0xf] %v4736
    %4993 = vst [vmem:[#allocation5 + $0x9c] sm:$0xf] %v4737
    %4994 = vst [vmem:[#allocation5 + $0xa4] sm:$0xf] %v4738
    %4995 = vst [vmem:[#allocation5 + $0xac] sm:$0xf] %v4739
    %4996 = vst [vmem:[#allocation5 + $0xb4] sm:$0xf] %v4740
    %4997 = vst [vmem:[#allocation5 + $0xbc] sm:$0xf] %v4741
    %4998 = vst [vmem:[#allocation5 + $0xc4] sm:$0xf] %v4742
    %4999 = vst [vmem:[#allocation5 + $0xcc] sm:$0xf] %v4743
    %5000 = vst [vmem:[#allocation5 + $0xd4] sm:$0xf] %v4744
    %5001 = vst [vmem:[#allocation5 + $0xdc] sm:$0xf] %v4745
    %5002 = vst [vmem:[#allocation5 + $0xe4] sm:$0xf] %v4746
    %5003 = vst [vmem:[#allocation5 + $0xec] sm:$0xf] %v4747
    %5004 = vst [vmem:[#allocation5 + $0xf4] sm:$0xf] %v4748
    %5005 = vst [vmem:[#allocation5 + $0xfc] sm:$0xf] %v4749
    %5006 = vst [vmem:[#allocation5 + $0x104] sm:$0xf] %v4750
    %5007 = vst [vmem:[#allocation5 + $0x10c] sm:$0xf] %v4751
    %5008 = vst [vmem:[#allocation5 + $0x114] sm:$0xf] %v4752
    %5009 = vst [vmem:[#allocation5 + $0x11c] sm:$0xf] %v4753
    %5010 = vst [vmem:[#allocation5 + $0x124] sm:$0xf] %v4754
    %5011 = vst [vmem:[#allocation5 + $0x12c] sm:$0xf] %v4755
    %5012 = vst [vmem:[#allocation5 + $0x134] sm:$0xf] %v4756
    %5013 = vst [vmem:[#allocation5 + $0x13c] sm:$0xf] %v4757
    %5014 = vst [vmem:[#allocation5 + $0x144] sm:$0xf] %v4758
    %5015 = vst [vmem:[#allocation5 + $0x14c] sm:$0xf] %v4759
    %5016 = vst [vmem:[#allocation5 + $0x154] sm:$0xf] %v4760
    %5017 = vst [vmem:[#allocation5 + $0x15c] sm:$0xf] %v4761
    %5018 = vst [vmem:[#allocation5 + $0x164] sm:$0xf] %v4762
    %5019 = vst [vmem:[#allocation5 + $0x16c] sm:$0xf] %v4763
    %5020 = vst [vmem:[#allocation5 + $0x174] sm:$0xf] %v4764
    %5021 = vst [vmem:[#allocation5 + $0x17c] sm:$0xf] %v4765
    %5022 = vst [vmem:[#allocation5 + $0x184] sm:$0xf] %v4766
    %5023 = vst [vmem:[#allocation5 + $0x18c] sm:$0xf] %v4767
    %5024 = vst [vmem:[#allocation5 + $0x194] sm:$0xf] %v4768
    %5025 = vst [vmem:[#allocation5 + $0x19c] sm:$0xf] %v4769
    %5026 = vst [vmem:[#allocation5 + $0x1a4] sm:$0xf] %v4770
    %5027 = vst [vmem:[#allocation5 + $0x1ac] sm:$0xf] %v4771
    %5028 = vst [vmem:[#allocation5 + $0x1b4] sm:$0xf] %v4772
    %5029 = vst [vmem:[#allocation5 + $0x1bc] sm:$0xf] %v4773
    %5030 = vst [vmem:[#allocation5 + $0x1c4] sm:$0xf] %v4774
    %5031 = vst [vmem:[#allocation5 + $0x1cc] sm:$0xf] %v4775
    %5032 = vst [vmem:[#allocation5 + $0x1d4] sm:$0xf] %v4776
    %5033 = vst [vmem:[#allocation5 + $0x1dc] sm:$0xf] %v4777
    %5034 = vst [vmem:[#allocation5 + $0x1e4] sm:$0xf] %v4778
    %5035 = vst [vmem:[#allocation5 + $0x1ec] sm:$0xf] %v4779
    %5036 = vst [vmem:[#allocation5 + $0x1f4] sm:$0xf] %v4780
    %5037 = vst [vmem:[#allocation5 + $0x1fc] sm:$0xf] %v4781
    %5038 = vst [vmem:[#allocation5 + $0x204] sm:$0xf] %v4782
    %5039 = vst [vmem:[#allocation5 + $0x20c] sm:$0xf] %v4783
    %5040 = vst [vmem:[#allocation5 + $0x214] sm:$0xf] %v4784
    %5041 = vst [vmem:[#allocation5 + $0x21c] sm:$0xf] %v4785
    %5042 = vst [vmem:[#allocation5 + $0x224] sm:$0xf] %v4786
    %5043 = vst [vmem:[#allocation5 + $0x22c] sm:$0xf] %v4787
    %5044 = vst [vmem:[#allocation5 + $0x234] sm:$0xf] %v4788
    %5045 = vst [vmem:[#allocation5 + $0x23c] sm:$0xf] %v4789
    %5046 = vst [vmem:[#allocation5 + $0x244] sm:$0xf] %v4790
    %5047 = vst [vmem:[#allocation5 + $0x24c] sm:$0xf] %v4791
    %5048 = vst [vmem:[#allocation5 + $0x254] sm:$0xf] %v4792
    %5049 = vst [vmem:[#allocation5 + $0x25c] sm:$0xf] %v4793
    %5050 = vst [vmem:[#allocation5 + $0x264] sm:$0xf] %v4794
    %5051 = vst [vmem:[#allocation5 + $0x26c] sm:$0xf] %v4795
    %5052 = vst [vmem:[#allocation5 + $0x274] sm:$0xf] %v4796
    %5053 = vst [vmem:[#allocation5 + $0x27c] sm:$0xf] %v4797
    %5054 = vst [vmem:[#allocation5 + $0x284] sm:$0xf] %v4798
    %5055 = vst [vmem:[#allocation5 + $0x28c] sm:$0xf] %v4799
    %5056 = vst [vmem:[#allocation5 + $0x294] sm:$0xf] %v4800
    %5057 = vst [vmem:[#allocation5 + $0x29c] sm:$0xf] %v4801
    %5058 = vst [vmem:[#allocation5 + $0x2a4] sm:$0xf] %v4802
    %5059 = vst [vmem:[#allocation5 + $0x2ac] sm:$0xf] %v4803
    %5060 = vst [vmem:[#allocation5 + $0x2b4] sm:$0xf] %v4804
    %5061 = vst [vmem:[#allocation5 + $0x2bc] sm:$0xf] %v4805
    %5062 = vst [vmem:[#allocation5 + $0x2c4] sm:$0xf] %v4806
    %5063 = vst [vmem:[#allocation5 + $0x2cc] sm:$0xf] %v4807
    %5064 = vst [vmem:[#allocation5 + $0x2d4] sm:$0xf] %v4808
    %5065 = vst [vmem:[#allocation5 + $0x2dc] sm:$0xf] %v4809
    %5066 = vst [vmem:[#allocation5 + $0x2e4] sm:$0xf] %v4810
    %5067 = vst [vmem:[#allocation5 + $0x2ec] sm:$0xf] %v4811
    %5068 = vst [vmem:[#allocation5 + $0x2f4] sm:$0xf] %v4812
    %5069 = vst [vmem:[#allocation5 + $0x2fc] sm:$0xf] %v4813
    %5070 = vst [vmem:[#allocation5 + $0x304] sm:$0xf] %v4814
    %5071 = vst [vmem:[#allocation5 + $0x30c] sm:$0xf] %v4815
    %5072 = vst [vmem:[#allocation5 + $0x314] sm:$0xf] %v4816
    %5073 = vst [vmem:[#allocation5 + $0x31c] sm:$0xf] %v4817
    %5074 = vst [vmem:[#allocation5 + $0x324] sm:$0xf] %v4818
    %5075 = vst [vmem:[#allocation5 + $0x32c] sm:$0xf] %v4819
    %5076 = vst [vmem:[#allocation5 + $0x334] sm:$0xf] %v4820
    %5077 = vst [vmem:[#allocation5 + $0x33c] sm:$0xf] %v4821
    %5078 = vst [vmem:[#allocation5 + $0x344] sm:$0xf] %v4822
    %5079 = vst [vmem:[#allocation5 + $0x34c] sm:$0xf] %v4823
    %5080 = vst [vmem:[#allocation5 + $0x354] sm:$0xf] %v4824
    %5081 = vst [vmem:[#allocation5 + $0x35c] sm:$0xf] %v4825
    %5082 = vst [vmem:[#allocation5 + $0x364] sm:$0xf] %v4826
    %5083 = vst [vmem:[#allocation5 + $0x36c] sm:$0xf] %v4827
    %5084 = vst [vmem:[#allocation5 + $0x374] sm:$0xf] %v4828
    %5085 = vst [vmem:[#allocation5 + $0x37c] sm:$0xf] %v4829
    %5086 = vst [vmem:[#allocation5 + $0x384] sm:$0xf] %v4830
    %5087 = vst [vmem:[#allocation5 + $0x38c] sm:$0xf] %v4831
    %5088 = vst [vmem:[#allocation5 + $0x394] sm:$0xf] %v4832
    %5089 = vst [vmem:[#allocation5 + $0x39c] sm:$0xf] %v4833
    %5090 = vst [vmem:[#allocation5 + $0x3a4] sm:$0xf] %v4834
    %5091 = vst [vmem:[#allocation5 + $0x3ac] sm:$0xf] %v4835
    %5092 = vst [vmem:[#allocation5 + $0x3b4] sm:$0xf] %v4836
    %5093 = vst [vmem:[#allocation5 + $0x3bc] sm:$0xf] %v4837
    %5094 = vst [vmem:[#allocation5 + $0x3c4] sm:$0xf] %v4838
    %5095 = vst [vmem:[#allocation5 + $0x3cc] sm:$0xf] %v4839
    %5096 = vst [vmem:[#allocation5 + $0x3d4] sm:$0xf] %v4840
    %5097 = vst [vmem:[#allocation5 + $0x3dc] sm:$0xf] %v4841
    %5098 = vst [vmem:[#allocation5 + $0x3e4] sm:$0xf] %v4842
    %5099 = vst [vmem:[#allocation5 + $0x3ec] sm:$0xf] %v4843
    %5100 = vst [vmem:[#allocation5 + $0x3f4] sm:$0xf] %v4844
    %5101 = vst [vmem:[#allocation5 + $0x3fc] sm:$0xf] %v4845
    // Predicated region
    $region22: #{tpu_custom_call.1} parent=1 // pred_check
      _
    $region23: #{tpu_custom_call.1} parent=1 // pred_check_branch
      %5103 = sbr.rel (0) target = $region25
    $region24: #{tpu_custom_call.1} parent=1 // pred_region
      %s5105 = ssub.s32 16384, 16384
      %5106 = vsyncadd [#allocation4], %s5105
      %s5107 = sshll.u32 [#allocation5], 4
      %s5108 = int_to_ptr.vmem [resolvable:$true] %s5107
      %5113 = dma.vmem_to_hbm [thread:$0]  %s5108, 16384, %s4, [#allocation4], 128, 128, 8
    $region25: #{tpu_custom_call.1} parent=1 // pred_fallthru
      _
    // Predicated region
    $region26: #{tpu_custom_call.1} parent=1 // pred_check
      _
    $region27: #{tpu_custom_call.1} parent=1 // pred_check_branch
      %5115 = sbr.rel (0) target = $region29
    $region28: #{tpu_custom_call.1} parent=1 // pred_region
      %5116 = dma.done [#allocation4], 16384
    $region29: #{tpu_custom_call.1} parent=1 // pred_fallthru
      _
    %5117 = vsyncpa [#allocation3], 1
    %5118 = vsyncpa [#allocation4], 1

</llo_original>
